<compile_context>
chip_gen: v7x
topology: tpu7x:2x2x1
jax: 0.10.0
libtpu: 0.0.40
codegen_flags: <defaults>
</compile_context>

<pallas_src>
import jax
import jax.numpy as jnp
from jax.experimental import pallas as pl

# ----------------------------- model config (small, synthetic) -----------------------------
VOCAB = 384
HIDDEN = 128
N_LAYERS = 2
N_HEADS = 2
HEAD_DIM = HIDDEN // N_HEADS
INTERMEDIATE = 256
MAX_POS = 16
TYPE_VOCAB = 2
LN_EPS = 1e-12

B, S = 2, 8
M_TOKENS = B * S


def _vmem_spec(shape):
    # whole-array block, no grid -> index_map takes no args
    n = len(shape)
    return pl.BlockSpec(shape, lambda: (0,) * n)


# ----------------------------- in-kernel helpers (value-level) -----------------------------
def _mm(a, b):
    """bf16 operands, f32 accumulation on the MXU."""
    return jnp.dot(a.astype(jnp.bfloat16), b.astype(jnp.bfloat16),
                   preferred_element_type=jnp.float32)


def _mm_kt(a, b):
    """Contract the last axis of both operands (a @ b.T) without materializing a transpose."""
    return jax.lax.dot_general(a.astype(jnp.bfloat16), b.astype(jnp.bfloat16),
                               (((1,), (1,)), ((), ())),
                               preferred_element_type=jnp.float32)


def _layernorm(x, g, b):
    mean = jnp.mean(x, axis=-1, keepdims=True)
    var = jnp.mean((x - mean) ** 2, axis=-1, keepdims=True)
    return (x - mean) * jax.lax.rsqrt(var + LN_EPS) * g + b


def _gelu(x):
    # TODO(synk): tanh-approximate GELU; PyTorch nn.GELU default is the exact erf form.
    c = 0.7978845608028654  # sqrt(2/pi)
    return 0.5 * x * (1.0 + jnp.tanh(c * (x + 0.044715 * x * x * x)))


# ----------------------------- the fused kernel -----------------------------
def _fused_bert_kernel(
    ids_ref, pos_ref, tyi_ref, mask_ref,
    word_emb_ref, pos_emb_ref, type_emb_ref, emb_g_ref, emb_b_ref,
    w_qkv_ref, b_qkv_ref, wo_ref, bo_ref, ln1_g_ref, ln1_b_ref,
    w1_ref, b1_ref, w2_ref, b2_ref, ln2_g_ref, ln2_b_ref,
    lm_bias_ref,
    out_ref,
):
    M = M_TOKENS

    # ---- embeddings: one-hot matmul "gather" (exact in f32) + sum + LayerNorm ----
    word_emb = word_emb_ref[...]                                        # (VOCAB, H) f32
    ids = ids_ref[...]                                                  # (M, 1) int32
    vocab_iota = jax.lax.broadcasted_iota(jnp.int32, (M, VOCAB), 1)
    oh_word = (vocab_iota == ids).astype(jnp.float32)                   # (M, VOCAB)
    we = jnp.dot(oh_word, word_emb, preferred_element_type=jnp.float32)  # (M, H)

    pos = pos_ref[...]                                                  # (M, 1) int32
    pos_iota = jax.lax.broadcasted_iota(jnp.int32, (M, MAX_POS), 1)
    oh_pos = (pos_iota == pos).astype(jnp.float32)                      # (M, MAX_POS)
    pe = jnp.dot(oh_pos, pos_emb_ref[...], preferred_element_type=jnp.float32)

    tyi = tyi_ref[...]                                                  # (M, 1) int32
    te = jnp.where(tyi == 0, type_emb_ref[0:1, :], type_emb_ref[1:2, :])  # (M, H), TYPE_VOCAB == 2

    h = _layernorm(we + pe + te, emb_g_ref[...], emb_b_ref[...])        # (M, H) f32

    mask = mask_ref[...]                                                # (B, S) additive mask
    scale = 1.0 / (HEAD_DIM ** 0.5)

    # ---- encoder layers (statically unrolled) ----
    for l in range(N_LAYERS):
        # fused QKV projection: (M, H) @ (H, 3H) -> (M, 3H), lane-dense 3*128 output
        qkv = _mm(h, w_qkv_ref[l]) + b_qkv_ref[l]                       # (M, 3H)

        # attention on the flat layout; batch x head unrolled (B=2, nH=2)
        batch_ctx = []
        for bi in range(B):
            r0 = bi * S
            mb = mask[bi:bi + 1, :]                                     # (1, S) additive
            head_ctx = []
            for hd in range(N_HEADS):
                c0 = hd * HEAD_DIM
                qb = qkv[r0:r0 + S, c0:c0 + HEAD_DIM]                   # (S, Dh)
                kb = qkv[r0:r0 + S, HIDDEN + c0:HIDDEN + c0 + HEAD_DIM]
                vb = qkv[r0:r0 + S, 2 * HIDDEN + c0:2 * HIDDEN + c0 + HEAD_DIM]
                s = _mm_kt(qb, kb) * scale + mb                         # (S, S) f32
                s = s - jnp.max(s, axis=-1, keepdims=True)
                p = jnp.exp(s)
                p = p * pl.reciprocal(jnp.sum(p, axis=-1, keepdims=True), approx=True)
                head_ctx.append(_mm(p, vb))                             # (S, Dh)
            batch_ctx.append(jnp.concatenate(head_ctx, axis=-1))        # (S, H)
        ctx = jnp.concatenate(batch_ctx, axis=0)                        # (M, H)

        # output projection + residual + LayerNorm (fused epilogue)
        attn_out = _mm(ctx, wo_ref[l]) + bo_ref[l]
        h = _layernorm(attn_out + h, ln1_g_ref[l], ln1_b_ref[l])

        # FFN: w1 + GELU + w2 + residual + LayerNorm, all fused
        ffn = _gelu(_mm(h, w1_ref[l]) + b1_ref[l])                      # (M, I)
        ffn2 = _mm(ffn, w2_ref[l]) + b2_ref[l]                          # (M, H)
        h = _layernorm(ffn2 + h, ln2_g_ref[l], ln2_b_ref[l])

    # ---- tied LM head (h @ word_emb.T via dot_general, no transpose) + log-softmax ----
    logits = _mm_kt(h, word_emb) + lm_bias_ref[...]                     # (M, VOCAB)
    mx = jnp.max(logits, axis=-1, keepdims=True)
    z = logits - mx
    lse = jnp.log(jnp.sum(jnp.exp(z), axis=-1, keepdims=True))
    out_ref[...] = z - lse


# ----------------------------- parameters (deterministic synthetic init, fused layout) -----------------------------
def init_params(key):
    def nrm(k, shape):
        return 0.02 * jax.random.normal(k, shape, jnp.float32)

    keys = iter(jax.random.split(key, 32))
    L = N_LAYERS
    return {
        "word_emb": nrm(next(keys), (VOCAB, HIDDEN)),
        "pos_emb": nrm(next(keys), (MAX_POS, HIDDEN)),
        "type_emb": nrm(next(keys), (TYPE_VOCAB, HIDDEN)),
        "emb_ln_g": jnp.ones((1, HIDDEN), jnp.float32),
        "emb_ln_b": jnp.zeros((1, HIDDEN), jnp.float32),
        # per-layer weights stacked along a leading layer axis; Q/K/V concatenated
        "w_qkv": nrm(next(keys), (L, HIDDEN, 3 * HIDDEN)),
        "b_qkv": jnp.zeros((L, 1, 3 * HIDDEN), jnp.float32),
        "wo": nrm(next(keys), (L, HIDDEN, HIDDEN)),
        "bo": jnp.zeros((L, 1, HIDDEN), jnp.float32),
        "ln1_g": jnp.ones((L, 1, HIDDEN), jnp.float32),
        "ln1_b": jnp.zeros((L, 1, HIDDEN), jnp.float32),
        "w1": nrm(next(keys), (L, HIDDEN, INTERMEDIATE)),
        "b1": jnp.zeros((L, 1, INTERMEDIATE), jnp.float32),
        "w2": nrm(next(keys), (L, INTERMEDIATE, HIDDEN)),
        "b2": jnp.zeros((L, 1, HIDDEN), jnp.float32),
        "ln2_g": jnp.ones((L, 1, HIDDEN), jnp.float32),
        "ln2_b": jnp.zeros((L, 1, HIDDEN), jnp.float32),
        "lm_bias": nrm(next(keys), (1, VOCAB)),
    }


# ----------------------------- forward pass (mirrors BertFineTune.forward) -----------------------------
def bert_finetune_forward(params, input_ids, input_tyi, input_attn_mask):
    Bn, Sn = input_ids.shape
    M = Bn * Sn

    ids = input_ids.reshape(M, 1).astype(jnp.int32)
    tyi = input_tyi.reshape(M, 1).astype(jnp.int32)
    pos = jnp.tile(jnp.arange(Sn, dtype=jnp.int32), Bn).reshape(M, 1)
    # HF-style extended additive attention mask (keys only)
    mask_add = (1.0 - input_attn_mask.astype(jnp.float32)) * -10000.0   # (B, S)

    inputs = (
        ids, pos, tyi, mask_add,
        params["word_emb"], params["pos_emb"], params["type_emb"],
        params["emb_ln_g"], params["emb_ln_b"],
        params["w_qkv"], params["b_qkv"], params["wo"], params["bo"],
        params["ln1_g"], params["ln1_b"],
        params["w1"], params["b1"], params["w2"], params["b2"],
        params["ln2_g"], params["ln2_b"],
        params["lm_bias"],
    )

    log_probs = pl.pallas_call(
        _fused_bert_kernel,
        out_shape=jax.ShapeDtypeStruct((M, VOCAB), jnp.float32),
        in_specs=[_vmem_spec(x.shape) for x in inputs],
        out_specs=_vmem_spec((M, VOCAB)),
    )(*inputs)

    return log_probs.reshape(Bn, Sn, VOCAB)


# ----------------------------- main -----------------------------
if __name__ == "__main__":
    key = jax.random.PRNGKey(0)
    pkey, idkey, tykey = jax.random.split(key, 3)

    params = init_params(pkey)

    input_ids = jax.random.randint(idkey, (B, S), 0, VOCAB, dtype=jnp.int32)
    input_tyi = jax.random.randint(tykey, (B, S), 0, TYPE_VOCAB, dtype=jnp.int32)
    # mask out the last two tokens of the second sequence
    input_attn_mask = jnp.ones((B, S), jnp.int32).at[1, -2:].set(0)

    fwd = jax.jit(bert_finetune_forward)
    out = fwd(params, input_ids, input_tyi, input_attn_mask)
    out = jax.block_until_ready(out)

    assert out.shape == (B, S, VOCAB)
    assert bool(jnp.all(jnp.isfinite(out)))
    # log-softmax rows must (approximately) exponentiate-sum to 1
    assert bool(jnp.all(jnp.abs(jnp.sum(jnp.exp(out), axis=-1) - 1.0) < 1e-3))
    print("KERNEL_OK")
</pallas_src>

<mosaic_0001>
module attributes {stable_mosaic.version = 11 : i64} {
  func.func @_fused_bert_kernel(%arg0: memref<16x1xi32, #tpu.memory_space<vmem>>, %arg1: memref<16x1xi32, #tpu.memory_space<vmem>>, %arg2: memref<16x1xi32, #tpu.memory_space<vmem>>, %arg3: memref<2x8xf32, #tpu.memory_space<vmem>>, %arg4: memref<384x128xf32, #tpu.memory_space<vmem>>, %arg5: memref<16x128xf32, #tpu.memory_space<vmem>>, %arg6: memref<2x128xf32, #tpu.memory_space<vmem>>, %arg7: memref<1x128xf32, #tpu.memory_space<vmem>>, %arg8: memref<1x128xf32, #tpu.memory_space<vmem>>, %arg9: memref<2x128x384xf32, #tpu.memory_space<vmem>>, %arg10: memref<2x1x384xf32, #tpu.memory_space<vmem>>, %arg11: memref<2x128x128xf32, #tpu.memory_space<vmem>>, %arg12: memref<2x1x128xf32, #tpu.memory_space<vmem>>, %arg13: memref<2x1x128xf32, #tpu.memory_space<vmem>>, %arg14: memref<2x1x128xf32, #tpu.memory_space<vmem>>, %arg15: memref<2x128x256xf32, #tpu.memory_space<vmem>>, %arg16: memref<2x1x256xf32, #tpu.memory_space<vmem>>, %arg17: memref<2x256x128xf32, #tpu.memory_space<vmem>>, %arg18: memref<2x1x128xf32, #tpu.memory_space<vmem>>, %arg19: memref<2x1x128xf32, #tpu.memory_space<vmem>>, %arg20: memref<2x1x128xf32, #tpu.memory_space<vmem>>, %arg21: memref<1x384xf32, #tpu.memory_space<vmem>>, %arg22: memref<16x384xf32, #tpu.memory_space<vmem>>) attributes {dimension_semantics = [], scalar_prefetch = 0 : i64, scratch_operands = 0 : i64, tpu.core_type = #tpu.core_type<tc>} {
    %c0 = arith.constant 0 : index
    %c0_0 = arith.constant 0 : index
    %0 = vector.load %arg4[%c0, %c0_0] : memref<384x128xf32, #tpu.memory_space<vmem>>, vector<384x128xf32>
    %c0_1 = arith.constant 0 : index
    %c0_2 = arith.constant 0 : index
    %1 = vector.load %arg0[%c0_1, %c0_2] : memref<16x1xi32, #tpu.memory_space<vmem>>, vector<16x1xi32>
    %2 = tpu.iota {dimensions = array<i32: 1>} : vector<16x384xi32>
    %3 = vector.broadcast %1 : vector<16x1xi32> to vector<16x384xi32>
    %4 = arith.cmpi eq, %2, %3 : vector<16x384xi32>
    %5 = arith.extui %4 : vector<16x384xi1> to vector<16x384xi32>
    %6 = arith.sitofp %5 : vector<16x384xi32> to vector<16x384xf32>
    %cst = arith.constant dense<0.000000e+00> : vector<16x128xf32>
    %7 = tpu.matmul %6, %0, %cst {dimension_numbers = #tpu.dot_dimension_numbers<[1], [0], [0], [1], [0, 0, 1, 1], [], []>} : vector<16x384xf32>, vector<384x128xf32>, vector<16x128xf32> -> vector<16x128xf32>
    %c0_3 = arith.constant 0 : index
    %c0_4 = arith.constant 0 : index
    %8 = vector.load %arg1[%c0_3, %c0_4] : memref<16x1xi32, #tpu.memory_space<vmem>>, vector<16x1xi32>
    %9 = tpu.iota {dimensions = array<i32: 1>} : vector<16x16xi32>
    %10 = vector.broadcast %8 : vector<16x1xi32> to vector<16x16xi32>
    %11 = arith.cmpi eq, %9, %10 : vector<16x16xi32>
    %12 = arith.extui %11 : vector<16x16xi1> to vector<16x16xi32>
    %13 = arith.sitofp %12 : vector<16x16xi32> to vector<16x16xf32>
    %c0_5 = arith.constant 0 : index
    %c0_6 = arith.constant 0 : index
    %14 = vector.load %arg5[%c0_5, %c0_6] : memref<16x128xf32, #tpu.memory_space<vmem>>, vector<16x128xf32>
    %cst_7 = arith.constant dense<0.000000e+00> : vector<16x128xf32>
    %15 = tpu.matmul %13, %14, %cst_7 {dimension_numbers = #tpu.dot_dimension_numbers<[1], [0], [0], [1], [0, 0, 1, 1], [], []>} : vector<16x16xf32>, vector<16x128xf32>, vector<16x128xf32> -> vector<16x128xf32>
    %c0_8 = arith.constant 0 : index
    %c0_9 = arith.constant 0 : index
    %16 = vector.load %arg2[%c0_8, %c0_9] : memref<16x1xi32, #tpu.memory_space<vmem>>, vector<16x1xi32>
    %c0_i32 = arith.constant 0 : i32
    %17 = vector.broadcast %c0_i32 : i32 to vector<16x1xi32>
    %18 = arith.cmpi eq, %16, %17 : vector<16x1xi32>
    %c0_10 = arith.constant 0 : index
    %c0_11 = arith.constant 0 : index
    %19 = vector.load %arg6[%c0_10, %c0_11] : memref<2x128xf32, #tpu.memory_space<vmem>>, vector<1x128xf32>
    %c1 = arith.constant 1 : index
    %c0_12 = arith.constant 0 : index
    %20 = vector.load %arg6[%c1, %c0_12] : memref<2x128xf32, #tpu.memory_space<vmem>>, vector<1x128xf32>
    %21 = vector.shape_cast %18 : vector<16x1xi1> to vector<16x1xi1>
    %22 = vector.broadcast %21 : vector<16x1xi1> to vector<16x128xi1>
    %23 = vector.shape_cast %19 : vector<1x128xf32> to vector<1x128xf32>
    %24 = vector.broadcast %23 : vector<1x128xf32> to vector<16x128xf32>
    %25 = vector.shape_cast %20 : vector<1x128xf32> to vector<1x128xf32>
    %26 = vector.broadcast %25 : vector<1x128xf32> to vector<16x128xf32>
    %27 = arith.select %22, %24, %26 : vector<16x128xi1>, vector<16x128xf32>
    %28 = arith.addf %7, %15 : vector<16x128xf32>
    %29 = arith.addf %28, %27 : vector<16x128xf32>
    %c0_13 = arith.constant 0 : index
    %c0_14 = arith.constant 0 : index
    %30 = vector.load %arg7[%c0_13, %c0_14] : memref<1x128xf32, #tpu.memory_space<vmem>>, vector<1x128xf32>
    %c0_15 = arith.constant 0 : index
    %c0_16 = arith.constant 0 : index
    %31 = vector.load %arg8[%c0_15, %c0_16] : memref<1x128xf32, #tpu.memory_space<vmem>>, vector<1x128xf32>
    %cst_17 = arith.constant dense<0.000000e+00> : vector<16xf32>
    %32 = vector.multi_reduction <add>, %29, %cst_17 [1] : vector<16x128xf32> to vector<16xf32>
    %33 = vector.shape_cast %32 : vector<16xf32> to vector<16x1xf32>
    %cst_18 = arith.constant 1.280000e+02 : f32
    %34 = vector.broadcast %cst_18 : f32 to vector<16x1xf32>
    %35 = arith.divf %33, %34 : vector<16x1xf32>
    %36 = vector.broadcast %35 : vector<16x1xf32> to vector<16x128xf32>
    %37 = arith.subf %29, %36 : vector<16x128xf32>
    %38 = arith.mulf %37, %37 : vector<16x128xf32>
    %cst_19 = arith.constant dense<0.000000e+00> : vector<16xf32>
    %39 = vector.multi_reduction <add>, %38, %cst_19 [1] : vector<16x128xf32> to vector<16xf32>
    %40 = vector.shape_cast %39 : vector<16xf32> to vector<16x1xf32>
    %cst_20 = arith.constant 1.280000e+02 : f32
    %41 = vector.broadcast %cst_20 : f32 to vector<16x1xf32>
    %42 = arith.divf %40, %41 : vector<16x1xf32>
    %43 = vector.broadcast %35 : vector<16x1xf32> to vector<16x128xf32>
    %44 = arith.subf %29, %43 : vector<16x128xf32>
    %cst_21 = arith.constant 9.99999996E-13 : f32
    %45 = vector.broadcast %cst_21 : f32 to vector<16x1xf32>
    %46 = arith.addf %42, %45 : vector<16x1xf32>
    %47 = math.rsqrt %46 : vector<16x1xf32>
    %48 = vector.broadcast %47 : vector<16x1xf32> to vector<16x128xf32>
    %49 = arith.mulf %44, %48 : vector<16x128xf32>
    %50 = vector.broadcast %30 : vector<1x128xf32> to vector<16x128xf32>
    %51 = arith.mulf %49, %50 : vector<16x128xf32>
    %52 = vector.broadcast %31 : vector<1x128xf32> to vector<16x128xf32>
    %53 = arith.addf %51, %52 : vector<16x128xf32>
    %c0_22 = arith.constant 0 : index
    %c0_23 = arith.constant 0 : index
    %54 = vector.load %arg3[%c0_22, %c0_23] : memref<2x8xf32, #tpu.memory_space<vmem>>, vector<2x8xf32>
    %c0_24 = arith.constant 0 : index
    %c0_25 = arith.constant 0 : index
    %c0_26 = arith.constant 0 : index
    %55 = vector.load %arg9[%c0_24, %c0_25, %c0_26] : memref<2x128x384xf32, #tpu.memory_space<vmem>>, vector<1x128x384xf32>
    %56 = vector.shape_cast %55 : vector<1x128x384xf32> to vector<128x384xf32>
    %57 = arith.truncf %53 : vector<16x128xf32> to vector<16x128xbf16>
    %58 = arith.truncf %56 : vector<128x384xf32> to vector<128x384xbf16>
    %cst_27 = arith.constant dense<0.000000e+00> : vector<16x384xf32>
    %59 = tpu.matmul %57, %58, %cst_27 {dimension_numbers = #tpu.dot_dimension_numbers<[1], [0], [0], [1], [0, 0, 1, 1], [], []>} : vector<16x128xbf16>, vector<128x384xbf16>, vector<16x384xf32> -> vector<16x384xf32>
    %c0_28 = arith.constant 0 : index
    %c0_29 = arith.constant 0 : index
    %c0_30 = arith.constant 0 : index
    %60 = vector.load %arg10[%c0_28, %c0_29, %c0_30] : memref<2x1x384xf32, #tpu.memory_space<vmem>>, vector<1x1x384xf32>
    %61 = vector.shape_cast %60 : vector<1x1x384xf32> to vector<1x384xf32>
    %62 = vector.broadcast %61 : vector<1x384xf32> to vector<16x384xf32>
    %63 = arith.addf %59, %62 : vector<16x384xf32>
    %64 = vector.extract_strided_slice %54 {offsets = [0, 0], sizes = [1, 8], strides = [1, 1]} : vector<2x8xf32> to vector<1x8xf32>
    %65 = vector.extract_strided_slice %63 {offsets = [0, 0], sizes = [8, 64], strides = [1, 1]} : vector<16x384xf32> to vector<8x64xf32>
    %66 = vector.extract_strided_slice %63 {offsets = [0, 128], sizes = [8, 64], strides = [1, 1]} : vector<16x384xf32> to vector<8x64xf32>
    %67 = vector.extract_strided_slice %63 {offsets = [0, 256], sizes = [8, 64], strides = [1, 1]} : vector<16x384xf32> to vector<8x64xf32>
    %68 = arith.truncf %65 : vector<8x64xf32> to vector<8x64xbf16>
    %69 = arith.truncf %66 : vector<8x64xf32> to vector<8x64xbf16>
    %cst_31 = arith.constant dense<0.000000e+00> : vector<8x8xf32>
    %70 = tpu.matmul %68, %69, %cst_31 {dimension_numbers = #tpu.dot_dimension_numbers<[1], [1], [0], [0], [0, 0, 1, 0], [], []>} : vector<8x64xbf16>, vector<8x64xbf16>, vector<8x8xf32> -> vector<8x8xf32>
    %cst_32 = arith.constant 1.250000e-01 : f32
    %71 = vector.broadcast %cst_32 : f32 to vector<8x8xf32>
    %72 = arith.mulf %70, %71 : vector<8x8xf32>
    %73 = vector.broadcast %64 : vector<1x8xf32> to vector<8x8xf32>
    %74 = arith.addf %72, %73 : vector<8x8xf32>
    %cst_33 = arith.constant dense<0xFF800000> : vector<8xf32>
    %75 = vector.multi_reduction <maximumf>, %74, %cst_33 [1] : vector<8x8xf32> to vector<8xf32>
    %76 = vector.shape_cast %75 : vector<8xf32> to vector<8x1xf32>
    %77 = vector.broadcast %76 : vector<8x1xf32> to vector<8x8xf32>
    %78 = arith.subf %74, %77 : vector<8x8xf32>
    %79 = math.exp %78 : vector<8x8xf32>
    %cst_34 = arith.constant dense<0.000000e+00> : vector<8xf32>
    %80 = vector.multi_reduction <add>, %79, %cst_34 [1] : vector<8x8xf32> to vector<8xf32>
    %81 = vector.shape_cast %80 : vector<8xf32> to vector<8x1xf32>
    %82 = tpu.reciprocal %81 {approx = true} : vector<8x1xf32> -> vector<8x1xf32>
    %83 = vector.broadcast %82 : vector<8x1xf32> to vector<8x8xf32>
    %84 = arith.mulf %79, %83 : vector<8x8xf32>
    %85 = arith.truncf %84 : vector<8x8xf32> to vector<8x8xbf16>
    %86 = arith.truncf %67 : vector<8x64xf32> to vector<8x64xbf16>
    %cst_35 = arith.constant dense<0.000000e+00> : vector<8x64xf32>
    %87 = tpu.matmul %85, %86, %cst_35 {dimension_numbers = #tpu.dot_dimension_numbers<[1], [0], [0], [1], [0, 0, 1, 1], [], []>} : vector<8x8xbf16>, vector<8x64xbf16>, vector<8x64xf32> -> vector<8x64xf32>
    %88 = vector.extract_strided_slice %63 {offsets = [0, 64], sizes = [8, 64], strides = [1, 1]} : vector<16x384xf32> to vector<8x64xf32>
    %89 = vector.extract_strided_slice %63 {offsets = [0, 192], sizes = [8, 64], strides = [1, 1]} : vector<16x384xf32> to vector<8x64xf32>
    %90 = vector.extract_strided_slice %63 {offsets = [0, 320], sizes = [8, 64], strides = [1, 1]} : vector<16x384xf32> to vector<8x64xf32>
    %91 = arith.truncf %88 : vector<8x64xf32> to vector<8x64xbf16>
    %92 = arith.truncf %89 : vector<8x64xf32> to vector<8x64xbf16>
    %cst_36 = arith.constant dense<0.000000e+00> : vector<8x8xf32>
    %93 = tpu.matmul %91, %92, %cst_36 {dimension_numbers = #tpu.dot_dimension_numbers<[1], [1], [0], [0], [0, 0, 1, 0], [], []>} : vector<8x64xbf16>, vector<8x64xbf16>, vector<8x8xf32> -> vector<8x8xf32>
    %cst_37 = arith.constant 1.250000e-01 : f32
    %94 = vector.broadcast %cst_37 : f32 to vector<8x8xf32>
    %95 = arith.mulf %93, %94 : vector<8x8xf32>
    %96 = vector.broadcast %64 : vector<1x8xf32> to vector<8x8xf32>
    %97 = arith.addf %95, %96 : vector<8x8xf32>
    %cst_38 = arith.constant dense<0xFF800000> : vector<8xf32>
    %98 = vector.multi_reduction <maximumf>, %97, %cst_38 [1] : vector<8x8xf32> to vector<8xf32>
    %99 = vector.shape_cast %98 : vector<8xf32> to vector<8x1xf32>
    %100 = vector.broadcast %99 : vector<8x1xf32> to vector<8x8xf32>
    %101 = arith.subf %97, %100 : vector<8x8xf32>
    %102 = math.exp %101 : vector<8x8xf32>
    %cst_39 = arith.constant dense<0.000000e+00> : vector<8xf32>
    %103 = vector.multi_reduction <add>, %102, %cst_39 [1] : vector<8x8xf32> to vector<8xf32>
    %104 = vector.shape_cast %103 : vector<8xf32> to vector<8x1xf32>
    %105 = tpu.reciprocal %104 {approx = true} : vector<8x1xf32> -> vector<8x1xf32>
    %106 = vector.broadcast %105 : vector<8x1xf32> to vector<8x8xf32>
    %107 = arith.mulf %102, %106 : vector<8x8xf32>
    %108 = arith.truncf %107 : vector<8x8xf32> to vector<8x8xbf16>
    %109 = arith.truncf %90 : vector<8x64xf32> to vector<8x64xbf16>
    %cst_40 = arith.constant dense<0.000000e+00> : vector<8x64xf32>
    %110 = tpu.matmul %108, %109, %cst_40 {dimension_numbers = #tpu.dot_dimension_numbers<[1], [0], [0], [1], [0, 0, 1, 1], [], []>} : vector<8x8xbf16>, vector<8x64xbf16>, vector<8x64xf32> -> vector<8x64xf32>
    %111 = tpu.concatenate %87, %110 in 1 : vector<8x64xf32>, vector<8x64xf32> -> vector<8x128xf32>
    %112 = vector.extract_strided_slice %54 {offsets = [1, 0], sizes = [1, 8], strides = [1, 1]} : vector<2x8xf32> to vector<1x8xf32>
    %113 = vector.extract_strided_slice %63 {offsets = [8, 0], sizes = [8, 64], strides = [1, 1]} : vector<16x384xf32> to vector<8x64xf32>
    %114 = vector.extract_strided_slice %63 {offsets = [8, 128], sizes = [8, 64], strides = [1, 1]} : vector<16x384xf32> to vector<8x64xf32>
    %115 = vector.extract_strided_slice %63 {offsets = [8, 256], sizes = [8, 64], strides = [1, 1]} : vector<16x384xf32> to vector<8x64xf32>
    %116 = arith.truncf %113 : vector<8x64xf32> to vector<8x64xbf16>
    %117 = arith.truncf %114 : vector<8x64xf32> to vector<8x64xbf16>
    %cst_41 = arith.constant dense<0.000000e+00> : vector<8x8xf32>
    %118 = tpu.matmul %116, %117, %cst_41 {dimension_numbers = #tpu.dot_dimension_numbers<[1], [1], [0], [0], [0, 0, 1, 0], [], []>} : vector<8x64xbf16>, vector<8x64xbf16>, vector<8x8xf32> -> vector<8x8xf32>
    %cst_42 = arith.constant 1.250000e-01 : f32
    %119 = vector.broadcast %cst_42 : f32 to vector<8x8xf32>
    %120 = arith.mulf %118, %119 : vector<8x8xf32>
    %121 = vector.broadcast %112 : vector<1x8xf32> to vector<8x8xf32>
    %122 = arith.addf %120, %121 : vector<8x8xf32>
    %cst_43 = arith.constant dense<0xFF800000> : vector<8xf32>
    %123 = vector.multi_reduction <maximumf>, %122, %cst_43 [1] : vector<8x8xf32> to vector<8xf32>
    %124 = vector.shape_cast %123 : vector<8xf32> to vector<8x1xf32>
    %125 = vector.broadcast %124 : vector<8x1xf32> to vector<8x8xf32>
    %126 = arith.subf %122, %125 : vector<8x8xf32>
    %127 = math.exp %126 : vector<8x8xf32>
    %cst_44 = arith.constant dense<0.000000e+00> : vector<8xf32>
    %128 = vector.multi_reduction <add>, %127, %cst_44 [1] : vector<8x8xf32> to vector<8xf32>
    %129 = vector.shape_cast %128 : vector<8xf32> to vector<8x1xf32>
    %130 = tpu.reciprocal %129 {approx = true} : vector<8x1xf32> -> vector<8x1xf32>
    %131 = vector.broadcast %130 : vector<8x1xf32> to vector<8x8xf32>
    %132 = arith.mulf %127, %131 : vector<8x8xf32>
    %133 = arith.truncf %132 : vector<8x8xf32> to vector<8x8xbf16>
    %134 = arith.truncf %115 : vector<8x64xf32> to vector<8x64xbf16>
    %cst_45 = arith.constant dense<0.000000e+00> : vector<8x64xf32>
    %135 = tpu.matmul %133, %134, %cst_45 {dimension_numbers = #tpu.dot_dimension_numbers<[1], [0], [0], [1], [0, 0, 1, 1], [], []>} : vector<8x8xbf16>, vector<8x64xbf16>, vector<8x64xf32> -> vector<8x64xf32>
    %136 = vector.extract_strided_slice %63 {offsets = [8, 64], sizes = [8, 64], strides = [1, 1]} : vector<16x384xf32> to vector<8x64xf32>
    %137 = vector.extract_strided_slice %63 {offsets = [8, 192], sizes = [8, 64], strides = [1, 1]} : vector<16x384xf32> to vector<8x64xf32>
    %138 = vector.extract_strided_slice %63 {offsets = [8, 320], sizes = [8, 64], strides = [1, 1]} : vector<16x384xf32> to vector<8x64xf32>
    %139 = arith.truncf %136 : vector<8x64xf32> to vector<8x64xbf16>
    %140 = arith.truncf %137 : vector<8x64xf32> to vector<8x64xbf16>
    %cst_46 = arith.constant dense<0.000000e+00> : vector<8x8xf32>
    %141 = tpu.matmul %139, %140, %cst_46 {dimension_numbers = #tpu.dot_dimension_numbers<[1], [1], [0], [0], [0, 0, 1, 0], [], []>} : vector<8x64xbf16>, vector<8x64xbf16>, vector<8x8xf32> -> vector<8x8xf32>
    %cst_47 = arith.constant 1.250000e-01 : f32
    %142 = vector.broadcast %cst_47 : f32 to vector<8x8xf32>
    %143 = arith.mulf %141, %142 : vector<8x8xf32>
    %144 = vector.broadcast %112 : vector<1x8xf32> to vector<8x8xf32>
    %145 = arith.addf %143, %144 : vector<8x8xf32>
    %cst_48 = arith.constant dense<0xFF800000> : vector<8xf32>
    %146 = vector.multi_reduction <maximumf>, %145, %cst_48 [1] : vector<8x8xf32> to vector<8xf32>
    %147 = vector.shape_cast %146 : vector<8xf32> to vector<8x1xf32>
    %148 = vector.broadcast %147 : vector<8x1xf32> to vector<8x8xf32>
    %149 = arith.subf %145, %148 : vector<8x8xf32>
    %150 = math.exp %149 : vector<8x8xf32>
    %cst_49 = arith.constant dense<0.000000e+00> : vector<8xf32>
    %151 = vector.multi_reduction <add>, %150, %cst_49 [1] : vector<8x8xf32> to vector<8xf32>
    %152 = vector.shape_cast %151 : vector<8xf32> to vector<8x1xf32>
    %153 = tpu.reciprocal %152 {approx = true} : vector<8x1xf32> -> vector<8x1xf32>
    %154 = vector.broadcast %153 : vector<8x1xf32> to vector<8x8xf32>
    %155 = arith.mulf %150, %154 : vector<8x8xf32>
    %156 = arith.truncf %155 : vector<8x8xf32> to vector<8x8xbf16>
    %157 = arith.truncf %138 : vector<8x64xf32> to vector<8x64xbf16>
    %cst_50 = arith.constant dense<0.000000e+00> : vector<8x64xf32>
    %158 = tpu.matmul %156, %157, %cst_50 {dimension_numbers = #tpu.dot_dimension_numbers<[1], [0], [0], [1], [0, 0, 1, 1], [], []>} : vector<8x8xbf16>, vector<8x64xbf16>, vector<8x64xf32> -> vector<8x64xf32>
    %159 = tpu.concatenate %135, %158 in 1 : vector<8x64xf32>, vector<8x64xf32> -> vector<8x128xf32>
    %160 = tpu.concatenate %111, %159 in 0 : vector<8x128xf32>, vector<8x128xf32> -> vector<16x128xf32>
    %c0_51 = arith.constant 0 : index
    %c0_52 = arith.constant 0 : index
    %c0_53 = arith.constant 0 : index
    %161 = vector.load %arg11[%c0_51, %c0_52, %c0_53] : memref<2x128x128xf32, #tpu.memory_space<vmem>>, vector<1x128x128xf32>
    %162 = vector.shape_cast %161 : vector<1x128x128xf32> to vector<128x128xf32>
    %163 = arith.truncf %160 : vector<16x128xf32> to vector<16x128xbf16>
    %164 = arith.truncf %162 : vector<128x128xf32> to vector<128x128xbf16>
    %cst_54 = arith.constant dense<0.000000e+00> : vector<16x128xf32>
    %165 = tpu.matmul %163, %164, %cst_54 {dimension_numbers = #tpu.dot_dimension_numbers<[1], [0], [0], [1], [0, 0, 1, 1], [], []>} : vector<16x128xbf16>, vector<128x128xbf16>, vector<16x128xf32> -> vector<16x128xf32>
    %c0_55 = arith.constant 0 : index
    %c0_56 = arith.constant 0 : index
    %c0_57 = arith.constant 0 : index
    %166 = vector.load %arg12[%c0_55, %c0_56, %c0_57] : memref<2x1x128xf32, #tpu.memory_space<vmem>>, vector<1x1x128xf32>
    %167 = vector.shape_cast %166 : vector<1x1x128xf32> to vector<1x128xf32>
    %168 = vector.broadcast %167 : vector<1x128xf32> to vector<16x128xf32>
    %169 = arith.addf %165, %168 : vector<16x128xf32>
    %170 = arith.addf %169, %53 : vector<16x128xf32>
    %c0_58 = arith.constant 0 : index
    %c0_59 = arith.constant 0 : index
    %c0_60 = arith.constant 0 : index
    %171 = vector.load %arg13[%c0_58, %c0_59, %c0_60] : memref<2x1x128xf32, #tpu.memory_space<vmem>>, vector<1x1x128xf32>
    %172 = vector.shape_cast %171 : vector<1x1x128xf32> to vector<1x128xf32>
    %c0_61 = arith.constant 0 : index
    %c0_62 = arith.constant 0 : index
    %c0_63 = arith.constant 0 : index
    %173 = vector.load %arg14[%c0_61, %c0_62, %c0_63] : memref<2x1x128xf32, #tpu.memory_space<vmem>>, vector<1x1x128xf32>
    %174 = vector.shape_cast %173 : vector<1x1x128xf32> to vector<1x128xf32>
    %cst_64 = arith.constant dense<0.000000e+00> : vector<16xf32>
    %175 = vector.multi_reduction <add>, %170, %cst_64 [1] : vector<16x128xf32> to vector<16xf32>
    %176 = vector.shape_cast %175 : vector<16xf32> to vector<16x1xf32>
    %cst_65 = arith.constant 1.280000e+02 : f32
    %177 = vector.broadcast %cst_65 : f32 to vector<16x1xf32>
    %178 = arith.divf %176, %177 : vector<16x1xf32>
    %179 = vector.broadcast %178 : vector<16x1xf32> to vector<16x128xf32>
    %180 = arith.subf %170, %179 : vector<16x128xf32>
    %181 = arith.mulf %180, %180 : vector<16x128xf32>
    %cst_66 = arith.constant dense<0.000000e+00> : vector<16xf32>
    %182 = vector.multi_reduction <add>, %181, %cst_66 [1] : vector<16x128xf32> to vector<16xf32>
    %183 = vector.shape_cast %182 : vector<16xf32> to vector<16x1xf32>
    %cst_67 = arith.constant 1.280000e+02 : f32
    %184 = vector.broadcast %cst_67 : f32 to vector<16x1xf32>
    %185 = arith.divf %183, %184 : vector<16x1xf32>
    %186 = vector.broadcast %178 : vector<16x1xf32> to vector<16x128xf32>
    %187 = arith.subf %170, %186 : vector<16x128xf32>
    %cst_68 = arith.constant 9.99999996E-13 : f32
    %188 = vector.broadcast %cst_68 : f32 to vector<16x1xf32>
    %189 = arith.addf %185, %188 : vector<16x1xf32>
    %190 = math.rsqrt %189 : vector<16x1xf32>
    %191 = vector.broadcast %190 : vector<16x1xf32> to vector<16x128xf32>
    %192 = arith.mulf %187, %191 : vector<16x128xf32>
    %193 = vector.broadcast %172 : vector<1x128xf32> to vector<16x128xf32>
    %194 = arith.mulf %192, %193 : vector<16x128xf32>
    %195 = vector.broadcast %174 : vector<1x128xf32> to vector<16x128xf32>
    %196 = arith.addf %194, %195 : vector<16x128xf32>
    %c0_69 = arith.constant 0 : index
    %c0_70 = arith.constant 0 : index
    %c0_71 = arith.constant 0 : index
    %197 = vector.load %arg15[%c0_69, %c0_70, %c0_71] : memref<2x128x256xf32, #tpu.memory_space<vmem>>, vector<1x128x256xf32>
    %198 = vector.shape_cast %197 : vector<1x128x256xf32> to vector<128x256xf32>
    %199 = arith.truncf %196 : vector<16x128xf32> to vector<16x128xbf16>
    %200 = arith.truncf %198 : vector<128x256xf32> to vector<128x256xbf16>
    %cst_72 = arith.constant dense<0.000000e+00> : vector<16x256xf32>
    %201 = tpu.matmul %199, %200, %cst_72 {dimension_numbers = #tpu.dot_dimension_numbers<[1], [0], [0], [1], [0, 0, 1, 1], [], []>} : vector<16x128xbf16>, vector<128x256xbf16>, vector<16x256xf32> -> vector<16x256xf32>
    %c0_73 = arith.constant 0 : index
    %c0_74 = arith.constant 0 : index
    %c0_75 = arith.constant 0 : index
    %202 = vector.load %arg16[%c0_73, %c0_74, %c0_75] : memref<2x1x256xf32, #tpu.memory_space<vmem>>, vector<1x1x256xf32>
    %203 = vector.shape_cast %202 : vector<1x1x256xf32> to vector<1x256xf32>
    %204 = vector.broadcast %203 : vector<1x256xf32> to vector<16x256xf32>
    %205 = arith.addf %201, %204 : vector<16x256xf32>
    %cst_76 = arith.constant 5.000000e-01 : f32
    %206 = vector.broadcast %cst_76 : f32 to vector<16x256xf32>
    %207 = arith.mulf %206, %205 : vector<16x256xf32>
    %cst_77 = arith.constant 4.471500e-02 : f32
    %208 = vector.broadcast %cst_77 : f32 to vector<16x256xf32>
    %209 = arith.mulf %208, %205 : vector<16x256xf32>
    %210 = arith.mulf %209, %205 : vector<16x256xf32>
    %211 = arith.mulf %210, %205 : vector<16x256xf32>
    %212 = arith.addf %205, %211 : vector<16x256xf32>
    %cst_78 = arith.constant 0.797884583 : f32
    %213 = vector.broadcast %cst_78 : f32 to vector<16x256xf32>
    %214 = arith.mulf %213, %212 : vector<16x256xf32>
    %215 = math.tanh %214 : vector<16x256xf32>
    %cst_79 = arith.constant 1.000000e+00 : f32
    %216 = vector.broadcast %cst_79 : f32 to vector<16x256xf32>
    %217 = arith.addf %216, %215 : vector<16x256xf32>
    %218 = arith.mulf %207, %217 : vector<16x256xf32>
    %c0_80 = arith.constant 0 : index
    %c0_81 = arith.constant 0 : index
    %c0_82 = arith.constant 0 : index
    %219 = vector.load %arg17[%c0_80, %c0_81, %c0_82] : memref<2x256x128xf32, #tpu.memory_space<vmem>>, vector<1x256x128xf32>
    %220 = vector.shape_cast %219 : vector<1x256x128xf32> to vector<256x128xf32>
    %221 = arith.truncf %218 : vector<16x256xf32> to vector<16x256xbf16>
    %222 = arith.truncf %220 : vector<256x128xf32> to vector<256x128xbf16>
    %cst_83 = arith.constant dense<0.000000e+00> : vector<16x128xf32>
    %223 = tpu.matmul %221, %222, %cst_83 {dimension_numbers = #tpu.dot_dimension_numbers<[1], [0], [0], [1], [0, 0, 1, 1], [], []>} : vector<16x256xbf16>, vector<256x128xbf16>, vector<16x128xf32> -> vector<16x128xf32>
    %c0_84 = arith.constant 0 : index
    %c0_85 = arith.constant 0 : index
    %c0_86 = arith.constant 0 : index
    %224 = vector.load %arg18[%c0_84, %c0_85, %c0_86] : memref<2x1x128xf32, #tpu.memory_space<vmem>>, vector<1x1x128xf32>
    %225 = vector.shape_cast %224 : vector<1x1x128xf32> to vector<1x128xf32>
    %226 = vector.broadcast %225 : vector<1x128xf32> to vector<16x128xf32>
    %227 = arith.addf %223, %226 : vector<16x128xf32>
    %228 = arith.addf %227, %196 : vector<16x128xf32>
    %c0_87 = arith.constant 0 : index
    %c0_88 = arith.constant 0 : index
    %c0_89 = arith.constant 0 : index
    %229 = vector.load %arg19[%c0_87, %c0_88, %c0_89] : memref<2x1x128xf32, #tpu.memory_space<vmem>>, vector<1x1x128xf32>
    %230 = vector.shape_cast %229 : vector<1x1x128xf32> to vector<1x128xf32>
    %c0_90 = arith.constant 0 : index
    %c0_91 = arith.constant 0 : index
    %c0_92 = arith.constant 0 : index
    %231 = vector.load %arg20[%c0_90, %c0_91, %c0_92] : memref<2x1x128xf32, #tpu.memory_space<vmem>>, vector<1x1x128xf32>
    %232 = vector.shape_cast %231 : vector<1x1x128xf32> to vector<1x128xf32>
    %cst_93 = arith.constant dense<0.000000e+00> : vector<16xf32>
    %233 = vector.multi_reduction <add>, %228, %cst_93 [1] : vector<16x128xf32> to vector<16xf32>
    %234 = vector.shape_cast %233 : vector<16xf32> to vector<16x1xf32>
    %cst_94 = arith.constant 1.280000e+02 : f32
    %235 = vector.broadcast %cst_94 : f32 to vector<16x1xf32>
    %236 = arith.divf %234, %235 : vector<16x1xf32>
    %237 = vector.broadcast %236 : vector<16x1xf32> to vector<16x128xf32>
    %238 = arith.subf %228, %237 : vector<16x128xf32>
    %239 = arith.mulf %238, %238 : vector<16x128xf32>
    %cst_95 = arith.constant dense<0.000000e+00> : vector<16xf32>
    %240 = vector.multi_reduction <add>, %239, %cst_95 [1] : vector<16x128xf32> to vector<16xf32>
    %241 = vector.shape_cast %240 : vector<16xf32> to vector<16x1xf32>
    %cst_96 = arith.constant 1.280000e+02 : f32
    %242 = vector.broadcast %cst_96 : f32 to vector<16x1xf32>
    %243 = arith.divf %241, %242 : vector<16x1xf32>
    %244 = vector.broadcast %236 : vector<16x1xf32> to vector<16x128xf32>
    %245 = arith.subf %228, %244 : vector<16x128xf32>
    %cst_97 = arith.constant 9.99999996E-13 : f32
    %246 = vector.broadcast %cst_97 : f32 to vector<16x1xf32>
    %247 = arith.addf %243, %246 : vector<16x1xf32>
    %248 = math.rsqrt %247 : vector<16x1xf32>
    %249 = vector.broadcast %248 : vector<16x1xf32> to vector<16x128xf32>
    %250 = arith.mulf %245, %249 : vector<16x128xf32>
    %251 = vector.broadcast %230 : vector<1x128xf32> to vector<16x128xf32>
    %252 = arith.mulf %250, %251 : vector<16x128xf32>
    %253 = vector.broadcast %232 : vector<1x128xf32> to vector<16x128xf32>
    %254 = arith.addf %252, %253 : vector<16x128xf32>
    %c1_98 = arith.constant 1 : index
    %c0_99 = arith.constant 0 : index
    %c0_100 = arith.constant 0 : index
    %255 = vector.load %arg9[%c1_98, %c0_99, %c0_100] : memref<2x128x384xf32, #tpu.memory_space<vmem>>, vector<1x128x384xf32>
    %256 = vector.shape_cast %255 : vector<1x128x384xf32> to vector<128x384xf32>
    %257 = arith.truncf %254 : vector<16x128xf32> to vector<16x128xbf16>
    %258 = arith.truncf %256 : vector<128x384xf32> to vector<128x384xbf16>
    %cst_101 = arith.constant dense<0.000000e+00> : vector<16x384xf32>
    %259 = tpu.matmul %257, %258, %cst_101 {dimension_numbers = #tpu.dot_dimension_numbers<[1], [0], [0], [1], [0, 0, 1, 1], [], []>} : vector<16x128xbf16>, vector<128x384xbf16>, vector<16x384xf32> -> vector<16x384xf32>
    %c1_102 = arith.constant 1 : index
    %c0_103 = arith.constant 0 : index
    %c0_104 = arith.constant 0 : index
    %260 = vector.load %arg10[%c1_102, %c0_103, %c0_104] : memref<2x1x384xf32, #tpu.memory_space<vmem>>, vector<1x1x384xf32>
    %261 = vector.shape_cast %260 : vector<1x1x384xf32> to vector<1x384xf32>
    %262 = vector.broadcast %261 : vector<1x384xf32> to vector<16x384xf32>
    %263 = arith.addf %259, %262 : vector<16x384xf32>
    %264 = vector.extract_strided_slice %54 {offsets = [0, 0], sizes = [1, 8], strides = [1, 1]} : vector<2x8xf32> to vector<1x8xf32>
    %265 = vector.extract_strided_slice %263 {offsets = [0, 0], sizes = [8, 64], strides = [1, 1]} : vector<16x384xf32> to vector<8x64xf32>
    %266 = vector.extract_strided_slice %263 {offsets = [0, 128], sizes = [8, 64], strides = [1, 1]} : vector<16x384xf32> to vector<8x64xf32>
    %267 = vector.extract_strided_slice %263 {offsets = [0, 256], sizes = [8, 64], strides = [1, 1]} : vector<16x384xf32> to vector<8x64xf32>
    %268 = arith.truncf %265 : vector<8x64xf32> to vector<8x64xbf16>
    %269 = arith.truncf %266 : vector<8x64xf32> to vector<8x64xbf16>
    %cst_105 = arith.constant dense<0.000000e+00> : vector<8x8xf32>
    %270 = tpu.matmul %268, %269, %cst_105 {dimension_numbers = #tpu.dot_dimension_numbers<[1], [1], [0], [0], [0, 0, 1, 0], [], []>} : vector<8x64xbf16>, vector<8x64xbf16>, vector<8x8xf32> -> vector<8x8xf32>
    %cst_106 = arith.constant 1.250000e-01 : f32
    %271 = vector.broadcast %cst_106 : f32 to vector<8x8xf32>
    %272 = arith.mulf %270, %271 : vector<8x8xf32>
    %273 = vector.broadcast %264 : vector<1x8xf32> to vector<8x8xf32>
    %274 = arith.addf %272, %273 : vector<8x8xf32>
    %cst_107 = arith.constant dense<0xFF800000> : vector<8xf32>
    %275 = vector.multi_reduction <maximumf>, %274, %cst_107 [1] : vector<8x8xf32> to vector<8xf32>
    %276 = vector.shape_cast %275 : vector<8xf32> to vector<8x1xf32>
    %277 = vector.broadcast %276 : vector<8x1xf32> to vector<8x8xf32>
    %278 = arith.subf %274, %277 : vector<8x8xf32>
    %279 = math.exp %278 : vector<8x8xf32>
    %cst_108 = arith.constant dense<0.000000e+00> : vector<8xf32>
    %280 = vector.multi_reduction <add>, %279, %cst_108 [1] : vector<8x8xf32> to vector<8xf32>
    %281 = vector.shape_cast %280 : vector<8xf32> to vector<8x1xf32>
    %282 = tpu.reciprocal %281 {approx = true} : vector<8x1xf32> -> vector<8x1xf32>
    %283 = vector.broadcast %282 : vector<8x1xf32> to vector<8x8xf32>
    %284 = arith.mulf %279, %283 : vector<8x8xf32>
    %285 = arith.truncf %284 : vector<8x8xf32> to vector<8x8xbf16>
    %286 = arith.truncf %267 : vector<8x64xf32> to vector<8x64xbf16>
    %cst_109 = arith.constant dense<0.000000e+00> : vector<8x64xf32>
    %287 = tpu.matmul %285, %286, %cst_109 {dimension_numbers = #tpu.dot_dimension_numbers<[1], [0], [0], [1], [0, 0, 1, 1], [], []>} : vector<8x8xbf16>, vector<8x64xbf16>, vector<8x64xf32> -> vector<8x64xf32>
    %288 = vector.extract_strided_slice %263 {offsets = [0, 64], sizes = [8, 64], strides = [1, 1]} : vector<16x384xf32> to vector<8x64xf32>
    %289 = vector.extract_strided_slice %263 {offsets = [0, 192], sizes = [8, 64], strides = [1, 1]} : vector<16x384xf32> to vector<8x64xf32>
    %290 = vector.extract_strided_slice %263 {offsets = [0, 320], sizes = [8, 64], strides = [1, 1]} : vector<16x384xf32> to vector<8x64xf32>
    %291 = arith.truncf %288 : vector<8x64xf32> to vector<8x64xbf16>
    %292 = arith.truncf %289 : vector<8x64xf32> to vector<8x64xbf16>
    %cst_110 = arith.constant dense<0.000000e+00> : vector<8x8xf32>
    %293 = tpu.matmul %291, %292, %cst_110 {dimension_numbers = #tpu.dot_dimension_numbers<[1], [1], [0], [0], [0, 0, 1, 0], [], []>} : vector<8x64xbf16>, vector<8x64xbf16>, vector<8x8xf32> -> vector<8x8xf32>
    %cst_111 = arith.constant 1.250000e-01 : f32
    %294 = vector.broadcast %cst_111 : f32 to vector<8x8xf32>
    %295 = arith.mulf %293, %294 : vector<8x8xf32>
    %296 = vector.broadcast %264 : vector<1x8xf32> to vector<8x8xf32>
    %297 = arith.addf %295, %296 : vector<8x8xf32>
    %cst_112 = arith.constant dense<0xFF800000> : vector<8xf32>
    %298 = vector.multi_reduction <maximumf>, %297, %cst_112 [1] : vector<8x8xf32> to vector<8xf32>
    %299 = vector.shape_cast %298 : vector<8xf32> to vector<8x1xf32>
    %300 = vector.broadcast %299 : vector<8x1xf32> to vector<8x8xf32>
    %301 = arith.subf %297, %300 : vector<8x8xf32>
    %302 = math.exp %301 : vector<8x8xf32>
    %cst_113 = arith.constant dense<0.000000e+00> : vector<8xf32>
    %303 = vector.multi_reduction <add>, %302, %cst_113 [1] : vector<8x8xf32> to vector<8xf32>
    %304 = vector.shape_cast %303 : vector<8xf32> to vector<8x1xf32>
    %305 = tpu.reciprocal %304 {approx = true} : vector<8x1xf32> -> vector<8x1xf32>
    %306 = vector.broadcast %305 : vector<8x1xf32> to vector<8x8xf32>
    %307 = arith.mulf %302, %306 : vector<8x8xf32>
    %308 = arith.truncf %307 : vector<8x8xf32> to vector<8x8xbf16>
    %309 = arith.truncf %290 : vector<8x64xf32> to vector<8x64xbf16>
    %cst_114 = arith.constant dense<0.000000e+00> : vector<8x64xf32>
    %310 = tpu.matmul %308, %309, %cst_114 {dimension_numbers = #tpu.dot_dimension_numbers<[1], [0], [0], [1], [0, 0, 1, 1], [], []>} : vector<8x8xbf16>, vector<8x64xbf16>, vector<8x64xf32> -> vector<8x64xf32>
    %311 = tpu.concatenate %287, %310 in 1 : vector<8x64xf32>, vector<8x64xf32> -> vector<8x128xf32>
    %312 = vector.extract_strided_slice %54 {offsets = [1, 0], sizes = [1, 8], strides = [1, 1]} : vector<2x8xf32> to vector<1x8xf32>
    %313 = vector.extract_strided_slice %263 {offsets = [8, 0], sizes = [8, 64], strides = [1, 1]} : vector<16x384xf32> to vector<8x64xf32>
    %314 = vector.extract_strided_slice %263 {offsets = [8, 128], sizes = [8, 64], strides = [1, 1]} : vector<16x384xf32> to vector<8x64xf32>
    %315 = vector.extract_strided_slice %263 {offsets = [8, 256], sizes = [8, 64], strides = [1, 1]} : vector<16x384xf32> to vector<8x64xf32>
    %316 = arith.truncf %313 : vector<8x64xf32> to vector<8x64xbf16>
    %317 = arith.truncf %314 : vector<8x64xf32> to vector<8x64xbf16>
    %cst_115 = arith.constant dense<0.000000e+00> : vector<8x8xf32>
    %318 = tpu.matmul %316, %317, %cst_115 {dimension_numbers = #tpu.dot_dimension_numbers<[1], [1], [0], [0], [0, 0, 1, 0], [], []>} : vector<8x64xbf16>, vector<8x64xbf16>, vector<8x8xf32> -> vector<8x8xf32>
    %cst_116 = arith.constant 1.250000e-01 : f32
    %319 = vector.broadcast %cst_116 : f32 to vector<8x8xf32>
    %320 = arith.mulf %318, %319 : vector<8x8xf32>
    %321 = vector.broadcast %312 : vector<1x8xf32> to vector<8x8xf32>
    %322 = arith.addf %320, %321 : vector<8x8xf32>
    %cst_117 = arith.constant dense<0xFF800000> : vector<8xf32>
    %323 = vector.multi_reduction <maximumf>, %322, %cst_117 [1] : vector<8x8xf32> to vector<8xf32>
    %324 = vector.shape_cast %323 : vector<8xf32> to vector<8x1xf32>
    %325 = vector.broadcast %324 : vector<8x1xf32> to vector<8x8xf32>
    %326 = arith.subf %322, %325 : vector<8x8xf32>
    %327 = math.exp %326 : vector<8x8xf32>
    %cst_118 = arith.constant dense<0.000000e+00> : vector<8xf32>
    %328 = vector.multi_reduction <add>, %327, %cst_118 [1] : vector<8x8xf32> to vector<8xf32>
    %329 = vector.shape_cast %328 : vector<8xf32> to vector<8x1xf32>
    %330 = tpu.reciprocal %329 {approx = true} : vector<8x1xf32> -> vector<8x1xf32>
    %331 = vector.broadcast %330 : vector<8x1xf32> to vector<8x8xf32>
    %332 = arith.mulf %327, %331 : vector<8x8xf32>
    %333 = arith.truncf %332 : vector<8x8xf32> to vector<8x8xbf16>
    %334 = arith.truncf %315 : vector<8x64xf32> to vector<8x64xbf16>
    %cst_119 = arith.constant dense<0.000000e+00> : vector<8x64xf32>
    %335 = tpu.matmul %333, %334, %cst_119 {dimension_numbers = #tpu.dot_dimension_numbers<[1], [0], [0], [1], [0, 0, 1, 1], [], []>} : vector<8x8xbf16>, vector<8x64xbf16>, vector<8x64xf32> -> vector<8x64xf32>
    %336 = vector.extract_strided_slice %263 {offsets = [8, 64], sizes = [8, 64], strides = [1, 1]} : vector<16x384xf32> to vector<8x64xf32>
    %337 = vector.extract_strided_slice %263 {offsets = [8, 192], sizes = [8, 64], strides = [1, 1]} : vector<16x384xf32> to vector<8x64xf32>
    %338 = vector.extract_strided_slice %263 {offsets = [8, 320], sizes = [8, 64], strides = [1, 1]} : vector<16x384xf32> to vector<8x64xf32>
    %339 = arith.truncf %336 : vector<8x64xf32> to vector<8x64xbf16>
    %340 = arith.truncf %337 : vector<8x64xf32> to vector<8x64xbf16>
    %cst_120 = arith.constant dense<0.000000e+00> : vector<8x8xf32>
    %341 = tpu.matmul %339, %340, %cst_120 {dimension_numbers = #tpu.dot_dimension_numbers<[1], [1], [0], [0], [0, 0, 1, 0], [], []>} : vector<8x64xbf16>, vector<8x64xbf16>, vector<8x8xf32> -> vector<8x8xf32>
    %cst_121 = arith.constant 1.250000e-01 : f32
    %342 = vector.broadcast %cst_121 : f32 to vector<8x8xf32>
    %343 = arith.mulf %341, %342 : vector<8x8xf32>
    %344 = vector.broadcast %312 : vector<1x8xf32> to vector<8x8xf32>
    %345 = arith.addf %343, %344 : vector<8x8xf32>
    %cst_122 = arith.constant dense<0xFF800000> : vector<8xf32>
    %346 = vector.multi_reduction <maximumf>, %345, %cst_122 [1] : vector<8x8xf32> to vector<8xf32>
    %347 = vector.shape_cast %346 : vector<8xf32> to vector<8x1xf32>
    %348 = vector.broadcast %347 : vector<8x1xf32> to vector<8x8xf32>
    %349 = arith.subf %345, %348 : vector<8x8xf32>
    %350 = math.exp %349 : vector<8x8xf32>
    %cst_123 = arith.constant dense<0.000000e+00> : vector<8xf32>
    %351 = vector.multi_reduction <add>, %350, %cst_123 [1] : vector<8x8xf32> to vector<8xf32>
    %352 = vector.shape_cast %351 : vector<8xf32> to vector<8x1xf32>
    %353 = tpu.reciprocal %352 {approx = true} : vector<8x1xf32> -> vector<8x1xf32>
    %354 = vector.broadcast %353 : vector<8x1xf32> to vector<8x8xf32>
    %355 = arith.mulf %350, %354 : vector<8x8xf32>
    %356 = arith.truncf %355 : vector<8x8xf32> to vector<8x8xbf16>
    %357 = arith.truncf %338 : vector<8x64xf32> to vector<8x64xbf16>
    %cst_124 = arith.constant dense<0.000000e+00> : vector<8x64xf32>
    %358 = tpu.matmul %356, %357, %cst_124 {dimension_numbers = #tpu.dot_dimension_numbers<[1], [0], [0], [1], [0, 0, 1, 1], [], []>} : vector<8x8xbf16>, vector<8x64xbf16>, vector<8x64xf32> -> vector<8x64xf32>
    %359 = tpu.concatenate %335, %358 in 1 : vector<8x64xf32>, vector<8x64xf32> -> vector<8x128xf32>
    %360 = tpu.concatenate %311, %359 in 0 : vector<8x128xf32>, vector<8x128xf32> -> vector<16x128xf32>
    %c1_125 = arith.constant 1 : index
    %c0_126 = arith.constant 0 : index
    %c0_127 = arith.constant 0 : index
    %361 = vector.load %arg11[%c1_125, %c0_126, %c0_127] : memref<2x128x128xf32, #tpu.memory_space<vmem>>, vector<1x128x128xf32>
    %362 = vector.shape_cast %361 : vector<1x128x128xf32> to vector<128x128xf32>
    %363 = arith.truncf %360 : vector<16x128xf32> to vector<16x128xbf16>
    %364 = arith.truncf %362 : vector<128x128xf32> to vector<128x128xbf16>
    %cst_128 = arith.constant dense<0.000000e+00> : vector<16x128xf32>
    %365 = tpu.matmul %363, %364, %cst_128 {dimension_numbers = #tpu.dot_dimension_numbers<[1], [0], [0], [1], [0, 0, 1, 1], [], []>} : vector<16x128xbf16>, vector<128x128xbf16>, vector<16x128xf32> -> vector<16x128xf32>
    %c1_129 = arith.constant 1 : index
    %c0_130 = arith.constant 0 : index
    %c0_131 = arith.constant 0 : index
    %366 = vector.load %arg12[%c1_129, %c0_130, %c0_131] : memref<2x1x128xf32, #tpu.memory_space<vmem>>, vector<1x1x128xf32>
    %367 = vector.shape_cast %366 : vector<1x1x128xf32> to vector<1x128xf32>
    %368 = vector.broadcast %367 : vector<1x128xf32> to vector<16x128xf32>
    %369 = arith.addf %365, %368 : vector<16x128xf32>
    %370 = arith.addf %369, %254 : vector<16x128xf32>
    %c1_132 = arith.constant 1 : index
    %c0_133 = arith.constant 0 : index
    %c0_134 = arith.constant 0 : index
    %371 = vector.load %arg13[%c1_132, %c0_133, %c0_134] : memref<2x1x128xf32, #tpu.memory_space<vmem>>, vector<1x1x128xf32>
    %372 = vector.shape_cast %371 : vector<1x1x128xf32> to vector<1x128xf32>
    %c1_135 = arith.constant 1 : index
    %c0_136 = arith.constant 0 : index
    %c0_137 = arith.constant 0 : index
    %373 = vector.load %arg14[%c1_135, %c0_136, %c0_137] : memref<2x1x128xf32, #tpu.memory_space<vmem>>, vector<1x1x128xf32>
    %374 = vector.shape_cast %373 : vector<1x1x128xf32> to vector<1x128xf32>
    %cst_138 = arith.constant dense<0.000000e+00> : vector<16xf32>
    %375 = vector.multi_reduction <add>, %370, %cst_138 [1] : vector<16x128xf32> to vector<16xf32>
    %376 = vector.shape_cast %375 : vector<16xf32> to vector<16x1xf32>
    %cst_139 = arith.constant 1.280000e+02 : f32
    %377 = vector.broadcast %cst_139 : f32 to vector<16x1xf32>
    %378 = arith.divf %376, %377 : vector<16x1xf32>
    %379 = vector.broadcast %378 : vector<16x1xf32> to vector<16x128xf32>
    %380 = arith.subf %370, %379 : vector<16x128xf32>
    %381 = arith.mulf %380, %380 : vector<16x128xf32>
    %cst_140 = arith.constant dense<0.000000e+00> : vector<16xf32>
    %382 = vector.multi_reduction <add>, %381, %cst_140 [1] : vector<16x128xf32> to vector<16xf32>
    %383 = vector.shape_cast %382 : vector<16xf32> to vector<16x1xf32>
    %cst_141 = arith.constant 1.280000e+02 : f32
    %384 = vector.broadcast %cst_141 : f32 to vector<16x1xf32>
    %385 = arith.divf %383, %384 : vector<16x1xf32>
    %386 = vector.broadcast %378 : vector<16x1xf32> to vector<16x128xf32>
    %387 = arith.subf %370, %386 : vector<16x128xf32>
    %cst_142 = arith.constant 9.99999996E-13 : f32
    %388 = vector.broadcast %cst_142 : f32 to vector<16x1xf32>
    %389 = arith.addf %385, %388 : vector<16x1xf32>
    %390 = math.rsqrt %389 : vector<16x1xf32>
    %391 = vector.broadcast %390 : vector<16x1xf32> to vector<16x128xf32>
    %392 = arith.mulf %387, %391 : vector<16x128xf32>
    %393 = vector.broadcast %372 : vector<1x128xf32> to vector<16x128xf32>
    %394 = arith.mulf %392, %393 : vector<16x128xf32>
    %395 = vector.broadcast %374 : vector<1x128xf32> to vector<16x128xf32>
    %396 = arith.addf %394, %395 : vector<16x128xf32>
    %c1_143 = arith.constant 1 : index
    %c0_144 = arith.constant 0 : index
    %c0_145 = arith.constant 0 : index
    %397 = vector.load %arg15[%c1_143, %c0_144, %c0_145] : memref<2x128x256xf32, #tpu.memory_space<vmem>>, vector<1x128x256xf32>
    %398 = vector.shape_cast %397 : vector<1x128x256xf32> to vector<128x256xf32>
    %399 = arith.truncf %396 : vector<16x128xf32> to vector<16x128xbf16>
    %400 = arith.truncf %398 : vector<128x256xf32> to vector<128x256xbf16>
    %cst_146 = arith.constant dense<0.000000e+00> : vector<16x256xf32>
    %401 = tpu.matmul %399, %400, %cst_146 {dimension_numbers = #tpu.dot_dimension_numbers<[1], [0], [0], [1], [0, 0, 1, 1], [], []>} : vector<16x128xbf16>, vector<128x256xbf16>, vector<16x256xf32> -> vector<16x256xf32>
    %c1_147 = arith.constant 1 : index
    %c0_148 = arith.constant 0 : index
    %c0_149 = arith.constant 0 : index
    %402 = vector.load %arg16[%c1_147, %c0_148, %c0_149] : memref<2x1x256xf32, #tpu.memory_space<vmem>>, vector<1x1x256xf32>
    %403 = vector.shape_cast %402 : vector<1x1x256xf32> to vector<1x256xf32>
    %404 = vector.broadcast %403 : vector<1x256xf32> to vector<16x256xf32>
    %405 = arith.addf %401, %404 : vector<16x256xf32>
    %cst_150 = arith.constant 5.000000e-01 : f32
    %406 = vector.broadcast %cst_150 : f32 to vector<16x256xf32>
    %407 = arith.mulf %406, %405 : vector<16x256xf32>
    %cst_151 = arith.constant 4.471500e-02 : f32
    %408 = vector.broadcast %cst_151 : f32 to vector<16x256xf32>
    %409 = arith.mulf %408, %405 : vector<16x256xf32>
    %410 = arith.mulf %409, %405 : vector<16x256xf32>
    %411 = arith.mulf %410, %405 : vector<16x256xf32>
    %412 = arith.addf %405, %411 : vector<16x256xf32>
    %cst_152 = arith.constant 0.797884583 : f32
    %413 = vector.broadcast %cst_152 : f32 to vector<16x256xf32>
    %414 = arith.mulf %413, %412 : vector<16x256xf32>
    %415 = math.tanh %414 : vector<16x256xf32>
    %cst_153 = arith.constant 1.000000e+00 : f32
    %416 = vector.broadcast %cst_153 : f32 to vector<16x256xf32>
    %417 = arith.addf %416, %415 : vector<16x256xf32>
    %418 = arith.mulf %407, %417 : vector<16x256xf32>
    %c1_154 = arith.constant 1 : index
    %c0_155 = arith.constant 0 : index
    %c0_156 = arith.constant 0 : index
    %419 = vector.load %arg17[%c1_154, %c0_155, %c0_156] : memref<2x256x128xf32, #tpu.memory_space<vmem>>, vector<1x256x128xf32>
    %420 = vector.shape_cast %419 : vector<1x256x128xf32> to vector<256x128xf32>
    %421 = arith.truncf %418 : vector<16x256xf32> to vector<16x256xbf16>
    %422 = arith.truncf %420 : vector<256x128xf32> to vector<256x128xbf16>
    %cst_157 = arith.constant dense<0.000000e+00> : vector<16x128xf32>
    %423 = tpu.matmul %421, %422, %cst_157 {dimension_numbers = #tpu.dot_dimension_numbers<[1], [0], [0], [1], [0, 0, 1, 1], [], []>} : vector<16x256xbf16>, vector<256x128xbf16>, vector<16x128xf32> -> vector<16x128xf32>
    %c1_158 = arith.constant 1 : index
    %c0_159 = arith.constant 0 : index
    %c0_160 = arith.constant 0 : index
    %424 = vector.load %arg18[%c1_158, %c0_159, %c0_160] : memref<2x1x128xf32, #tpu.memory_space<vmem>>, vector<1x1x128xf32>
    %425 = vector.shape_cast %424 : vector<1x1x128xf32> to vector<1x128xf32>
    %426 = vector.broadcast %425 : vector<1x128xf32> to vector<16x128xf32>
    %427 = arith.addf %423, %426 : vector<16x128xf32>
    %428 = arith.addf %427, %396 : vector<16x128xf32>
    %c1_161 = arith.constant 1 : index
    %c0_162 = arith.constant 0 : index
    %c0_163 = arith.constant 0 : index
    %429 = vector.load %arg19[%c1_161, %c0_162, %c0_163] : memref<2x1x128xf32, #tpu.memory_space<vmem>>, vector<1x1x128xf32>
    %430 = vector.shape_cast %429 : vector<1x1x128xf32> to vector<1x128xf32>
    %c1_164 = arith.constant 1 : index
    %c0_165 = arith.constant 0 : index
    %c0_166 = arith.constant 0 : index
    %431 = vector.load %arg20[%c1_164, %c0_165, %c0_166] : memref<2x1x128xf32, #tpu.memory_space<vmem>>, vector<1x1x128xf32>
    %432 = vector.shape_cast %431 : vector<1x1x128xf32> to vector<1x128xf32>
    %cst_167 = arith.constant dense<0.000000e+00> : vector<16xf32>
    %433 = vector.multi_reduction <add>, %428, %cst_167 [1] : vector<16x128xf32> to vector<16xf32>
    %434 = vector.shape_cast %433 : vector<16xf32> to vector<16x1xf32>
    %cst_168 = arith.constant 1.280000e+02 : f32
    %435 = vector.broadcast %cst_168 : f32 to vector<16x1xf32>
    %436 = arith.divf %434, %435 : vector<16x1xf32>
    %437 = vector.broadcast %436 : vector<16x1xf32> to vector<16x128xf32>
    %438 = arith.subf %428, %437 : vector<16x128xf32>
    %439 = arith.mulf %438, %438 : vector<16x128xf32>
    %cst_169 = arith.constant dense<0.000000e+00> : vector<16xf32>
    %440 = vector.multi_reduction <add>, %439, %cst_169 [1] : vector<16x128xf32> to vector<16xf32>
    %441 = vector.shape_cast %440 : vector<16xf32> to vector<16x1xf32>
    %cst_170 = arith.constant 1.280000e+02 : f32
    %442 = vector.broadcast %cst_170 : f32 to vector<16x1xf32>
    %443 = arith.divf %441, %442 : vector<16x1xf32>
    %444 = vector.broadcast %436 : vector<16x1xf32> to vector<16x128xf32>
    %445 = arith.subf %428, %444 : vector<16x128xf32>
    %cst_171 = arith.constant 9.99999996E-13 : f32
    %446 = vector.broadcast %cst_171 : f32 to vector<16x1xf32>
    %447 = arith.addf %443, %446 : vector<16x1xf32>
    %448 = math.rsqrt %447 : vector<16x1xf32>
    %449 = vector.broadcast %448 : vector<16x1xf32> to vector<16x128xf32>
    %450 = arith.mulf %445, %449 : vector<16x128xf32>
    %451 = vector.broadcast %430 : vector<1x128xf32> to vector<16x128xf32>
    %452 = arith.mulf %450, %451 : vector<16x128xf32>
    %453 = vector.broadcast %432 : vector<1x128xf32> to vector<16x128xf32>
    %454 = arith.addf %452, %453 : vector<16x128xf32>
    %455 = arith.truncf %454 : vector<16x128xf32> to vector<16x128xbf16>
    %456 = arith.truncf %0 : vector<384x128xf32> to vector<384x128xbf16>
    %cst_172 = arith.constant dense<0.000000e+00> : vector<16x384xf32>
    %457 = tpu.matmul %455, %456, %cst_172 {dimension_numbers = #tpu.dot_dimension_numbers<[1], [1], [0], [0], [0, 0, 1, 0], [], []>} : vector<16x128xbf16>, vector<384x128xbf16>, vector<16x384xf32> -> vector<16x384xf32>
    %c0_173 = arith.constant 0 : index
    %c0_174 = arith.constant 0 : index
    %458 = vector.load %arg21[%c0_173, %c0_174] : memref<1x384xf32, #tpu.memory_space<vmem>>, vector<1x384xf32>
    %459 = vector.broadcast %458 : vector<1x384xf32> to vector<16x384xf32>
    %460 = arith.addf %457, %459 : vector<16x384xf32>
    %cst_175 = arith.constant dense<0xFF800000> : vector<16xf32>
    %461 = vector.multi_reduction <maximumf>, %460, %cst_175 [1] : vector<16x384xf32> to vector<16xf32>
    %462 = vector.shape_cast %461 : vector<16xf32> to vector<16x1xf32>
    %463 = vector.broadcast %462 : vector<16x1xf32> to vector<16x384xf32>
    %464 = arith.subf %460, %463 : vector<16x384xf32>
    %465 = math.exp %464 : vector<16x384xf32>
    %cst_176 = arith.constant dense<0.000000e+00> : vector<16xf32>
    %466 = vector.multi_reduction <add>, %465, %cst_176 [1] : vector<16x384xf32> to vector<16xf32>
    %467 = vector.shape_cast %466 : vector<16xf32> to vector<16x1xf32>
    %468 = math.log %467 : vector<16x1xf32>
    %469 = vector.broadcast %468 : vector<16x1xf32> to vector<16x384xf32>
    %470 = arith.subf %464, %469 : vector<16x384xf32>
    %c0_177 = arith.constant 0 : index
    %c0_178 = arith.constant 0 : index
    %471 = vector.load %arg22[%c0_177, %c0_178] : memref<16x384xf32, #tpu.memory_space<vmem>>, vector<16x384xf32>
    tpu.vector_store %arg22[%c0_177, %c0_178], %470 {strides = array<i32>} : memref<16x384xf32, #tpu.memory_space<vmem>>, vector<16x384xf32>,
    return
  }
}

</mosaic_0001>

<llo_original>
// kernel: tile.0
$region0: #{tile.0}
  %s0 = inlined_call_operand.vmem [shape: s32[2,8], index: 0, kind: input, shape index: {}]
  %s1 = inlined_call_operand.vmem [shape: s32[16,1], index: 1, kind: output, shape index: {}]
  $region1: #{tile.0} parent=0
    #allocation0 [shape = 'u8[4096]{0}', space=vmem, size = 0x1000, scoped, tag = 'scoped mem for input reshape']
    %s3 = sshllo.u32 0, 2
    %v4 = vld [vmem:[%s0] sm:%s3]
    %5 = vst [vmem:[#allocation0] sm:%s3] %v4
    %v6 = vld [vmem:[#allocation0] sm:$0x3]
    %vm7 = vcmask 7168
    %8 = vst.msk [vmem:[%s1] ss:$8 sm:$0x3] %vm7, %v6
    %v9 = vld [vmem:[#allocation0] sm:$0x3]
    %10 = vrot.lane.b32.xlu0 %v9, 127
    %v11 = vpop.permute.xlu0 %10
    %vm12 = vcmask 7168
    %s13 = scalar_lea.vmem %s1, 1
    %14 = vst.msk [vmem:[%s13] ss:$8 sm:$0x3] %vm12, %v11
    %v15 = vld [vmem:[#allocation0] sm:$0x3]
    %16 = vrot.lane.b32.xlu0 %v15, 126
    %v17 = vpop.permute.xlu0 %16
    %vm18 = vcmask 7168
    %s19 = scalar_lea.vmem %s1, 2
    %20 = vst.msk [vmem:[%s19] ss:$8 sm:$0x3] %vm18, %v17
    %v21 = vld [vmem:[#allocation0] sm:$0x3]
    %22 = vrot.lane.b32.xlu0 %v21, 125
    %v23 = vpop.permute.xlu0 %22
    %vm24 = vcmask 7168
    %s25 = scalar_lea.vmem %s1, 3
    %26 = vst.msk [vmem:[%s25] ss:$8 sm:$0x3] %vm24, %v23
    %v27 = vld [vmem:[#allocation0] sm:$0x3]
    %28 = vrot.lane.b32.xlu0 %v27, 124
    %v29 = vpop.permute.xlu0 %28
    %vm30 = vcmask 7168
    %s31 = scalar_lea.vmem %s1, 4
    %32 = vst.msk [vmem:[%s31] ss:$8 sm:$0x3] %vm30, %v29
    %v33 = vld [vmem:[#allocation0] sm:$0x3]
    %34 = vrot.lane.b32.xlu0 %v33, 123
    %v35 = vpop.permute.xlu0 %34
    %vm36 = vcmask 7168
    %s37 = scalar_lea.vmem %s1, 5
    %38 = vst.msk [vmem:[%s37] ss:$8 sm:$0x3] %vm36, %v35
    %v39 = vld [vmem:[#allocation0] sm:$0x3]
    %40 = vrot.lane.b32.xlu0 %v39, 122
    %v41 = vpop.permute.xlu0 %40
    %vm42 = vcmask 7168
    %s43 = scalar_lea.vmem %s1, 6
    %44 = vst.msk [vmem:[%s43] ss:$8 sm:$0x3] %vm42, %v41
    %v45 = vld [vmem:[#allocation0] sm:$0x3]
    %46 = vrot.lane.b32.xlu0 %v45, 121
    %v47 = vpop.permute.xlu0 %46
    %vm48 = vcmask 7168
    %s49 = scalar_lea.vmem %s1, 7
    %50 = vst.msk [vmem:[%s49] ss:$8 sm:$0x3] %vm48, %v47

// kernel: bert_finetune_forward.1
$region0: #{bert_finetune_forward.1}
  #allocation0 [shape = 'u32[]', space=smem, size = 0x4, offset = 0x4, fixed_abs, tag = 'smem constant byte address 0x4 - core index']
  #allocation1 [shape = 'u32[144,128]{1,0:T(1,128)}', space=vmem, size = 0x12000, scoped, tag = 'internal scratch']
  %s0 = inlined_call_operand.vmem [shape: s32[16,1], index: 0, kind: input, shape index: {}]
  %s1 = inlined_call_operand.vmem [shape: s32[16,1], index: 1, kind: input, shape index: {}]
  %s2 = inlined_call_operand.vmem [shape: s32[16,1], index: 2, kind: input, shape index: {}]
  %s3 = inlined_call_operand.vmem [shape: f32[2,8], index: 3, kind: input, shape index: {}]
  %s4 = inlined_call_operand.hbm [shape: f32[384,128], index: 4, kind: input, shape index: {}]
  %s5 = inlined_call_operand.vmem [shape: f32[16,128], index: 5, kind: input, shape index: {}]
  %s6 = inlined_call_operand.vmem [shape: f32[2,128], index: 6, kind: input, shape index: {}]
  %s7 = inlined_call_operand.vmem [shape: f32[1,128], index: 7, kind: input, shape index: {}]
  %s8 = inlined_call_operand.vmem [shape: f32[1,128], index: 8, kind: input, shape index: {}]
  %s9 = inlined_call_operand.hbm [shape: f32[2,128,384], index: 9, kind: input, shape index: {}]
  %s10 = inlined_call_operand.vmem [shape: f32[2,1,384], index: 10, kind: input, shape index: {}]
  %s11 = inlined_call_operand.hbm [shape: f32[2,128,128], index: 11, kind: input, shape index: {}]
  %s12 = inlined_call_operand.vmem [shape: f32[2,1,128], index: 12, kind: input, shape index: {}]
  %s13 = inlined_call_operand.vmem [shape: f32[2,1,128], index: 13, kind: input, shape index: {}]
  %s14 = inlined_call_operand.vmem [shape: f32[2,1,128], index: 14, kind: input, shape index: {}]
  %s15 = inlined_call_operand.hbm [shape: f32[2,128,256], index: 15, kind: input, shape index: {}]
  %s16 = inlined_call_operand.vmem [shape: f32[2,1,256], index: 16, kind: input, shape index: {}]
  %s17 = inlined_call_operand.hbm [shape: f32[2,256,128], index: 17, kind: input, shape index: {}]
  %s18 = inlined_call_operand.vmem [shape: f32[2,1,128], index: 18, kind: input, shape index: {}]
  %s19 = inlined_call_operand.vmem [shape: f32[2,1,128], index: 19, kind: input, shape index: {}]
  %s20 = inlined_call_operand.vmem [shape: f32[2,1,128], index: 20, kind: input, shape index: {}]
  %s21 = inlined_call_operand.vmem [shape: f32[1,384], index: 21, kind: input, shape index: {}]
  %s22 = inlined_call_operand.hbm [shape: f32[16,384], index: 22, kind: output, shape index: {}]
  %s23 = sld [smem:[#allocation0]]
  $region118: #{bert_finetune_forward.1} parent=0
    _
  %s25 = ssub.s32 1, %s23
  %s26 = scalar_select 0, %s25, %s23
  $region1: #{bert_finetune_forward.1} parent=0
    #allocation2 [shape = 'u8[196608]{0}', space=vmem, size = 0x30000, scoped, tag = 'input window, operand 4, single buffered']
    #allocation3 [shape = 's32[1]{0}', space=sflag, size = 0x4, scoped, tag = 'scoped memory for bert_finetune_forward.1']
    #allocation4 [shape = 's32[1]{0}', space=sflag, size = 0x4, scoped, tag = 'scoped memory for bert_finetune_forward.1']
    #allocation5 [shape = 'u8[393216]{0}', space=vmem, size = 0x60000, scoped, tag = 'input window, operand 9, single buffered']
    #allocation6 [shape = 's32[1]{0}', space=sflag, size = 0x4, scoped, tag = 'scoped memory for bert_finetune_forward.1']
    #allocation7 [shape = 'u8[131072]{0}', space=vmem, size = 0x20000, scoped, tag = 'input window, operand 11, single buffered']
    #allocation8 [shape = 'u8[262144]{0}', space=vmem, size = 0x40000, scoped, tag = 'input window, operand 15, single buffered']
    #allocation9 [shape = 's32[1]{0}', space=sflag, size = 0x4, scoped, tag = 'scoped memory for bert_finetune_forward.1']
    #allocation10 [shape = 'u8[262144]{0}', space=vmem, size = 0x40000, scoped, tag = 'input window, operand 17, single buffered']
    #allocation11 [shape = 'u8[24576]{0}', space=vmem, size = 0x6000, scoped, tag = 'output window, operand 0, single buffered']
    %27 = vsyncpa [#allocation3], 0
    %28 = vsyncpa [#allocation6], 0
    %29 = vsyncpa [#allocation9], 0
    %30 = vsyncpa [#allocation4], 0
    // Predicated region
    $region2: #{bert_finetune_forward.1} parent=1 // pred_check
      _
    $region3: #{bert_finetune_forward.1} parent=1 // pred_check_branch
      %32 = sbr.rel (0) target = $region5
    $region4: #{bert_finetune_forward.1} parent=1 // pred_region
      _
    $region5: #{bert_finetune_forward.1} parent=1 // pred_fallthru
      _
    // Predicated region
    $region6: #{bert_finetune_forward.1} parent=1 // pred_check
      _
    $region7: #{bert_finetune_forward.1} parent=1 // pred_check_branch
      %34 = sbr.rel (0) target = $region9
    $region8: #{bert_finetune_forward.1} parent=1 // pred_region
      _
    $region9: #{bert_finetune_forward.1} parent=1 // pred_fallthru
      _
    // Predicated region
    $region10: #{bert_finetune_forward.1} parent=1 // pred_check
      _
    $region11: #{bert_finetune_forward.1} parent=1 // pred_check_branch
      %36 = sbr.rel (0) target = $region13
    $region12: #{bert_finetune_forward.1} parent=1 // pred_region
      _
    $region13: #{bert_finetune_forward.1} parent=1 // pred_fallthru
      _
    // Predicated region
    $region14: #{bert_finetune_forward.1} parent=1 // pred_check
      _
    $region15: #{bert_finetune_forward.1} parent=1 // pred_check_branch
      %38 = sbr.rel (0) target = $region17
    $region16: #{bert_finetune_forward.1} parent=1 // pred_region
      _
    $region17: #{bert_finetune_forward.1} parent=1 // pred_fallthru
      _
    // Predicated region
    $region18: #{bert_finetune_forward.1} parent=1 // pred_check
      _
    $region19: #{bert_finetune_forward.1} parent=1 // pred_check_branch
      %40 = sbr.rel (0) target = $region21
    $region20: #{bert_finetune_forward.1} parent=1 // pred_region
      %s42 = ssub.s32 6144, 6144
      %43 = vsyncadd [#allocation3], %s42
      %s44 = sshll.u32 [#allocation2], 4
      %s45 = int_to_ptr.vmem [resolvable:$true] %s44
      %50 = dma.hbm_to_vmem [thread:$0]  %s4, 6144, %s45, [#allocation3], 128, 128, 8
    $region21: #{bert_finetune_forward.1} parent=1 // pred_fallthru
      _
    // Predicated region
    $region22: #{bert_finetune_forward.1} parent=1 // pred_check
      _
    $region23: #{bert_finetune_forward.1} parent=1 // pred_check_branch
      %52 = sbr.rel (0) target = $region25
    $region24: #{bert_finetune_forward.1} parent=1 // pred_region
      _
    $region25: #{bert_finetune_forward.1} parent=1 // pred_fallthru
      _
    // Predicated region
    $region26: #{bert_finetune_forward.1} parent=1 // pred_check
      _
    $region27: #{bert_finetune_forward.1} parent=1 // pred_check_branch
      %54 = sbr.rel (0) target = $region29
    $region28: #{bert_finetune_forward.1} parent=1 // pred_region
      _
    $region29: #{bert_finetune_forward.1} parent=1 // pred_fallthru
      _
    // Predicated region
    $region30: #{bert_finetune_forward.1} parent=1 // pred_check
      _
    $region31: #{bert_finetune_forward.1} parent=1 // pred_check_branch
      %56 = sbr.rel (0) target = $region33
    $region32: #{bert_finetune_forward.1} parent=1 // pred_region
      _
    $region33: #{bert_finetune_forward.1} parent=1 // pred_fallthru
      _
    // Predicated region
    $region34: #{bert_finetune_forward.1} parent=1 // pred_check
      _
    $region35: #{bert_finetune_forward.1} parent=1 // pred_check_branch
      %58 = sbr.rel (0) target = $region37
    $region36: #{bert_finetune_forward.1} parent=1 // pred_region
      _
    $region37: #{bert_finetune_forward.1} parent=1 // pred_fallthru
      _
    // Predicated region
    $region38: #{bert_finetune_forward.1} parent=1 // pred_check
      _
    $region39: #{bert_finetune_forward.1} parent=1 // pred_check_branch
      %60 = sbr.rel (0) target = $region41
    $region40: #{bert_finetune_forward.1} parent=1 // pred_region
      %s62 = ssub.s32 12288, 12288
      %63 = vsyncadd [#allocation6], %s62
      %s64 = sshll.u32 [#allocation5], 4
      %s65 = int_to_ptr.vmem [resolvable:$true] %s64
      %70 = dma.hbm_to_vmem [thread:$0]  %s9, 12288, %s65, [#allocation6], 384, 384, 24
    $region41: #{bert_finetune_forward.1} parent=1 // pred_fallthru
      _
    // Predicated region
    $region42: #{bert_finetune_forward.1} parent=1 // pred_check
      _
    $region43: #{bert_finetune_forward.1} parent=1 // pred_check_branch
      %72 = sbr.rel (0) target = $region45
    $region44: #{bert_finetune_forward.1} parent=1 // pred_region
      _
    $region45: #{bert_finetune_forward.1} parent=1 // pred_fallthru
      _
    // Predicated region
    $region46: #{bert_finetune_forward.1} parent=1 // pred_check
      _
    $region47: #{bert_finetune_forward.1} parent=1 // pred_check_branch
      %74 = sbr.rel (0) target = $region49
    $region48: #{bert_finetune_forward.1} parent=1 // pred_region
      %s76 = ssub.s32 4096, 4096
      %77 = vsyncadd [#allocation6], %s76
      %s78 = sshll.u32 [#allocation7], 4
      %s79 = int_to_ptr.vmem [resolvable:$true] %s78
      %84 = dma.hbm_to_vmem [thread:$0]  %s11, 4096, %s79, [#allocation6], 128, 128, 8
    $region49: #{bert_finetune_forward.1} parent=1 // pred_fallthru
      _
    // Predicated region
    $region50: #{bert_finetune_forward.1} parent=1 // pred_check
      _
    $region51: #{bert_finetune_forward.1} parent=1 // pred_check_branch
      %86 = sbr.rel (0) target = $region53
    $region52: #{bert_finetune_forward.1} parent=1 // pred_region
      _
    $region53: #{bert_finetune_forward.1} parent=1 // pred_fallthru
      _
    // Predicated region
    $region54: #{bert_finetune_forward.1} parent=1 // pred_check
      _
    $region55: #{bert_finetune_forward.1} parent=1 // pred_check_branch
      %88 = sbr.rel (0) target = $region57
    $region56: #{bert_finetune_forward.1} parent=1 // pred_region
      _
    $region57: #{bert_finetune_forward.1} parent=1 // pred_fallthru
      _
    // Predicated region
    $region58: #{bert_finetune_forward.1} parent=1 // pred_check
      _
    $region59: #{bert_finetune_forward.1} parent=1 // pred_check_branch
      %90 = sbr.rel (0) target = $region61
    $region60: #{bert_finetune_forward.1} parent=1 // pred_region
      _
    $region61: #{bert_finetune_forward.1} parent=1 // pred_fallthru
      _
    // Predicated region
    $region62: #{bert_finetune_forward.1} parent=1 // pred_check
      _
    $region63: #{bert_finetune_forward.1} parent=1 // pred_check_branch
      %92 = sbr.rel (0) target = $region65
    $region64: #{bert_finetune_forward.1} parent=1 // pred_region
      %s94 = ssub.s32 8192, 8192
      %95 = vsyncadd [#allocation9], %s94
      %s96 = sshll.u32 [#allocation8], 4
      %s97 = int_to_ptr.vmem [resolvable:$true] %s96
      %102 = dma.hbm_to_vmem [thread:$0]  %s15, 8192, %s97, [#allocation9], 256, 256, 16
    $region65: #{bert_finetune_forward.1} parent=1 // pred_fallthru
      _
    // Predicated region
    $region66: #{bert_finetune_forward.1} parent=1 // pred_check
      _
    $region67: #{bert_finetune_forward.1} parent=1 // pred_check_branch
      %104 = sbr.rel (0) target = $region69
    $region68: #{bert_finetune_forward.1} parent=1 // pred_region
      _
    $region69: #{bert_finetune_forward.1} parent=1 // pred_fallthru
      _
    // Predicated region
    $region70: #{bert_finetune_forward.1} parent=1 // pred_check
      _
    $region71: #{bert_finetune_forward.1} parent=1 // pred_check_branch
      %106 = sbr.rel (0) target = $region73
    $region72: #{bert_finetune_forward.1} parent=1 // pred_region
      %s108 = ssub.s32 8192, 8192
      %109 = vsyncadd [#allocation9], %s108
      %s110 = sshll.u32 [#allocation10], 4
      %s111 = int_to_ptr.vmem [resolvable:$true] %s110
      %116 = dma.hbm_to_vmem [thread:$0]  %s17, 8192, %s111, [#allocation9], 128, 128, 8
    $region73: #{bert_finetune_forward.1} parent=1 // pred_fallthru
      _
    // Predicated region
    $region74: #{bert_finetune_forward.1} parent=1 // pred_check
      _
    $region75: #{bert_finetune_forward.1} parent=1 // pred_check_branch
      %118 = sbr.rel (0) target = $region77
    $region76: #{bert_finetune_forward.1} parent=1 // pred_region
      _
    $region77: #{bert_finetune_forward.1} parent=1 // pred_fallthru
      _
    // Predicated region
    $region78: #{bert_finetune_forward.1} parent=1 // pred_check
      _
    $region79: #{bert_finetune_forward.1} parent=1 // pred_check_branch
      %120 = sbr.rel (0) target = $region81
    $region80: #{bert_finetune_forward.1} parent=1 // pred_region
      _
    $region81: #{bert_finetune_forward.1} parent=1 // pred_fallthru
      _
    // Predicated region
    $region82: #{bert_finetune_forward.1} parent=1 // pred_check
      _
    $region83: #{bert_finetune_forward.1} parent=1 // pred_check_branch
      %122 = sbr.rel (0) target = $region85
    $region84: #{bert_finetune_forward.1} parent=1 // pred_region
      _
    $region85: #{bert_finetune_forward.1} parent=1 // pred_fallthru
      _
    // Predicated region
    $region86: #{bert_finetune_forward.1} parent=1 // pred_check
      _
    $region87: #{bert_finetune_forward.1} parent=1 // pred_check_branch
      %124 = sbr.rel (0) target = $region89
    $region88: #{bert_finetune_forward.1} parent=1 // pred_region
      _
    $region89: #{bert_finetune_forward.1} parent=1 // pred_fallthru
      _
    // Predicated region
    $region90: #{bert_finetune_forward.1} parent=1 // pred_check
      _
    $region91: #{bert_finetune_forward.1} parent=1 // pred_check_branch
      %126 = sbr.rel (0) target = $region93
    $region92: #{bert_finetune_forward.1} parent=1 // pred_region
      %127 = dma.done [#allocation3], 6144
    $region93: #{bert_finetune_forward.1} parent=1 // pred_fallthru
      _
    // Predicated region
    $region94: #{bert_finetune_forward.1} parent=1 // pred_check
      _
    $region95: #{bert_finetune_forward.1} parent=1 // pred_check_branch
      %129 = sbr.rel (0) target = $region97
    $region96: #{bert_finetune_forward.1} parent=1 // pred_region
      %130 = dma.done [#allocation6], 12288
    $region97: #{bert_finetune_forward.1} parent=1 // pred_fallthru
      _
    // Predicated region
    $region98: #{bert_finetune_forward.1} parent=1 // pred_check
      _
    $region99: #{bert_finetune_forward.1} parent=1 // pred_check_branch
      %132 = sbr.rel (0) target = $region101
    $region100: #{bert_finetune_forward.1} parent=1 // pred_region
      %133 = dma.done [#allocation6], 4096
    $region101: #{bert_finetune_forward.1} parent=1 // pred_fallthru
      _
    // Predicated region
    $region102: #{bert_finetune_forward.1} parent=1 // pred_check
      _
    $region103: #{bert_finetune_forward.1} parent=1 // pred_check_branch
      %135 = sbr.rel (0) target = $region105
    $region104: #{bert_finetune_forward.1} parent=1 // pred_region
      %136 = dma.done [#allocation9], 8192
    $region105: #{bert_finetune_forward.1} parent=1 // pred_fallthru
      _
    // Predicated region
    $region106: #{bert_finetune_forward.1} parent=1 // pred_check
      _
    $region107: #{bert_finetune_forward.1} parent=1 // pred_check_branch
      %138 = sbr.rel (0) target = $region109
    $region108: #{bert_finetune_forward.1} parent=1 // pred_region
      %139 = dma.done [#allocation9], 8192
    $region109: #{bert_finetune_forward.1} parent=1 // pred_fallthru
      _
    %v141 = vld [vmem:[#allocation2] sm:$0xff]
    %v142 = vld [vmem:[#allocation2 + $0x8] sm:$0xff]
    %v143 = vld [vmem:[#allocation2 + $0x10] sm:$0xff]
    %v144 = vld [vmem:[#allocation2 + $0x18] sm:$0xff]
    %v145 = vld [vmem:[#allocation2 + $0x20] sm:$0xff]
    %v146 = vld [vmem:[#allocation2 + $0x28] sm:$0xff]
    %v147 = vld [vmem:[#allocation2 + $0x30] sm:$0xff]
    %v148 = vld [vmem:[#allocation2 + $0x38] sm:$0xff]
    %v149 = vld [vmem:[#allocation2 + $0x40] sm:$0xff]
    %v150 = vld [vmem:[#allocation2 + $0x48] sm:$0xff]
    %v151 = vld [vmem:[#allocation2 + $0x50] sm:$0xff]
    %v152 = vld [vmem:[#allocation2 + $0x58] sm:$0xff]
    %v153 = vld [vmem:[#allocation2 + $0x60] sm:$0xff]
    %v154 = vld [vmem:[#allocation2 + $0x68] sm:$0xff]
    %v155 = vld [vmem:[#allocation2 + $0x70] sm:$0xff]
    %v156 = vld [vmem:[#allocation2 + $0x78] sm:$0xff]
    %v157 = vld [vmem:[#allocation2 + $0x80] sm:$0xff]
    %v158 = vld [vmem:[#allocation2 + $0x88] sm:$0xff]
    %v159 = vld [vmem:[#allocation2 + $0x90] sm:$0xff]
    %v160 = vld [vmem:[#allocation2 + $0x98] sm:$0xff]
    %v161 = vld [vmem:[#allocation2 + $0xa0] sm:$0xff]
    %v162 = vld [vmem:[#allocation2 + $0xa8] sm:$0xff]
    %v163 = vld [vmem:[#allocation2 + $0xb0] sm:$0xff]
    %v164 = vld [vmem:[#allocation2 + $0xb8] sm:$0xff]
    %v165 = vld [vmem:[#allocation2 + $0xc0] sm:$0xff]
    %v166 = vld [vmem:[#allocation2 + $0xc8] sm:$0xff]
    %v167 = vld [vmem:[#allocation2 + $0xd0] sm:$0xff]
    %v168 = vld [vmem:[#allocation2 + $0xd8] sm:$0xff]
    %v169 = vld [vmem:[#allocation2 + $0xe0] sm:$0xff]
    %v170 = vld [vmem:[#allocation2 + $0xe8] sm:$0xff]
    %v171 = vld [vmem:[#allocation2 + $0xf0] sm:$0xff]
    %v172 = vld [vmem:[#allocation2 + $0xf8] sm:$0xff]
    %v173 = vld [vmem:[#allocation2 + $0x100] sm:$0xff]
    %v174 = vld [vmem:[#allocation2 + $0x108] sm:$0xff]
    %v175 = vld [vmem:[#allocation2 + $0x110] sm:$0xff]
    %v176 = vld [vmem:[#allocation2 + $0x118] sm:$0xff]
    %v177 = vld [vmem:[#allocation2 + $0x120] sm:$0xff]
    %v178 = vld [vmem:[#allocation2 + $0x128] sm:$0xff]
    %v179 = vld [vmem:[#allocation2 + $0x130] sm:$0xff]
    %v180 = vld [vmem:[#allocation2 + $0x138] sm:$0xff]
    %v181 = vld [vmem:[#allocation2 + $0x140] sm:$0xff]
    %v182 = vld [vmem:[#allocation2 + $0x148] sm:$0xff]
    %v183 = vld [vmem:[#allocation2 + $0x150] sm:$0xff]
    %v184 = vld [vmem:[#allocation2 + $0x158] sm:$0xff]
    %v185 = vld [vmem:[#allocation2 + $0x160] sm:$0xff]
    %v186 = vld [vmem:[#allocation2 + $0x168] sm:$0xff]
    %v187 = vld [vmem:[#allocation2 + $0x170] sm:$0xff]
    %v188 = vld [vmem:[#allocation2 + $0x178] sm:$0xff]
    %v189 = vld [vmem:[%s0] sm:$0xff]
    %v190 = vld [vmem:[%s0 + $0x8] sm:$0xff]
    %v191 = vlaneseq
    %v192 = vand.u32 %v191, 127
    %v193 = vadd.s32 %v192, 128
    %v194 = vadd.s32 %v192, 256
    %195 = vset.pattern.permute.xlu0 0
    %196 = vperm.xlu0 %195, %v189
    %v197 = vpop.permute.xlu0 %196
    %198 = vset.pattern.permute.xlu0 0
    %199 = vperm.xlu0 %198, %v190
    %v200 = vpop.permute.xlu0 %199
    %vm201 = vcmp.eq.s32.totalorder %v192, %v197
    %vm202 = vcmp.eq.s32.totalorder %v193, %v197
    %vm203 = vcmp.eq.s32.totalorder %v194, %v197
    %vm204 = vcmp.eq.s32.totalorder %v192, %v200
    %vm205 = vcmp.eq.s32.totalorder %v193, %v200
    %vm206 = vcmp.eq.s32.totalorder %v194, %v200
    %v207 = vsel %vm201, 1, 0
    %v208 = vsel %vm202, 1, 0
    %v209 = vsel %vm203, 1, 0
    %v210 = vsel %vm204, 1, 0
    %v211 = vsel %vm205, 1, 0
    %v212 = vsel %vm206, 1, 0
    %v213 = vcvt.s32.f32 %v207
    %v214 = vcvt.s32.f32 %v208
    %v215 = vcvt.s32.f32 %v209
    %v216 = vcvt.s32.f32 %v210
    %v217 = vcvt.s32.f32 %v211
    %v218 = vcvt.s32.f32 %v212
    %v219 = vld [vmem:[%s1] sm:$0xff]
    %v220 = vld [vmem:[%s1 + $0x8] sm:$0xff]
    %221 = vset.pattern.permute.xlu0 0
    %222 = vperm.xlu0 %221, %v219
    %v223 = vpop.permute.xlu0 %222
    %224 = vset.pattern.permute.xlu0 0
    %225 = vperm.xlu0 %224, %v220
    %v226 = vpop.permute.xlu0 %225
    %vm227 = vcmp.eq.s32.totalorder %v192, %v223
    %vm228 = vcmp.eq.s32.totalorder %v192, %v226
    %v229 = vsel %vm227, 1, 0
    %v230 = vsel %vm228, 1, 0
    %v231 = vcvt.s32.f32 %v229
    %v232 = vcvt.s32.f32 %v230
    %v233 = vld [vmem:[%s5] sm:$0xff]
    %v234 = vld [vmem:[%s5 + $0x8] sm:$0xff]
    %vm235 = vcmask 130048
    %v237 = vsel %vm235, %v231, 0
    %v240 = vsel %vm235, %v232, 0
    %242 = vmatprep.subr.mxu0 0.0
    %243 = vmatpush1.msra.mxu0 %v233
    %244 = vmatprep.subr.mxu0 0.0
    %245 = vmatpush1.msra.mxu0 %v234
    %246 = vmatprep.subr.mxu0 0.0
    %247 = vmatpush1.msra.mxu0 0.0
    %248 = vmatprep.subr.mxu0 0.0
    %249 = vmatpush1.msra.mxu0 0.0
    %250 = vmatprep.subr.mxu0 0.0
    %251 = vmatpush1.msra.mxu0 0.0
    %252 = vmatprep.subr.mxu0 0.0
    %253 = vmatpush1.msra.mxu0 0.0
    %254 = vmatprep.subr.mxu0 0.0
    %255 = vmatpush1.msra.mxu0 0.0
    %256 = vmatprep.subr.mxu0 0.0
    %257 = vmatpush1.msra.mxu0 0.0
    %258 = vmatprep.subr.mxu0 0.0
    %259 = vmatpush1.msra.mxu0 0.0
    %260 = vmatprep.subr.mxu0 0.0
    %261 = vmatpush1.msra.mxu0 0.0
    %262 = vmatprep.subr.mxu0 0.0
    %263 = vmatpush1.msra.mxu0 0.0
    %264 = vmatprep.subr.mxu0 0.0
    %265 = vmatpush1.msra.mxu0 0.0
    %266 = vmatprep.subr.mxu0 0.0
    %267 = vmatpush1.msra.mxu0 0.0
    %268 = vmatprep.subr.mxu0 0.0
    %269 = vmatpush1.msra.mxu0 0.0
    %270 = vmatprep.subr.mxu0 0.0
    %271 = vmatpush1.msra.mxu0 0.0
    %272 = vmatprep.subr.mxu0 0.0
    %273 = vmatpush1.msra.mxu0 0.0
    %274 = vmatprep.subr.mxu0 0.0
    %275 = vmatpush1.msra.mxu0 0.0
    %276 = vmatprep.subr.mxu0 0.0
    %277 = vmatpush1.msra.mxu0 0.0
    %278 = vmatprep.subr.mxu0 0.0
    %279 = vmatpush1.msra.mxu0 0.0
    %280 = vmatprep.subr.mxu0 0.0
    %281 = vmatpush1.msra.mxu0 0.0
    %282 = vmatprep.subr.mxu0 0.0
    %283 = vmatpush1.msra.mxu0 0.0
    %284 = vmatprep.subr.mxu0 0.0
    %285 = vmatpush1.msra.mxu0 0.0
    %286 = vmatprep.subr.mxu0 0.0
    %287 = vmatpush1.msra.mxu0 0.0
    %288 = vmatprep.subr.mxu0 0.0
    %289 = vmatpush1.msra.mxu0 0.0
    %290 = vmatprep.subr.mxu0 0.0
    %291 = vmatpush1.msra.mxu0 0.0
    %292 = vmatprep.subr.mxu0 0.0
    %293 = vmatpush1.msra.mxu0 0.0
    %294 = vmatprep.subr.mxu0 0.0
    %295 = vmatpush1.msra.mxu0 0.0
    %296 = vmatprep.subr.mxu0 0.0
    %297 = vmatpush1.msra.mxu0 0.0
    %298 = vmatprep.subr.mxu0 0.0
    %299 = vmatpush1.msra.mxu0 0.0
    %300 = vmatprep.subr.mxu0 0.0
    %301 = vmatpush1.msra.mxu0 0.0
    %302 = vmatprep.subr.mxu0 0.0
    %303 = vmatpush1.msra.mxu0 0.0
    %304 = vmatprep.subr.mxu0 0.0
    %305 = vmatpush1.msra.mxu0 0.0
    %306 = vmatprep.mubr.f32.mxu0 0.0
    %307 = vmatmul.mubr.f32.gmra.mrb[0].mxu0 %v237
    %v308 = vpop.f32.mrb[0].mxu0
    %v309 = vadd.f32 0.0, %v308
    %v310 = vpop.f32.mrb[0].mxu0
    %311 = vmatprep.mubr.f32.mxu0 0.0
    %312 = vmatmul.mubr.f32.gmra.mrb[0].mxu0 %v240
    %v313 = vpop.f32.mrb[0].mxu0
    %v314 = vadd.f32 0.0, %v313
    %v315 = vpop.f32.mrb[0].mxu0
    %316 = vdwg.mxu0
    %v317 = vld [vmem:[%s2] sm:$0xff]
    %v318 = vld [vmem:[%s2 + $0x8] sm:$0xff]
    %vm319 = vcmp.eq.s32.totalorder %v317, 0
    %vm320 = vcmp.eq.s32.totalorder %v318, 0
    %v321 = vld [vmem:[%s6] sm:$0x1]
    %v322 = vld [vmem:[%s6 + $0x1] sm:$0x1]
    %v323 = vsel %vm319, 1, 0
    %v324 = vsel %vm320, 1, 0
    %325 = vset.pattern.permute.xlu0 0
    %326 = vperm.xlu0 %325, %v323
    %v327 = vpop.permute.xlu0 %326
    %328 = vset.pattern.permute.xlu0 0
    %329 = vperm.xlu0 %328, %v324
    %v330 = vpop.permute.xlu0 %329
    %vm331 = vcmp.eq.s32.totalorder %v327, 1
    %vm332 = vcmp.eq.s32.totalorder %v330, 1
    %v333 = vlaneseq
    %v334 = vshrl.u32 %v333, 7
    %v335 = vsub.s32 0, %v334
    %v336 = vrot.slane %v321, %v335
    %v337 = vlaneseq
    %v338 = vshrl.u32 %v337, 7
    %v339 = vsub.s32 0, %v338
    %v340 = vrot.slane %v322, %v339
    %v341 = vsel %vm331, %v336, %v340
    %v342 = vsel %vm332, %v336, %v340
    %343 = vmatprep.subr.mxu0 0.0
    %344 = vmatpush1.msra.mxu0 %v141
    %345 = vmatprep.subr.mxu0 0.0
    %346 = vmatpush1.msra.mxu0 %v142
    %347 = vmatprep.subr.mxu0 0.0
    %348 = vmatpush1.msra.mxu0 %v143
    %349 = vmatprep.subr.mxu0 0.0
    %350 = vmatpush1.msra.mxu0 %v144
    %351 = vmatprep.subr.mxu0 0.0
    %352 = vmatpush1.msra.mxu0 %v145
    %353 = vmatprep.subr.mxu0 0.0
    %354 = vmatpush1.msra.mxu0 %v146
    %355 = vmatprep.subr.mxu0 0.0
    %356 = vmatpush1.msra.mxu0 %v147
    %357 = vmatprep.subr.mxu0 0.0
    %358 = vmatpush1.msra.mxu0 %v148
    %359 = vmatprep.subr.mxu0 0.0
    %360 = vmatpush1.msra.mxu0 %v149
    %361 = vmatprep.subr.mxu0 0.0
    %362 = vmatpush1.msra.mxu0 %v150
    %363 = vmatprep.subr.mxu0 0.0
    %364 = vmatpush1.msra.mxu0 %v151
    %365 = vmatprep.subr.mxu0 0.0
    %366 = vmatpush1.msra.mxu0 %v152
    %367 = vmatprep.subr.mxu0 0.0
    %368 = vmatpush1.msra.mxu0 %v153
    %369 = vmatprep.subr.mxu0 0.0
    %370 = vmatpush1.msra.mxu0 %v154
    %371 = vmatprep.subr.mxu0 0.0
    %372 = vmatpush1.msra.mxu0 %v155
    %373 = vmatprep.subr.mxu0 0.0
    %374 = vmatpush1.msra.mxu0 %v156
    %375 = vmatprep.subr.mxu0 0.0
    %376 = vmatpush1.msra.mxu0 %v157
    %377 = vmatprep.subr.mxu0 0.0
    %378 = vmatpush1.msra.mxu0 %v158
    %379 = vmatprep.subr.mxu0 0.0
    %380 = vmatpush1.msra.mxu0 %v159
    %381 = vmatprep.subr.mxu0 0.0
    %382 = vmatpush1.msra.mxu0 %v160
    %383 = vmatprep.subr.mxu0 0.0
    %384 = vmatpush1.msra.mxu0 %v161
    %385 = vmatprep.subr.mxu0 0.0
    %386 = vmatpush1.msra.mxu0 %v162
    %387 = vmatprep.subr.mxu0 0.0
    %388 = vmatpush1.msra.mxu0 %v163
    %389 = vmatprep.subr.mxu0 0.0
    %390 = vmatpush1.msra.mxu0 %v164
    %391 = vmatprep.subr.mxu0 0.0
    %392 = vmatpush1.msra.mxu0 %v165
    %393 = vmatprep.subr.mxu0 0.0
    %394 = vmatpush1.msra.mxu0 %v166
    %395 = vmatprep.subr.mxu0 0.0
    %396 = vmatpush1.msra.mxu0 %v167
    %397 = vmatprep.subr.mxu0 0.0
    %398 = vmatpush1.msra.mxu0 %v168
    %399 = vmatprep.subr.mxu0 0.0
    %400 = vmatpush1.msra.mxu0 %v169
    %401 = vmatprep.subr.mxu0 0.0
    %402 = vmatpush1.msra.mxu0 %v170
    %403 = vmatprep.subr.mxu0 0.0
    %404 = vmatpush1.msra.mxu0 %v171
    %405 = vmatprep.subr.mxu0 0.0
    %406 = vmatpush1.msra.mxu0 %v172
    %407 = vmatprep.mubr.f32.mxu0 %v214
    %408 = vmatmul.mubr.f32.gmra.mrb[0].mxu0 %v213
    %v409 = vpop.f32.mrb[0].mxu0
    %v410 = vadd.f32 %v309, %v409
    %v411 = vpop.f32.mrb[0].mxu0
    %412 = vmatprep.mubr.f32.mxu0 %v217
    %413 = vmatmul.mubr.f32.gmra.mrb[0].mxu0 %v216
    %v414 = vpop.f32.mrb[0].mxu0
    %v415 = vadd.f32 %v314, %v414
    %v416 = vpop.f32.mrb[0].mxu0
    %417 = vdwg.mxu0
    %418 = vmatprep.subr.mxu0 0.0
    %419 = vmatpush1.msra.mxu0 %v173
    %420 = vmatprep.subr.mxu0 0.0
    %421 = vmatpush1.msra.mxu0 %v174
    %422 = vmatprep.subr.mxu0 0.0
    %423 = vmatpush1.msra.mxu0 %v175
    %424 = vmatprep.subr.mxu0 0.0
    %425 = vmatpush1.msra.mxu0 %v176
    %426 = vmatprep.subr.mxu0 0.0
    %427 = vmatpush1.msra.mxu0 %v177
    %428 = vmatprep.subr.mxu0 0.0
    %429 = vmatpush1.msra.mxu0 %v178
    %430 = vmatprep.subr.mxu0 0.0
    %431 = vmatpush1.msra.mxu0 %v179
    %432 = vmatprep.subr.mxu0 0.0
    %433 = vmatpush1.msra.mxu0 %v180
    %434 = vmatprep.subr.mxu0 0.0
    %435 = vmatpush1.msra.mxu0 %v181
    %436 = vmatprep.subr.mxu0 0.0
    %437 = vmatpush1.msra.mxu0 %v182
    %438 = vmatprep.subr.mxu0 0.0
    %439 = vmatpush1.msra.mxu0 %v183
    %440 = vmatprep.subr.mxu0 0.0
    %441 = vmatpush1.msra.mxu0 %v184
    %442 = vmatprep.subr.mxu0 0.0
    %443 = vmatpush1.msra.mxu0 %v185
    %444 = vmatprep.subr.mxu0 0.0
    %445 = vmatpush1.msra.mxu0 %v186
    %446 = vmatprep.subr.mxu0 0.0
    %447 = vmatpush1.msra.mxu0 %v187
    %448 = vmatprep.subr.mxu0 0.0
    %449 = vmatpush1.msra.mxu0 %v188
    %450 = vmatprep.subr.mxu0 0.0
    %451 = vmatpush1.msra.mxu0 0.0
    %452 = vmatprep.subr.mxu0 0.0
    %453 = vmatpush1.msra.mxu0 0.0
    %454 = vmatprep.subr.mxu0 0.0
    %455 = vmatpush1.msra.mxu0 0.0
    %456 = vmatprep.subr.mxu0 0.0
    %457 = vmatpush1.msra.mxu0 0.0
    %458 = vmatprep.subr.mxu0 0.0
    %459 = vmatpush1.msra.mxu0 0.0
    %460 = vmatprep.subr.mxu0 0.0
    %461 = vmatpush1.msra.mxu0 0.0
    %462 = vmatprep.subr.mxu0 0.0
    %463 = vmatpush1.msra.mxu0 0.0
    %464 = vmatprep.subr.mxu0 0.0
    %465 = vmatpush1.msra.mxu0 0.0
    %466 = vmatprep.subr.mxu0 0.0
    %467 = vmatpush1.msra.mxu0 0.0
    %468 = vmatprep.subr.mxu0 0.0
    %469 = vmatpush1.msra.mxu0 0.0
    %470 = vmatprep.subr.mxu0 0.0
    %471 = vmatpush1.msra.mxu0 0.0
    %472 = vmatprep.subr.mxu0 0.0
    %473 = vmatpush1.msra.mxu0 0.0
    %474 = vmatprep.subr.mxu0 0.0
    %475 = vmatpush1.msra.mxu0 0.0
    %476 = vmatprep.subr.mxu0 0.0
    %477 = vmatpush1.msra.mxu0 0.0
    %478 = vmatprep.subr.mxu0 0.0
    %479 = vmatpush1.msra.mxu0 0.0
    %480 = vmatprep.subr.mxu0 0.0
    %481 = vmatpush1.msra.mxu0 0.0
    %482 = vmatprep.mubr.f32.mxu0 0.0
    %483 = vmatmul.mubr.f32.gmra.mrb[0].mxu0 %v215
    %v484 = vpop.f32.mrb[0].mxu0
    %v485 = vadd.f32 %v410, %v484
    %v486 = vpop.f32.mrb[0].mxu0
    %487 = vmatprep.mubr.f32.mxu0 0.0
    %488 = vmatmul.mubr.f32.gmra.mrb[0].mxu0 %v218
    %v489 = vpop.f32.mrb[0].mxu0
    %v490 = vadd.f32 %v415, %v489
    %v491 = vpop.f32.mrb[0].mxu0
    %492 = vdwg.mxu0
    %v493 = vadd.f32 %v485, %v341
    %v494 = vadd.f32 %v490, %v342
    %v495 = vld [vmem:[%s7] sm:$0x1]
    %v496 = vld [vmem:[%s8] sm:$0x1]
    %497 = vadd.xlane.f32.xlu0 %v493
    %v498 = vpop.xlane.xlu0 %497
    %499 = vadd.xlane.f32.xlu0 %v494
    %v500 = vpop.xlane.xlu0 %499
    %v501 = vrcp.pop 128.0
    %v502 = vmul.f32 %v498, %v501
    %v503 = vmul.f32 %v500, %v501
    %v504 = vsub.f32 %v493, %v502
    %v505 = vsub.f32 %v494, %v503
    %v506 = vmul.f32 %v504, %v504
    %v507 = vmul.f32 %v505, %v505
    %508 = vadd.xlane.f32.xlu0 %v506
    %v509 = vpop.xlane.xlu0 %508
    %510 = vadd.xlane.f32.xlu0 %v507
    %v511 = vpop.xlane.xlu0 %510
    %v512 = vmul.f32 %v509, %v501
    %v513 = vmul.f32 %v511, %v501
    %v514 = vadd.f32 %v512, 1e-12
    %v515 = vadd.f32 %v513, 1e-12
    %v516 = vrsqrt.pop %v514
    %v517 = vrsqrt.pop %v515
    %v518 = vmul.f32 %v504, %v516
    %v519 = vmul.f32 %v505, %v517
    %v521 = vlaneseq
    %v522 = vshrl.u32 %v521, 7
    %v523 = vsub.s32 0, %v522
    %v524 = vrot.slane %v495, %v523
    %v526 = vmul.f32 %v518, %v524
    %v527 = vmul.f32 %v519, %v524
    %v529 = vlaneseq
    %v530 = vshrl.u32 %v529, 7
    %v531 = vsub.s32 0, %v530
    %v532 = vrot.slane %v496, %v531
    %v534 = vadd.f32 %v526, %v532
    %v535 = vadd.f32 %v527, %v532
    %v536 = vld [vmem:[%s3] sm:$0x3]
    %v537 = vld [vmem:[#allocation5] sm:$0xff]
    %v538 = vld [vmem:[#allocation5 + $0x8] sm:$0xff]
    %v539 = vld [vmem:[#allocation5 + $0x10] sm:$0xff]
    %v540 = vld [vmem:[#allocation5 + $0x18] sm:$0xff]
    %v541 = vld [vmem:[#allocation5 + $0x20] sm:$0xff]
    %v542 = vld [vmem:[#allocation5 + $0x28] sm:$0xff]
    %v543 = vld [vmem:[#allocation5 + $0x30] sm:$0xff]
    %v544 = vld [vmem:[#allocation5 + $0x38] sm:$0xff]
    %v545 = vld [vmem:[#allocation5 + $0x40] sm:$0xff]
    %v546 = vld [vmem:[#allocation5 + $0x48] sm:$0xff]
    %v547 = vld [vmem:[#allocation5 + $0x50] sm:$0xff]
    %v548 = vld [vmem:[#allocation5 + $0x58] sm:$0xff]
    %v549 = vld [vmem:[#allocation5 + $0x60] sm:$0xff]
    %v550 = vld [vmem:[#allocation5 + $0x68] sm:$0xff]
    %v551 = vld [vmem:[#allocation5 + $0x70] sm:$0xff]
    %v552 = vld [vmem:[#allocation5 + $0x78] sm:$0xff]
    %v553 = vld [vmem:[#allocation5 + $0x80] sm:$0xff]
    %v554 = vld [vmem:[#allocation5 + $0x88] sm:$0xff]
    %v555 = vld [vmem:[#allocation5 + $0x90] sm:$0xff]
    %v556 = vld [vmem:[#allocation5 + $0x98] sm:$0xff]
    %v557 = vld [vmem:[#allocation5 + $0xa0] sm:$0xff]
    %v558 = vld [vmem:[#allocation5 + $0xa8] sm:$0xff]
    %v559 = vld [vmem:[#allocation5 + $0xb0] sm:$0xff]
    %v560 = vld [vmem:[#allocation5 + $0xb8] sm:$0xff]
    %v561 = vld [vmem:[#allocation5 + $0xc0] sm:$0xff]
    %v562 = vld [vmem:[#allocation5 + $0xc8] sm:$0xff]
    %v563 = vld [vmem:[#allocation5 + $0xd0] sm:$0xff]
    %v564 = vld [vmem:[#allocation5 + $0xd8] sm:$0xff]
    %v565 = vld [vmem:[#allocation5 + $0xe0] sm:$0xff]
    %v566 = vld [vmem:[#allocation5 + $0xe8] sm:$0xff]
    %v567 = vld [vmem:[#allocation5 + $0xf0] sm:$0xff]
    %v568 = vld [vmem:[#allocation5 + $0xf8] sm:$0xff]
    %v569 = vld [vmem:[#allocation5 + $0x100] sm:$0xff]
    %v570 = vld [vmem:[#allocation5 + $0x108] sm:$0xff]
    %v571 = vld [vmem:[#allocation5 + $0x110] sm:$0xff]
    %v572 = vld [vmem:[#allocation5 + $0x118] sm:$0xff]
    %v573 = vld [vmem:[#allocation5 + $0x120] sm:$0xff]
    %v574 = vld [vmem:[#allocation5 + $0x128] sm:$0xff]
    %v575 = vld [vmem:[#allocation5 + $0x130] sm:$0xff]
    %v576 = vld [vmem:[#allocation5 + $0x138] sm:$0xff]
    %v577 = vld [vmem:[#allocation5 + $0x140] sm:$0xff]
    %v578 = vld [vmem:[#allocation5 + $0x148] sm:$0xff]
    %v579 = vld [vmem:[#allocation5 + $0x150] sm:$0xff]
    %v580 = vld [vmem:[#allocation5 + $0x158] sm:$0xff]
    %v581 = vld [vmem:[#allocation5 + $0x160] sm:$0xff]
    %v582 = vld [vmem:[#allocation5 + $0x168] sm:$0xff]
    %v583 = vld [vmem:[#allocation5 + $0x170] sm:$0xff]
    %v584 = vld [vmem:[#allocation5 + $0x178] sm:$0xff]
    %v585 = vpack.c.bf16 %v535, %v534
    %v586 = vpack.c.bf16 %v540, %v537
    %v587 = vpack.c.bf16 %v541, %v538
    %v588 = vpack.c.bf16 %v542, %v539
    %v589 = vpack.c.bf16 %v546, %v543
    %v590 = vpack.c.bf16 %v547, %v544
    %v591 = vpack.c.bf16 %v548, %v545
    %v592 = vpack.c.bf16 %v552, %v549
    %v593 = vpack.c.bf16 %v553, %v550
    %v594 = vpack.c.bf16 %v554, %v551
    %v595 = vpack.c.bf16 %v558, %v555
    %v596 = vpack.c.bf16 %v559, %v556
    %v597 = vpack.c.bf16 %v560, %v557
    %v598 = vpack.c.bf16 %v564, %v561
    %v599 = vpack.c.bf16 %v565, %v562
    %v600 = vpack.c.bf16 %v566, %v563
    %v601 = vpack.c.bf16 %v570, %v567
    %v602 = vpack.c.bf16 %v571, %v568
    %v603 = vpack.c.bf16 %v572, %v569
    %v604 = vpack.c.bf16 %v576, %v573
    %v605 = vpack.c.bf16 %v577, %v574
    %v606 = vpack.c.bf16 %v578, %v575
    %v607 = vpack.c.bf16 %v582, %v579
    %v608 = vpack.c.bf16 %v583, %v580
    %v609 = vpack.c.bf16 %v584, %v581
    %v610 = vld [vmem:[%s10] sm:$0x7]
    %v612 = vlaneseq
    %v613 = vshrl.u32 %v612, 7
    %v614 = vsub.s32 0, %v613
    %v615 = vrot.slane %v610, %v614
    %v616 = vlaneseq
    %v617 = vshrl.u32 %v616, 7
    %v618 = vsub.s32 1, %v617
    %v619 = vrot.slane %v610, %v618
    %v620 = vlaneseq
    %v621 = vshrl.u32 %v620, 7
    %v622 = vsub.s32 2, %v621
    %v623 = vrot.slane %v610, %v622
    %627 = vmatprep.subr.bf16.mxu0 %v587
    %628 = vmatpush1.bf16.msra.mxu0 %v586
    %629 = vmatprep.subr.bf16.mxu0 %v590
    %630 = vmatpush1.bf16.msra.mxu0 %v589
    %631 = vmatprep.subr.bf16.mxu0 %v593
    %632 = vmatpush1.bf16.msra.mxu0 %v592
    %633 = vmatprep.subr.bf16.mxu0 %v596
    %634 = vmatpush1.bf16.msra.mxu0 %v595
    %635 = vmatprep.subr.bf16.mxu0 %v599
    %636 = vmatpush1.bf16.msra.mxu0 %v598
    %637 = vmatprep.subr.bf16.mxu0 %v602
    %638 = vmatpush1.bf16.msra.mxu0 %v601
    %639 = vmatprep.subr.bf16.mxu0 %v605
    %640 = vmatpush1.bf16.msra.mxu0 %v604
    %641 = vmatprep.subr.bf16.mxu0 %v608
    %642 = vmatpush1.bf16.msra.mxu0 %v607
    %643 = vmatprep.subr.bf16.mxu0 0
    %644 = vmatpush1.bf16.msra.mxu0 0
    %645 = vmatprep.subr.bf16.mxu0 0
    %646 = vmatpush1.bf16.msra.mxu0 0
    %647 = vmatprep.subr.bf16.mxu0 0
    %648 = vmatpush1.bf16.msra.mxu0 0
    %649 = vmatprep.subr.bf16.mxu0 0
    %650 = vmatpush1.bf16.msra.mxu0 0
    %651 = vmatprep.subr.bf16.mxu0 0
    %652 = vmatpush1.bf16.msra.mxu0 0
    %653 = vmatprep.subr.bf16.mxu0 0
    %654 = vmatpush1.bf16.msra.mxu0 0
    %655 = vmatprep.subr.bf16.mxu0 0
    %656 = vmatpush1.bf16.msra.mxu0 0
    %657 = vmatprep.subr.bf16.mxu0 0
    %658 = vmatpush1.bf16.msra.mxu0 0
    %659 = vmatprep.mubr.bf16.mxu0 0
    %660 = vmatmul.mubr.bf16.gmra.mrb[0].mxu0 %v585
    %v661 = vpop.f32.mrb[0].mxu0
    %v662 = vadd.f32 %v615, %v661
    %v663 = vpop.f32.mrb[0].mxu0
    %v664 = vadd.f32 %v619, %v663
    %v665 = vpop.f32.mrb[0].mxu0
    %v666 = vadd.f32 %v615, %v665
    %v667 = vpop.f32.mrb[0].mxu0
    %v668 = vadd.f32 %v619, %v667
    %669 = vdwg.mxu0
    %670 = vmatprep.subr.bf16.mxu0 0
    %671 = vmatpush1.bf16.msra.mxu0 %v588
    %672 = vmatprep.subr.bf16.mxu0 0
    %673 = vmatpush1.bf16.msra.mxu0 %v591
    %674 = vmatprep.subr.bf16.mxu0 0
    %675 = vmatpush1.bf16.msra.mxu0 %v594
    %676 = vmatprep.subr.bf16.mxu0 0
    %677 = vmatpush1.bf16.msra.mxu0 %v597
    %678 = vmatprep.subr.bf16.mxu0 0
    %679 = vmatpush1.bf16.msra.mxu0 %v600
    %680 = vmatprep.subr.bf16.mxu0 0
    %681 = vmatpush1.bf16.msra.mxu0 %v603
    %682 = vmatprep.subr.bf16.mxu0 0
    %683 = vmatpush1.bf16.msra.mxu0 %v606
    %684 = vmatprep.subr.bf16.mxu0 0
    %685 = vmatpush1.bf16.msra.mxu0 %v609
    %686 = vmatprep.subr.bf16.mxu0 0
    %687 = vmatpush1.bf16.msra.mxu0 0
    %688 = vmatprep.subr.bf16.mxu0 0
    %689 = vmatpush1.bf16.msra.mxu0 0
    %690 = vmatprep.subr.bf16.mxu0 0
    %691 = vmatpush1.bf16.msra.mxu0 0
    %692 = vmatprep.subr.bf16.mxu0 0
    %693 = vmatpush1.bf16.msra.mxu0 0
    %694 = vmatprep.subr.bf16.mxu0 0
    %695 = vmatpush1.bf16.msra.mxu0 0
    %696 = vmatprep.subr.bf16.mxu0 0
    %697 = vmatpush1.bf16.msra.mxu0 0
    %698 = vmatprep.subr.bf16.mxu0 0
    %699 = vmatpush1.bf16.msra.mxu0 0
    %700 = vmatprep.subr.bf16.mxu0 0
    %701 = vmatpush1.bf16.msra.mxu0 0
    %702 = vmatprep.mubr.bf16.mxu0 0
    %703 = vmatmul.mubr.bf16.gmra.mrb[0].mxu0 %v585
    %v704 = vpop.f32.mrb[0].mxu0
    %v705 = vadd.f32 %v623, %v704
    %v706 = vpop.f32.mrb[0].mxu0
    %v707 = vpop.f32.mrb[0].mxu0
    %v708 = vadd.f32 %v623, %v707
    %v709 = vpop.f32.mrb[0].mxu0
    %710 = vdwg.mxu0
    %v711 = vpack.c.bf16 %v662, %v662
    %v712 = vpack.c.bf16 %v664, %v664
    %vm713 = vcmask 523264
    %v715 = vsel %vm713, %v711, 0
    %v718 = vsel %vm713, %v712, 0
    %720 = vmatprep.subr.bf16.mxu0 0
    %721 = vmatpush1.bf16.xpose.msra.mxu0 %v718
    %722 = vmatprep.subr.bf16.mxu0 0
    %723 = vmatpush1.bf16.xpose.msra.mxu0 0
    %724 = vmatprep.subr.bf16.mxu0 0
    %725 = vmatpush1.bf16.xpose.msra.mxu0 0
    %726 = vmatprep.subr.bf16.mxu0 0
    %727 = vmatpush1.bf16.xpose.msra.mxu0 0
    %728 = vmatprep.subr.bf16.mxu0 0
    %729 = vmatpush1.bf16.xpose.msra.mxu0 0
    %730 = vmatprep.subr.bf16.mxu0 0
    %731 = vmatpush1.bf16.xpose.msra.mxu0 0
    %732 = vmatprep.subr.bf16.mxu0 0
    %733 = vmatpush1.bf16.xpose.msra.mxu0 0
    %734 = vmatprep.subr.bf16.mxu0 0
    %735 = vmatpush1.bf16.xpose.msra.mxu0 0
    %736 = vmatprep.subr.bf16.mxu0 0
    %737 = vmatpush1.bf16.xpose.msra.mxu0 0
    %738 = vmatprep.subr.bf16.mxu0 0
    %739 = vmatpush1.bf16.xpose.msra.mxu0 0
    %740 = vmatprep.subr.bf16.mxu0 0
    %741 = vmatpush1.bf16.xpose.msra.mxu0 0
    %742 = vmatprep.subr.bf16.mxu0 0
    %743 = vmatpush1.bf16.xpose.msra.mxu0 0
    %744 = vmatprep.subr.bf16.mxu0 0
    %745 = vmatpush1.bf16.xpose.msra.mxu0 0
    %746 = vmatprep.subr.bf16.mxu0 0
    %747 = vmatpush1.bf16.xpose.msra.mxu0 0
    %748 = vmatprep.subr.bf16.mxu0 0
    %749 = vmatpush1.bf16.xpose.msra.mxu0 0
    %750 = vmatprep.subr.bf16.mxu0 0
    %751 = vmatpush1.bf16.xpose.msra.mxu0 0
    %752 = vmatprep.mubr.bf16.mxu0 0
    %753 = vmatmul.mubr.bf16.gmra.mrb[0].mxu0 %v715
    %v754 = vpop.f32.mrb[0].mxu0
    %v755 = vadd.f32 0.0, %v754
    %v756 = vpop.f32.mrb[0].mxu0
    %v757 = vpop.f32.mrb[0].mxu0
    %v758 = vpop.f32.mrb[0].mxu0
    %759 = vdwg.mxu0
    %v760 = vmul.f32 %v755, 0.125
    %v761 = vlaneseq
    %v762 = vshrl.u32 %v761, 7
    %v763 = vsub.s32 0, %v762
    %v764 = vrot.slane %v536, %v763
    %v765 = vadd.f32 %v760, %v764
    %vm766 = vcmask 64512
    %v767 = vsel %vm766, %v765, -inf
    %768 = vmax.xlane.f32.xlu0 %v767
    %v769 = vpop.xlane.xlu0 %768
    %v770 = vsub.f32 %v765, %v769
    %v771 = vmul.f32 %v770, 1.442695
    %v772 = vpow.pop %v771
    %v773 = vsel %vm766, %v772, 0.0
    %774 = vadd.xlane.f32.xlu0 %v773
    %v775 = vpop.xlane.xlu0 %774
    %v776 = vrcp.pop %v775
    %v777 = vmul.f32 %v772, %v776
    %v778 = vpack.c.bf16 %v777, %v777
    %v779 = vpack.c.bf16 %v705, %v705
    %v781 = vsel %vm766, %v778, 0
    %vm783 = vcmask 1043456
    %v785 = vsel %vm783, %v779, 0
    %787 = vmatprep.subr.bf16.mxu0 0
    %788 = vmatpush1.bf16.msra.mxu0 %v785
    %789 = vmatprep.subr.bf16.mxu0 0
    %790 = vmatpush1.bf16.msra.mxu0 0
    %791 = vmatprep.subr.bf16.mxu0 0
    %792 = vmatpush1.bf16.msra.mxu0 0
    %793 = vmatprep.subr.bf16.mxu0 0
    %794 = vmatpush1.bf16.msra.mxu0 0
    %795 = vmatprep.subr.bf16.mxu0 0
    %796 = vmatpush1.bf16.msra.mxu0 0
    %797 = vmatprep.subr.bf16.mxu0 0
    %798 = vmatpush1.bf16.msra.mxu0 0
    %799 = vmatprep.subr.bf16.mxu0 0
    %800 = vmatpush1.bf16.msra.mxu0 0
    %801 = vmatprep.subr.bf16.mxu0 0
    %802 = vmatpush1.bf16.msra.mxu0 0
    %803 = vmatprep.subr.bf16.mxu0 0
    %804 = vmatpush1.bf16.msra.mxu0 0
    %805 = vmatprep.subr.bf16.mxu0 0
    %806 = vmatpush1.bf16.msra.mxu0 0
    %807 = vmatprep.subr.bf16.mxu0 0
    %808 = vmatpush1.bf16.msra.mxu0 0
    %809 = vmatprep.subr.bf16.mxu0 0
    %810 = vmatpush1.bf16.msra.mxu0 0
    %811 = vmatprep.subr.bf16.mxu0 0
    %812 = vmatpush1.bf16.msra.mxu0 0
    %813 = vmatprep.subr.bf16.mxu0 0
    %814 = vmatpush1.bf16.msra.mxu0 0
    %815 = vmatprep.subr.bf16.mxu0 0
    %816 = vmatpush1.bf16.msra.mxu0 0
    %817 = vmatprep.subr.bf16.mxu0 0
    %818 = vmatpush1.bf16.msra.mxu0 0
    %819 = vmatprep.mubr.bf16.mxu0 0
    %820 = vmatmul.mubr.bf16.gmra.mrb[0].mxu0 %v781
    %v821 = vpop.f32.mrb[0].mxu0
    %v822 = vadd.f32 0.0, %v821
    %v823 = vpop.f32.mrb[0].mxu0
    %v824 = vpop.f32.mrb[0].mxu0
    %v825 = vpop.f32.mrb[0].mxu0
    %826 = vdwg.mxu0
    %828 = vrot.lane.b32.xlu0 %v711, 64
    %v829 = vpop.permute.xlu0 %828
    %831 = vrot.lane.b32.xlu0 %v712, 64
    %v832 = vpop.permute.xlu0 %831
    %v834 = vsel %vm713, %v829, 0
    %v837 = vsel %vm713, %v832, 0
    %839 = vmatprep.subr.bf16.mxu0 0
    %840 = vmatpush1.bf16.xpose.msra.mxu0 %v837
    %841 = vmatprep.subr.bf16.mxu0 0
    %842 = vmatpush1.bf16.xpose.msra.mxu0 0
    %843 = vmatprep.subr.bf16.mxu0 0
    %844 = vmatpush1.bf16.xpose.msra.mxu0 0
    %845 = vmatprep.subr.bf16.mxu0 0
    %846 = vmatpush1.bf16.xpose.msra.mxu0 0
    %847 = vmatprep.subr.bf16.mxu0 0
    %848 = vmatpush1.bf16.xpose.msra.mxu0 0
    %849 = vmatprep.subr.bf16.mxu0 0
    %850 = vmatpush1.bf16.xpose.msra.mxu0 0
    %851 = vmatprep.subr.bf16.mxu0 0
    %852 = vmatpush1.bf16.xpose.msra.mxu0 0
    %853 = vmatprep.subr.bf16.mxu0 0
    %854 = vmatpush1.bf16.xpose.msra.mxu0 0
    %855 = vmatprep.subr.bf16.mxu0 0
    %856 = vmatpush1.bf16.xpose.msra.mxu0 0
    %857 = vmatprep.subr.bf16.mxu0 0
    %858 = vmatpush1.bf16.xpose.msra.mxu0 0
    %859 = vmatprep.subr.bf16.mxu0 0
    %860 = vmatpush1.bf16.xpose.msra.mxu0 0
    %861 = vmatprep.subr.bf16.mxu0 0
    %862 = vmatpush1.bf16.xpose.msra.mxu0 0
    %863 = vmatprep.subr.bf16.mxu0 0
    %864 = vmatpush1.bf16.xpose.msra.mxu0 0
    %865 = vmatprep.subr.bf16.mxu0 0
    %866 = vmatpush1.bf16.xpose.msra.mxu0 0
    %867 = vmatprep.subr.bf16.mxu0 0
    %868 = vmatpush1.bf16.xpose.msra.mxu0 0
    %869 = vmatprep.subr.bf16.mxu0 0
    %870 = vmatpush1.bf16.xpose.msra.mxu0 0
    %871 = vmatprep.mubr.bf16.mxu0 0
    %872 = vmatmul.mubr.bf16.gmra.mrb[0].mxu0 %v834
    %v873 = vpop.f32.mrb[0].mxu0
    %v874 = vadd.f32 0.0, %v873
    %v875 = vpop.f32.mrb[0].mxu0
    %v876 = vpop.f32.mrb[0].mxu0
    %v877 = vpop.f32.mrb[0].mxu0
    %878 = vdwg.mxu0
    %v879 = vmul.f32 %v874, 0.125
    %v880 = vadd.f32 %v879, %v764
    %v881 = vsel %vm766, %v880, -inf
    %882 = vmax.xlane.f32.xlu0 %v881
    %v883 = vpop.xlane.xlu0 %882
    %v884 = vsub.f32 %v880, %v883
    %v885 = vmul.f32 %v884, 1.442695
    %v886 = vpow.pop %v885
    %v887 = vsel %vm766, %v886, 0.0
    %888 = vadd.xlane.f32.xlu0 %v887
    %v889 = vpop.xlane.xlu0 %888
    %v890 = vrcp.pop %v889
    %v891 = vmul.f32 %v886, %v890
    %v892 = vpack.c.bf16 %v891, %v891
    %894 = vrot.lane.b32.xlu0 %v779, 64
    %v895 = vpop.permute.xlu0 %894
    %v897 = vsel %vm766, %v892, 0
    %v900 = vsel %vm783, %v895, 0
    %902 = vmatprep.subr.bf16.mxu0 0
    %903 = vmatpush1.bf16.msra.mxu0 %v900
    %904 = vmatprep.subr.bf16.mxu0 0
    %905 = vmatpush1.bf16.msra.mxu0 0
    %906 = vmatprep.subr.bf16.mxu0 0
    %907 = vmatpush1.bf16.msra.mxu0 0
    %908 = vmatprep.subr.bf16.mxu0 0
    %909 = vmatpush1.bf16.msra.mxu0 0
    %910 = vmatprep.subr.bf16.mxu0 0
    %911 = vmatpush1.bf16.msra.mxu0 0
    %912 = vmatprep.subr.bf16.mxu0 0
    %913 = vmatpush1.bf16.msra.mxu0 0
    %914 = vmatprep.subr.bf16.mxu0 0
    %915 = vmatpush1.bf16.msra.mxu0 0
    %916 = vmatprep.subr.bf16.mxu0 0
    %917 = vmatpush1.bf16.msra.mxu0 0
    %918 = vmatprep.subr.bf16.mxu0 0
    %919 = vmatpush1.bf16.msra.mxu0 0
    %920 = vmatprep.subr.bf16.mxu0 0
    %921 = vmatpush1.bf16.msra.mxu0 0
    %922 = vmatprep.subr.bf16.mxu0 0
    %923 = vmatpush1.bf16.msra.mxu0 0
    %924 = vmatprep.subr.bf16.mxu0 0
    %925 = vmatpush1.bf16.msra.mxu0 0
    %926 = vmatprep.subr.bf16.mxu0 0
    %927 = vmatpush1.bf16.msra.mxu0 0
    %928 = vmatprep.subr.bf16.mxu0 0
    %929 = vmatpush1.bf16.msra.mxu0 0
    %930 = vmatprep.subr.bf16.mxu0 0
    %931 = vmatpush1.bf16.msra.mxu0 0
    %932 = vmatprep.subr.bf16.mxu0 0
    %933 = vmatpush1.bf16.msra.mxu0 0
    %934 = vmatprep.mubr.bf16.mxu0 0
    %935 = vmatmul.mubr.bf16.gmra.mrb[0].mxu0 %v897
    %v936 = vpop.f32.mrb[0].mxu0
    %v937 = vadd.f32 0.0, %v936
    %v938 = vpop.f32.mrb[0].mxu0
    %v939 = vpop.f32.mrb[0].mxu0
    %v940 = vpop.f32.mrb[0].mxu0
    %941 = vdwg.mxu0
    %943 = vrot.lane.b32.xlu0 %v937, 64
    %v944 = vpop.permute.xlu0 %943
    %v946 = vsel %vm713, %v822, %v944
    %v947 = vpack.c.bf16 %v666, %v666
    %v948 = vpack.c.bf16 %v668, %v668
    %v950 = vsel %vm713, %v947, 0
    %v953 = vsel %vm713, %v948, 0
    %955 = vmatprep.subr.bf16.mxu0 0
    %956 = vmatpush1.bf16.xpose.msra.mxu0 %v953
    %957 = vmatprep.subr.bf16.mxu0 0
    %958 = vmatpush1.bf16.xpose.msra.mxu0 0
    %959 = vmatprep.subr.bf16.mxu0 0
    %960 = vmatpush1.bf16.xpose.msra.mxu0 0
    %961 = vmatprep.subr.bf16.mxu0 0
    %962 = vmatpush1.bf16.xpose.msra.mxu0 0
    %963 = vmatprep.subr.bf16.mxu0 0
    %964 = vmatpush1.bf16.xpose.msra.mxu0 0
    %965 = vmatprep.subr.bf16.mxu0 0
    %966 = vmatpush1.bf16.xpose.msra.mxu0 0
    %967 = vmatprep.subr.bf16.mxu0 0
    %968 = vmatpush1.bf16.xpose.msra.mxu0 0
    %969 = vmatprep.subr.bf16.mxu0 0
    %970 = vmatpush1.bf16.xpose.msra.mxu0 0
    %971 = vmatprep.subr.bf16.mxu0 0
    %972 = vmatpush1.bf16.xpose.msra.mxu0 0
    %973 = vmatprep.subr.bf16.mxu0 0
    %974 = vmatpush1.bf16.xpose.msra.mxu0 0
    %975 = vmatprep.subr.bf16.mxu0 0
    %976 = vmatpush1.bf16.xpose.msra.mxu0 0
    %977 = vmatprep.subr.bf16.mxu0 0
    %978 = vmatpush1.bf16.xpose.msra.mxu0 0
    %979 = vmatprep.subr.bf16.mxu0 0
    %980 = vmatpush1.bf16.xpose.msra.mxu0 0
    %981 = vmatprep.subr.bf16.mxu0 0
    %982 = vmatpush1.bf16.xpose.msra.mxu0 0
    %983 = vmatprep.subr.bf16.mxu0 0
    %984 = vmatpush1.bf16.xpose.msra.mxu0 0
    %985 = vmatprep.subr.bf16.mxu0 0
    %986 = vmatpush1.bf16.xpose.msra.mxu0 0
    %987 = vmatprep.mubr.bf16.mxu0 0
    %988 = vmatmul.mubr.bf16.gmra.mrb[0].mxu0 %v950
    %v989 = vpop.f32.mrb[0].mxu0
    %v990 = vadd.f32 0.0, %v989
    %v991 = vpop.f32.mrb[0].mxu0
    %v992 = vpop.f32.mrb[0].mxu0
    %v993 = vpop.f32.mrb[0].mxu0
    %994 = vdwg.mxu0
    %v995 = vmul.f32 %v990, 0.125
    %v996 = vlaneseq
    %v997 = vshrl.u32 %v996, 7
    %v998 = vsub.s32 1, %v997
    %v999 = vrot.slane %v536, %v998
    %v1000 = vadd.f32 %v995, %v999
    %v1001 = vsel %vm766, %v1000, -inf
    %1002 = vmax.xlane.f32.xlu0 %v1001
    %v1003 = vpop.xlane.xlu0 %1002
    %v1004 = vsub.f32 %v1000, %v1003
    %v1005 = vmul.f32 %v1004, 1.442695
    %v1006 = vpow.pop %v1005
    %v1007 = vsel %vm766, %v1006, 0.0
    %1008 = vadd.xlane.f32.xlu0 %v1007
    %v1009 = vpop.xlane.xlu0 %1008
    %v1010 = vrcp.pop %v1009
    %v1011 = vmul.f32 %v1006, %v1010
    %v1012 = vpack.c.bf16 %v1011, %v1011
    %v1013 = vpack.c.bf16 %v708, %v708
    %v1015 = vsel %vm766, %v1012, 0
    %v1018 = vsel %vm783, %v1013, 0
    %1020 = vmatprep.subr.bf16.mxu0 0
    %1021 = vmatpush1.bf16.msra.mxu0 %v1018
    %1022 = vmatprep.subr.bf16.mxu0 0
    %1023 = vmatpush1.bf16.msra.mxu0 0
    %1024 = vmatprep.subr.bf16.mxu0 0
    %1025 = vmatpush1.bf16.msra.mxu0 0
    %1026 = vmatprep.subr.bf16.mxu0 0
    %1027 = vmatpush1.bf16.msra.mxu0 0
    %1028 = vmatprep.subr.bf16.mxu0 0
    %1029 = vmatpush1.bf16.msra.mxu0 0
    %1030 = vmatprep.subr.bf16.mxu0 0
    %1031 = vmatpush1.bf16.msra.mxu0 0
    %1032 = vmatprep.subr.bf16.mxu0 0
    %1033 = vmatpush1.bf16.msra.mxu0 0
    %1034 = vmatprep.subr.bf16.mxu0 0
    %1035 = vmatpush1.bf16.msra.mxu0 0
    %1036 = vmatprep.subr.bf16.mxu0 0
    %1037 = vmatpush1.bf16.msra.mxu0 0
    %1038 = vmatprep.subr.bf16.mxu0 0
    %1039 = vmatpush1.bf16.msra.mxu0 0
    %1040 = vmatprep.subr.bf16.mxu0 0
    %1041 = vmatpush1.bf16.msra.mxu0 0
    %1042 = vmatprep.subr.bf16.mxu0 0
    %1043 = vmatpush1.bf16.msra.mxu0 0
    %1044 = vmatprep.subr.bf16.mxu0 0
    %1045 = vmatpush1.bf16.msra.mxu0 0
    %1046 = vmatprep.subr.bf16.mxu0 0
    %1047 = vmatpush1.bf16.msra.mxu0 0
    %1048 = vmatprep.subr.bf16.mxu0 0
    %1049 = vmatpush1.bf16.msra.mxu0 0
    %1050 = vmatprep.subr.bf16.mxu0 0
    %1051 = vmatpush1.bf16.msra.mxu0 0
    %1052 = vmatprep.mubr.bf16.mxu0 0
    %1053 = vmatmul.mubr.bf16.gmra.mrb[0].mxu0 %v1015
    %v1054 = vpop.f32.mrb[0].mxu0
    %v1055 = vadd.f32 0.0, %v1054
    %v1056 = vpop.f32.mrb[0].mxu0
    %v1057 = vpop.f32.mrb[0].mxu0
    %v1058 = vpop.f32.mrb[0].mxu0
    %1059 = vdwg.mxu0
    %1061 = vrot.lane.b32.xlu0 %v947, 64
    %v1062 = vpop.permute.xlu0 %1061
    %1064 = vrot.lane.b32.xlu0 %v948, 64
    %v1065 = vpop.permute.xlu0 %1064
    %v1067 = vsel %vm713, %v1062, 0
    %v1070 = vsel %vm713, %v1065, 0
    %1072 = vmatprep.subr.bf16.mxu0 0
    %1073 = vmatpush1.bf16.xpose.msra.mxu0 %v1070
    %1074 = vmatprep.subr.bf16.mxu0 0
    %1075 = vmatpush1.bf16.xpose.msra.mxu0 0
    %1076 = vmatprep.subr.bf16.mxu0 0
    %1077 = vmatpush1.bf16.xpose.msra.mxu0 0
    %1078 = vmatprep.subr.bf16.mxu0 0
    %1079 = vmatpush1.bf16.xpose.msra.mxu0 0
    %1080 = vmatprep.subr.bf16.mxu0 0
    %1081 = vmatpush1.bf16.xpose.msra.mxu0 0
    %1082 = vmatprep.subr.bf16.mxu0 0
    %1083 = vmatpush1.bf16.xpose.msra.mxu0 0
    %1084 = vmatprep.subr.bf16.mxu0 0
    %1085 = vmatpush1.bf16.xpose.msra.mxu0 0
    %1086 = vmatprep.subr.bf16.mxu0 0
    %1087 = vmatpush1.bf16.xpose.msra.mxu0 0
    %1088 = vmatprep.subr.bf16.mxu0 0
    %1089 = vmatpush1.bf16.xpose.msra.mxu0 0
    %1090 = vmatprep.subr.bf16.mxu0 0
    %1091 = vmatpush1.bf16.xpose.msra.mxu0 0
    %1092 = vmatprep.subr.bf16.mxu0 0
    %1093 = vmatpush1.bf16.xpose.msra.mxu0 0
    %1094 = vmatprep.subr.bf16.mxu0 0
    %1095 = vmatpush1.bf16.xpose.msra.mxu0 0
    %1096 = vmatprep.subr.bf16.mxu0 0
    %1097 = vmatpush1.bf16.xpose.msra.mxu0 0
    %1098 = vmatprep.subr.bf16.mxu0 0
    %1099 = vmatpush1.bf16.xpose.msra.mxu0 0
    %1100 = vmatprep.subr.bf16.mxu0 0
    %1101 = vmatpush1.bf16.xpose.msra.mxu0 0
    %1102 = vmatprep.subr.bf16.mxu0 0
    %1103 = vmatpush1.bf16.xpose.msra.mxu0 0
    %1104 = vmatprep.mubr.bf16.mxu0 0
    %1105 = vmatmul.mubr.bf16.gmra.mrb[0].mxu0 %v1067
    %v1106 = vpop.f32.mrb[0].mxu0
    %v1107 = vadd.f32 0.0, %v1106
    %v1108 = vpop.f32.mrb[0].mxu0
    %v1109 = vpop.f32.mrb[0].mxu0
    %v1110 = vpop.f32.mrb[0].mxu0
    %1111 = vdwg.mxu0
    %v1112 = vmul.f32 %v1107, 0.125
    %v1113 = vadd.f32 %v1112, %v999
    %v1114 = vsel %vm766, %v1113, -inf
    %1115 = vmax.xlane.f32.xlu0 %v1114
    %v1116 = vpop.xlane.xlu0 %1115
    %v1117 = vsub.f32 %v1113, %v1116
    %v1118 = vmul.f32 %v1117, 1.442695
    %v1119 = vpow.pop %v1118
    %v1120 = vsel %vm766, %v1119, 0.0
    %1121 = vadd.xlane.f32.xlu0 %v1120
    %v1122 = vpop.xlane.xlu0 %1121
    %v1123 = vrcp.pop %v1122
    %v1124 = vmul.f32 %v1119, %v1123
    %v1125 = vpack.c.bf16 %v1124, %v1124
    %1127 = vrot.lane.b32.xlu0 %v1013, 64
    %v1128 = vpop.permute.xlu0 %1127
    %v1130 = vsel %vm766, %v1125, 0
    %v1133 = vsel %vm783, %v1128, 0
    %1135 = vmatprep.subr.bf16.mxu0 0
    %1136 = vmatpush1.bf16.msra.mxu0 %v1133
    %1137 = vmatprep.subr.bf16.mxu0 0
    %1138 = vmatpush1.bf16.msra.mxu0 0
    %1139 = vmatprep.subr.bf16.mxu0 0
    %1140 = vmatpush1.bf16.msra.mxu0 0
    %1141 = vmatprep.subr.bf16.mxu0 0
    %1142 = vmatpush1.bf16.msra.mxu0 0
    %1143 = vmatprep.subr.bf16.mxu0 0
    %1144 = vmatpush1.bf16.msra.mxu0 0
    %1145 = vmatprep.subr.bf16.mxu0 0
    %1146 = vmatpush1.bf16.msra.mxu0 0
    %1147 = vmatprep.subr.bf16.mxu0 0
    %1148 = vmatpush1.bf16.msra.mxu0 0
    %1149 = vmatprep.subr.bf16.mxu0 0
    %1150 = vmatpush1.bf16.msra.mxu0 0
    %1151 = vmatprep.subr.bf16.mxu0 0
    %1152 = vmatpush1.bf16.msra.mxu0 0
    %1153 = vmatprep.subr.bf16.mxu0 0
    %1154 = vmatpush1.bf16.msra.mxu0 0
    %1155 = vmatprep.subr.bf16.mxu0 0
    %1156 = vmatpush1.bf16.msra.mxu0 0
    %1157 = vmatprep.subr.bf16.mxu0 0
    %1158 = vmatpush1.bf16.msra.mxu0 0
    %1159 = vmatprep.subr.bf16.mxu0 0
    %1160 = vmatpush1.bf16.msra.mxu0 0
    %1161 = vmatprep.subr.bf16.mxu0 0
    %1162 = vmatpush1.bf16.msra.mxu0 0
    %1163 = vmatprep.subr.bf16.mxu0 0
    %1164 = vmatpush1.bf16.msra.mxu0 0
    %1165 = vmatprep.subr.bf16.mxu0 0
    %1166 = vmatpush1.bf16.msra.mxu0 0
    %1167 = vmatprep.mubr.bf16.mxu0 0
    %1168 = vmatmul.mubr.bf16.gmra.mrb[0].mxu0 %v1130
    %v1169 = vpop.f32.mrb[0].mxu0
    %v1170 = vadd.f32 0.0, %v1169
    %v1171 = vpop.f32.mrb[0].mxu0
    %v1172 = vpop.f32.mrb[0].mxu0
    %v1173 = vpop.f32.mrb[0].mxu0
    %1174 = vdwg.mxu0
    %1176 = vrot.lane.b32.xlu0 %v1170, 64
    %v1177 = vpop.permute.xlu0 %1176
    %v1179 = vsel %vm713, %v1055, %v1177
    %v1180 = vld [vmem:[#allocation7] sm:$0xff]
    %v1181 = vld [vmem:[#allocation7 + $0x8] sm:$0xff]
    %v1182 = vld [vmem:[#allocation7 + $0x10] sm:$0xff]
    %v1183 = vld [vmem:[#allocation7 + $0x18] sm:$0xff]
    %v1184 = vld [vmem:[#allocation7 + $0x20] sm:$0xff]
    %v1185 = vld [vmem:[#allocation7 + $0x28] sm:$0xff]
    %v1186 = vld [vmem:[#allocation7 + $0x30] sm:$0xff]
    %v1187 = vld [vmem:[#allocation7 + $0x38] sm:$0xff]
    %v1188 = vld [vmem:[#allocation7 + $0x40] sm:$0xff]
    %v1189 = vld [vmem:[#allocation7 + $0x48] sm:$0xff]
    %v1190 = vld [vmem:[#allocation7 + $0x50] sm:$0xff]
    %v1191 = vld [vmem:[#allocation7 + $0x58] sm:$0xff]
    %v1192 = vld [vmem:[#allocation7 + $0x60] sm:$0xff]
    %v1193 = vld [vmem:[#allocation7 + $0x68] sm:$0xff]
    %v1194 = vld [vmem:[#allocation7 + $0x70] sm:$0xff]
    %v1195 = vld [vmem:[#allocation7 + $0x78] sm:$0xff]
    %v1196 = vpack.c.bf16 %v1179, %v946
    %v1197 = vpack.c.bf16 %v1181, %v1180
    %v1198 = vpack.c.bf16 %v1183, %v1182
    %v1199 = vpack.c.bf16 %v1185, %v1184
    %v1200 = vpack.c.bf16 %v1187, %v1186
    %v1201 = vpack.c.bf16 %v1189, %v1188
    %v1202 = vpack.c.bf16 %v1191, %v1190
    %v1203 = vpack.c.bf16 %v1193, %v1192
    %v1204 = vpack.c.bf16 %v1195, %v1194
    %v1205 = vld [vmem:[%s12] sm:$0x1]
    %v1207 = vlaneseq
    %v1208 = vshrl.u32 %v1207, 7
    %v1209 = vsub.s32 0, %v1208
    %v1210 = vrot.slane %v1205, %v1209
    %1212 = vmatprep.subr.bf16.mxu0 0
    %1213 = vmatpush1.bf16.msra.mxu0 %v1197
    %1214 = vmatprep.subr.bf16.mxu0 0
    %1215 = vmatpush1.bf16.msra.mxu0 %v1198
    %1216 = vmatprep.subr.bf16.mxu0 0
    %1217 = vmatpush1.bf16.msra.mxu0 %v1199
    %1218 = vmatprep.subr.bf16.mxu0 0
    %1219 = vmatpush1.bf16.msra.mxu0 %v1200
    %1220 = vmatprep.subr.bf16.mxu0 0
    %1221 = vmatpush1.bf16.msra.mxu0 %v1201
    %1222 = vmatprep.subr.bf16.mxu0 0
    %1223 = vmatpush1.bf16.msra.mxu0 %v1202
    %1224 = vmatprep.subr.bf16.mxu0 0
    %1225 = vmatpush1.bf16.msra.mxu0 %v1203
    %1226 = vmatprep.subr.bf16.mxu0 0
    %1227 = vmatpush1.bf16.msra.mxu0 %v1204
    %1228 = vmatprep.subr.bf16.mxu0 0
    %1229 = vmatpush1.bf16.msra.mxu0 0
    %1230 = vmatprep.subr.bf16.mxu0 0
    %1231 = vmatpush1.bf16.msra.mxu0 0
    %1232 = vmatprep.subr.bf16.mxu0 0
    %1233 = vmatpush1.bf16.msra.mxu0 0
    %1234 = vmatprep.subr.bf16.mxu0 0
    %1235 = vmatpush1.bf16.msra.mxu0 0
    %1236 = vmatprep.subr.bf16.mxu0 0
    %1237 = vmatpush1.bf16.msra.mxu0 0
    %1238 = vmatprep.subr.bf16.mxu0 0
    %1239 = vmatpush1.bf16.msra.mxu0 0
    %1240 = vmatprep.subr.bf16.mxu0 0
    %1241 = vmatpush1.bf16.msra.mxu0 0
    %1242 = vmatprep.subr.bf16.mxu0 0
    %1243 = vmatpush1.bf16.msra.mxu0 0
    %1244 = vmatprep.mubr.bf16.mxu0 0
    %1245 = vmatmul.mubr.bf16.gmra.mrb[0].mxu0 %v1196
    %v1246 = vpop.f32.mrb[0].mxu0
    %v1247 = vadd.f32 %v1210, %v1246
    %v1248 = vpop.f32.mrb[0].mxu0
    %v1249 = vpop.f32.mrb[0].mxu0
    %v1250 = vadd.f32 %v1210, %v1249
    %v1251 = vpop.f32.mrb[0].mxu0
    %1252 = vdwg.mxu0
    %v1253 = vadd.f32 %v1247, %v534
    %v1254 = vadd.f32 %v1250, %v535
    %v1255 = vld [vmem:[%s13] sm:$0x1]
    %v1256 = vld [vmem:[%s14] sm:$0x1]
    %1257 = vadd.xlane.f32.xlu0 %v1253
    %v1258 = vpop.xlane.xlu0 %1257
    %1259 = vadd.xlane.f32.xlu0 %v1254
    %v1260 = vpop.xlane.xlu0 %1259
    %v1261 = vmul.f32 %v1258, %v501
    %v1262 = vmul.f32 %v1260, %v501
    %v1263 = vsub.f32 %v1253, %v1261
    %v1264 = vsub.f32 %v1254, %v1262
    %v1265 = vmul.f32 %v1263, %v1263
    %v1266 = vmul.f32 %v1264, %v1264
    %1267 = vadd.xlane.f32.xlu0 %v1265
    %v1268 = vpop.xlane.xlu0 %1267
    %1269 = vadd.xlane.f32.xlu0 %v1266
    %v1270 = vpop.xlane.xlu0 %1269
    %v1271 = vmul.f32 %v1268, %v501
    %v1272 = vmul.f32 %v1270, %v501
    %v1273 = vadd.f32 %v1271, 1e-12
    %v1274 = vadd.f32 %v1272, 1e-12
    %v1275 = vrsqrt.pop %v1273
    %v1276 = vrsqrt.pop %v1274
    %v1277 = vmul.f32 %v1263, %v1275
    %v1278 = vmul.f32 %v1264, %v1276
    %v1280 = vlaneseq
    %v1281 = vshrl.u32 %v1280, 7
    %v1282 = vsub.s32 0, %v1281
    %v1283 = vrot.slane %v1255, %v1282
    %v1285 = vmul.f32 %v1277, %v1283
    %v1286 = vmul.f32 %v1278, %v1283
    %v1288 = vlaneseq
    %v1289 = vshrl.u32 %v1288, 7
    %v1290 = vsub.s32 0, %v1289
    %v1291 = vrot.slane %v1256, %v1290
    %v1293 = vadd.f32 %v1285, %v1291
    %v1294 = vadd.f32 %v1286, %v1291
    %v1295 = vld [vmem:[#allocation8] sm:$0xff]
    %v1296 = vld [vmem:[#allocation8 + $0x8] sm:$0xff]
    %v1297 = vld [vmem:[#allocation8 + $0x10] sm:$0xff]
    %v1298 = vld [vmem:[#allocation8 + $0x18] sm:$0xff]
    %v1299 = vld [vmem:[#allocation8 + $0x20] sm:$0xff]
    %v1300 = vld [vmem:[#allocation8 + $0x28] sm:$0xff]
    %v1301 = vld [vmem:[#allocation8 + $0x30] sm:$0xff]
    %v1302 = vld [vmem:[#allocation8 + $0x38] sm:$0xff]
    %v1303 = vld [vmem:[#allocation8 + $0x40] sm:$0xff]
    %v1304 = vld [vmem:[#allocation8 + $0x48] sm:$0xff]
    %v1305 = vld [vmem:[#allocation8 + $0x50] sm:$0xff]
    %v1306 = vld [vmem:[#allocation8 + $0x58] sm:$0xff]
    %v1307 = vld [vmem:[#allocation8 + $0x60] sm:$0xff]
    %v1308 = vld [vmem:[#allocation8 + $0x68] sm:$0xff]
    %v1309 = vld [vmem:[#allocation8 + $0x70] sm:$0xff]
    %v1310 = vld [vmem:[#allocation8 + $0x78] sm:$0xff]
    %v1311 = vld [vmem:[#allocation8 + $0x80] sm:$0xff]
    %v1312 = vld [vmem:[#allocation8 + $0x88] sm:$0xff]
    %v1313 = vld [vmem:[#allocation8 + $0x90] sm:$0xff]
    %v1314 = vld [vmem:[#allocation8 + $0x98] sm:$0xff]
    %v1315 = vld [vmem:[#allocation8 + $0xa0] sm:$0xff]
    %v1316 = vld [vmem:[#allocation8 + $0xa8] sm:$0xff]
    %v1317 = vld [vmem:[#allocation8 + $0xb0] sm:$0xff]
    %v1318 = vld [vmem:[#allocation8 + $0xb8] sm:$0xff]
    %v1319 = vld [vmem:[#allocation8 + $0xc0] sm:$0xff]
    %v1320 = vld [vmem:[#allocation8 + $0xc8] sm:$0xff]
    %v1321 = vld [vmem:[#allocation8 + $0xd0] sm:$0xff]
    %v1322 = vld [vmem:[#allocation8 + $0xd8] sm:$0xff]
    %v1323 = vld [vmem:[#allocation8 + $0xe0] sm:$0xff]
    %v1324 = vld [vmem:[#allocation8 + $0xe8] sm:$0xff]
    %v1325 = vld [vmem:[#allocation8 + $0xf0] sm:$0xff]
    %v1326 = vld [vmem:[#allocation8 + $0xf8] sm:$0xff]
    %v1327 = vpack.c.bf16 %v1294, %v1293
    %v1328 = vpack.c.bf16 %v1297, %v1295
    %v1329 = vpack.c.bf16 %v1298, %v1296
    %v1330 = vpack.c.bf16 %v1301, %v1299
    %v1331 = vpack.c.bf16 %v1302, %v1300
    %v1332 = vpack.c.bf16 %v1305, %v1303
    %v1333 = vpack.c.bf16 %v1306, %v1304
    %v1334 = vpack.c.bf16 %v1309, %v1307
    %v1335 = vpack.c.bf16 %v1310, %v1308
    %v1336 = vpack.c.bf16 %v1313, %v1311
    %v1337 = vpack.c.bf16 %v1314, %v1312
    %v1338 = vpack.c.bf16 %v1317, %v1315
    %v1339 = vpack.c.bf16 %v1318, %v1316
    %v1340 = vpack.c.bf16 %v1321, %v1319
    %v1341 = vpack.c.bf16 %v1322, %v1320
    %v1342 = vpack.c.bf16 %v1325, %v1323
    %v1343 = vpack.c.bf16 %v1326, %v1324
    %v1344 = vld [vmem:[%s16] sm:$0x3]
    %v1346 = vlaneseq
    %v1347 = vshrl.u32 %v1346, 7
    %v1348 = vsub.s32 0, %v1347
    %v1349 = vrot.slane %v1344, %v1348
    %v1350 = vlaneseq
    %v1351 = vshrl.u32 %v1350, 7
    %v1352 = vsub.s32 1, %v1351
    %v1353 = vrot.slane %v1344, %v1352
    %1356 = vmatprep.subr.bf16.mxu0 %v1329
    %1357 = vmatpush1.bf16.msra.mxu0 %v1328
    %1358 = vmatprep.subr.bf16.mxu0 %v1331
    %1359 = vmatpush1.bf16.msra.mxu0 %v1330
    %1360 = vmatprep.subr.bf16.mxu0 %v1333
    %1361 = vmatpush1.bf16.msra.mxu0 %v1332
    %1362 = vmatprep.subr.bf16.mxu0 %v1335
    %1363 = vmatpush1.bf16.msra.mxu0 %v1334
    %1364 = vmatprep.subr.bf16.mxu0 %v1337
    %1365 = vmatpush1.bf16.msra.mxu0 %v1336
    %1366 = vmatprep.subr.bf16.mxu0 %v1339
    %1367 = vmatpush1.bf16.msra.mxu0 %v1338
    %1368 = vmatprep.subr.bf16.mxu0 %v1341
    %1369 = vmatpush1.bf16.msra.mxu0 %v1340
    %1370 = vmatprep.subr.bf16.mxu0 %v1343
    %1371 = vmatpush1.bf16.msra.mxu0 %v1342
    %1372 = vmatprep.subr.bf16.mxu0 0
    %1373 = vmatpush1.bf16.msra.mxu0 0
    %1374 = vmatprep.subr.bf16.mxu0 0
    %1375 = vmatpush1.bf16.msra.mxu0 0
    %1376 = vmatprep.subr.bf16.mxu0 0
    %1377 = vmatpush1.bf16.msra.mxu0 0
    %1378 = vmatprep.subr.bf16.mxu0 0
    %1379 = vmatpush1.bf16.msra.mxu0 0
    %1380 = vmatprep.subr.bf16.mxu0 0
    %1381 = vmatpush1.bf16.msra.mxu0 0
    %1382 = vmatprep.subr.bf16.mxu0 0
    %1383 = vmatpush1.bf16.msra.mxu0 0
    %1384 = vmatprep.subr.bf16.mxu0 0
    %1385 = vmatpush1.bf16.msra.mxu0 0
    %1386 = vmatprep.subr.bf16.mxu0 0
    %1387 = vmatpush1.bf16.msra.mxu0 0
    %1388 = vmatprep.mubr.bf16.mxu0 0
    %1389 = vmatmul.mubr.bf16.gmra.mrb[0].mxu0 %v1327
    %v1390 = vpop.f32.mrb[0].mxu0
    %v1391 = vadd.f32 %v1349, %v1390
    %v1392 = vpop.f32.mrb[0].mxu0
    %v1393 = vadd.f32 %v1353, %v1392
    %v1394 = vpop.f32.mrb[0].mxu0
    %v1395 = vadd.f32 %v1349, %v1394
    %v1396 = vpop.f32.mrb[0].mxu0
    %v1397 = vadd.f32 %v1353, %v1396
    %1398 = vdwg.mxu0
    %v1399 = vmul.f32 %v1391, 0.5
    %v1400 = vmul.f32 %v1393, 0.5
    %v1401 = vmul.f32 %v1395, 0.5
    %v1402 = vmul.f32 %v1397, 0.5
    %v1403 = vmul.f32 %v1391, 0.044715
    %v1404 = vmul.f32 %v1393, 0.044715
    %v1405 = vmul.f32 %v1395, 0.044715
    %v1406 = vmul.f32 %v1397, 0.044715
    %v1407 = vmul.f32 %v1403, %v1391
    %v1408 = vmul.f32 %v1404, %v1393
    %v1409 = vmul.f32 %v1405, %v1395
    %v1410 = vmul.f32 %v1406, %v1397
    %v1411 = vmul.f32 %v1407, %v1391
    %v1412 = vmul.f32 %v1408, %v1393
    %v1413 = vmul.f32 %v1409, %v1395
    %v1414 = vmul.f32 %v1410, %v1397
    %v1415 = vadd.f32 %v1391, %v1411
    %v1416 = vadd.f32 %v1393, %v1412
    %v1417 = vadd.f32 %v1395, %v1413
    %v1418 = vadd.f32 %v1397, %v1414
    %v1419 = vmul.f32 %v1415, 0.7978846
    %v1420 = vmul.f32 %v1416, 0.7978846
    %v1421 = vmul.f32 %v1417, 0.7978846
    %v1422 = vmul.f32 %v1418, 0.7978846
    %v1423 = vtanh.pop %v1419
    %v1424 = vtanh.pop %v1420
    %v1425 = vtanh.pop %v1421
    %v1426 = vtanh.pop %v1422
    %v1427 = vadd.f32 %v1423, 1.0
    %v1428 = vadd.f32 %v1424, 1.0
    %v1429 = vadd.f32 %v1425, 1.0
    %v1430 = vadd.f32 %v1426, 1.0
    %v1431 = vmul.f32 %v1399, %v1427
    %v1432 = vmul.f32 %v1400, %v1428
    %v1433 = vmul.f32 %v1401, %v1429
    %v1434 = vmul.f32 %v1402, %v1430
    %v1435 = vld [vmem:[#allocation10] sm:$0xff]
    %v1436 = vld [vmem:[#allocation10 + $0x8] sm:$0xff]
    %v1437 = vld [vmem:[#allocation10 + $0x10] sm:$0xff]
    %v1438 = vld [vmem:[#allocation10 + $0x18] sm:$0xff]
    %v1439 = vld [vmem:[#allocation10 + $0x20] sm:$0xff]
    %v1440 = vld [vmem:[#allocation10 + $0x28] sm:$0xff]
    %v1441 = vld [vmem:[#allocation10 + $0x30] sm:$0xff]
    %v1442 = vld [vmem:[#allocation10 + $0x38] sm:$0xff]
    %v1443 = vld [vmem:[#allocation10 + $0x40] sm:$0xff]
    %v1444 = vld [vmem:[#allocation10 + $0x48] sm:$0xff]
    %v1445 = vld [vmem:[#allocation10 + $0x50] sm:$0xff]
    %v1446 = vld [vmem:[#allocation10 + $0x58] sm:$0xff]
    %v1447 = vld [vmem:[#allocation10 + $0x60] sm:$0xff]
    %v1448 = vld [vmem:[#allocation10 + $0x68] sm:$0xff]
    %v1449 = vld [vmem:[#allocation10 + $0x70] sm:$0xff]
    %v1450 = vld [vmem:[#allocation10 + $0x78] sm:$0xff]
    %v1451 = vld [vmem:[#allocation10 + $0x80] sm:$0xff]
    %v1452 = vld [vmem:[#allocation10 + $0x88] sm:$0xff]
    %v1453 = vld [vmem:[#allocation10 + $0x90] sm:$0xff]
    %v1454 = vld [vmem:[#allocation10 + $0x98] sm:$0xff]
    %v1455 = vld [vmem:[#allocation10 + $0xa0] sm:$0xff]
    %v1456 = vld [vmem:[#allocation10 + $0xa8] sm:$0xff]
    %v1457 = vld [vmem:[#allocation10 + $0xb0] sm:$0xff]
    %v1458 = vld [vmem:[#allocation10 + $0xb8] sm:$0xff]
    %v1459 = vld [vmem:[#allocation10 + $0xc0] sm:$0xff]
    %v1460 = vld [vmem:[#allocation10 + $0xc8] sm:$0xff]
    %v1461 = vld [vmem:[#allocation10 + $0xd0] sm:$0xff]
    %v1462 = vld [vmem:[#allocation10 + $0xd8] sm:$0xff]
    %v1463 = vld [vmem:[#allocation10 + $0xe0] sm:$0xff]
    %v1464 = vld [vmem:[#allocation10 + $0xe8] sm:$0xff]
    %v1465 = vld [vmem:[#allocation10 + $0xf0] sm:$0xff]
    %v1466 = vld [vmem:[#allocation10 + $0xf8] sm:$0xff]
    %v1467 = vpack.c.bf16 %v1433, %v1431
    %v1468 = vpack.c.bf16 %v1434, %v1432
    %v1469 = vpack.c.bf16 %v1436, %v1435
    %v1470 = vpack.c.bf16 %v1438, %v1437
    %v1471 = vpack.c.bf16 %v1440, %v1439
    %v1472 = vpack.c.bf16 %v1442, %v1441
    %v1473 = vpack.c.bf16 %v1444, %v1443
    %v1474 = vpack.c.bf16 %v1446, %v1445
    %v1475 = vpack.c.bf16 %v1448, %v1447
    %v1476 = vpack.c.bf16 %v1450, %v1449
    %v1477 = vpack.c.bf16 %v1452, %v1451
    %v1478 = vpack.c.bf16 %v1454, %v1453
    %v1479 = vpack.c.bf16 %v1456, %v1455
    %v1480 = vpack.c.bf16 %v1458, %v1457
    %v1481 = vpack.c.bf16 %v1460, %v1459
    %v1482 = vpack.c.bf16 %v1462, %v1461
    %v1483 = vpack.c.bf16 %v1464, %v1463
    %v1484 = vpack.c.bf16 %v1466, %v1465
    %v1485 = vld [vmem:[%s18] sm:$0x1]
    %v1487 = vlaneseq
    %v1488 = vshrl.u32 %v1487, 7
    %v1489 = vsub.s32 0, %v1488
    %v1490 = vrot.slane %v1485, %v1489
    %1492 = vmatprep.subr.bf16.mxu0 0
    %1493 = vmatpush1.bf16.msra.mxu0 %v1469
    %1494 = vmatprep.subr.bf16.mxu0 0
    %1495 = vmatpush1.bf16.msra.mxu0 %v1470
    %1496 = vmatprep.subr.bf16.mxu0 0
    %1497 = vmatpush1.bf16.msra.mxu0 %v1471
    %1498 = vmatprep.subr.bf16.mxu0 0
    %1499 = vmatpush1.bf16.msra.mxu0 %v1472
    %1500 = vmatprep.subr.bf16.mxu0 0
    %1501 = vmatpush1.bf16.msra.mxu0 %v1473
    %1502 = vmatprep.subr.bf16.mxu0 0
    %1503 = vmatpush1.bf16.msra.mxu0 %v1474
    %1504 = vmatprep.subr.bf16.mxu0 0
    %1505 = vmatpush1.bf16.msra.mxu0 %v1475
    %1506 = vmatprep.subr.bf16.mxu0 0
    %1507 = vmatpush1.bf16.msra.mxu0 %v1476
    %1508 = vmatprep.subr.bf16.mxu0 0
    %1509 = vmatpush1.bf16.msra.mxu0 %v1477
    %1510 = vmatprep.subr.bf16.mxu0 0
    %1511 = vmatpush1.bf16.msra.mxu0 %v1478
    %1512 = vmatprep.subr.bf16.mxu0 0
    %1513 = vmatpush1.bf16.msra.mxu0 %v1479
    %1514 = vmatprep.subr.bf16.mxu0 0
    %1515 = vmatpush1.bf16.msra.mxu0 %v1480
    %1516 = vmatprep.subr.bf16.mxu0 0
    %1517 = vmatpush1.bf16.msra.mxu0 %v1481
    %1518 = vmatprep.subr.bf16.mxu0 0
    %1519 = vmatpush1.bf16.msra.mxu0 %v1482
    %1520 = vmatprep.subr.bf16.mxu0 0
    %1521 = vmatpush1.bf16.msra.mxu0 %v1483
    %1522 = vmatprep.subr.bf16.mxu0 0
    %1523 = vmatpush1.bf16.msra.mxu0 %v1484
    %1524 = vmatprep.mubr.bf16.mxu0 %v1468
    %1525 = vmatmul.mubr.bf16.gmra.mrb[0].mxu0 %v1467
    %v1526 = vpop.f32.mrb[0].mxu0
    %v1527 = vadd.f32 %v1490, %v1526
    %v1528 = vpop.f32.mrb[0].mxu0
    %v1529 = vpop.f32.mrb[0].mxu0
    %v1530 = vadd.f32 %v1490, %v1529
    %v1531 = vpop.f32.mrb[0].mxu0
    %1532 = vdwg.mxu0
    %v1533 = vadd.f32 %v1527, %v1293
    %v1534 = vadd.f32 %v1530, %v1294
    %v1535 = vld [vmem:[%s19] sm:$0x1]
    %v1536 = vld [vmem:[%s20] sm:$0x1]
    %1537 = vadd.xlane.f32.xlu0 %v1533
    %v1538 = vpop.xlane.xlu0 %1537
    %1539 = vadd.xlane.f32.xlu0 %v1534
    %v1540 = vpop.xlane.xlu0 %1539
    %v1541 = vmul.f32 %v1538, %v501
    %v1542 = vmul.f32 %v1540, %v501
    %v1543 = vsub.f32 %v1533, %v1541
    %v1544 = vsub.f32 %v1534, %v1542
    %v1545 = vmul.f32 %v1543, %v1543
    %v1546 = vmul.f32 %v1544, %v1544
    %1547 = vadd.xlane.f32.xlu0 %v1545
    %v1548 = vpop.xlane.xlu0 %1547
    %1549 = vadd.xlane.f32.xlu0 %v1546
    %v1550 = vpop.xlane.xlu0 %1549
    %v1551 = vmul.f32 %v1548, %v501
    %v1552 = vmul.f32 %v1550, %v501
    %v1553 = vadd.f32 %v1551, 1e-12
    %v1554 = vadd.f32 %v1552, 1e-12
    %v1555 = vrsqrt.pop %v1553
    %v1556 = vrsqrt.pop %v1554
    %v1557 = vmul.f32 %v1543, %v1555
    %v1558 = vmul.f32 %v1544, %v1556
    %v1560 = vlaneseq
    %v1561 = vshrl.u32 %v1560, 7
    %v1562 = vsub.s32 0, %v1561
    %v1563 = vrot.slane %v1535, %v1562
    %v1565 = vmul.f32 %v1557, %v1563
    %v1566 = vmul.f32 %v1558, %v1563
    %v1568 = vlaneseq
    %v1569 = vshrl.u32 %v1568, 7
    %v1570 = vsub.s32 0, %v1569
    %v1571 = vrot.slane %v1536, %v1570
    %v1573 = vadd.f32 %v1565, %v1571
    %v1574 = vadd.f32 %v1566, %v1571
    %s1575 = scalar_lea.vmem [#allocation5], 384
    %v1576 = vld [vmem:[%s1575] sm:$0xff]
    %v1577 = vld [vmem:[%s1575 + $0x8] sm:$0xff]
    %v1578 = vld [vmem:[%s1575 + $0x10] sm:$0xff]
    %v1579 = vld [vmem:[%s1575 + $0x18] sm:$0xff]
    %v1580 = vld [vmem:[%s1575 + $0x20] sm:$0xff]
    %v1581 = vld [vmem:[%s1575 + $0x28] sm:$0xff]
    %v1582 = vld [vmem:[%s1575 + $0x30] sm:$0xff]
    %v1583 = vld [vmem:[%s1575 + $0x38] sm:$0xff]
    %v1584 = vld [vmem:[%s1575 + $0x40] sm:$0xff]
    %v1585 = vld [vmem:[%s1575 + $0x48] sm:$0xff]
    %v1586 = vld [vmem:[%s1575 + $0x50] sm:$0xff]
    %v1587 = vld [vmem:[%s1575 + $0x58] sm:$0xff]
    %v1588 = vld [vmem:[%s1575 + $0x60] sm:$0xff]
    %v1589 = vld [vmem:[%s1575 + $0x68] sm:$0xff]
    %v1590 = vld [vmem:[%s1575 + $0x70] sm:$0xff]
    %v1591 = vld [vmem:[%s1575 + $0x78] sm:$0xff]
    %v1592 = vld [vmem:[%s1575 + $0x80] sm:$0xff]
    %v1593 = vld [vmem:[%s1575 + $0x88] sm:$0xff]
    %v1594 = vld [vmem:[%s1575 + $0x90] sm:$0xff]
    %v1595 = vld [vmem:[%s1575 + $0x98] sm:$0xff]
    %v1596 = vld [vmem:[%s1575 + $0xa0] sm:$0xff]
    %v1597 = vld [vmem:[%s1575 + $0xa8] sm:$0xff]
    %v1598 = vld [vmem:[%s1575 + $0xb0] sm:$0xff]
    %v1599 = vld [vmem:[%s1575 + $0xb8] sm:$0xff]
    %v1600 = vld [vmem:[%s1575 + $0xc0] sm:$0xff]
    %v1601 = vld [vmem:[%s1575 + $0xc8] sm:$0xff]
    %v1602 = vld [vmem:[%s1575 + $0xd0] sm:$0xff]
    %v1603 = vld [vmem:[%s1575 + $0xd8] sm:$0xff]
    %v1604 = vld [vmem:[%s1575 + $0xe0] sm:$0xff]
    %v1605 = vld [vmem:[%s1575 + $0xe8] sm:$0xff]
    %v1606 = vld [vmem:[%s1575 + $0xf0] sm:$0xff]
    %v1607 = vld [vmem:[%s1575 + $0xf8] sm:$0xff]
    %v1608 = vld [vmem:[%s1575 + $0x100] sm:$0xff]
    %v1609 = vld [vmem:[%s1575 + $0x108] sm:$0xff]
    %v1610 = vld [vmem:[%s1575 + $0x110] sm:$0xff]
    %v1611 = vld [vmem:[%s1575 + $0x118] sm:$0xff]
    %v1612 = vld [vmem:[%s1575 + $0x120] sm:$0xff]
    %v1613 = vld [vmem:[%s1575 + $0x128] sm:$0xff]
    %v1614 = vld [vmem:[%s1575 + $0x130] sm:$0xff]
    %v1615 = vld [vmem:[%s1575 + $0x138] sm:$0xff]
    %v1616 = vld [vmem:[%s1575 + $0x140] sm:$0xff]
    %v1617 = vld [vmem:[%s1575 + $0x148] sm:$0xff]
    %v1618 = vld [vmem:[%s1575 + $0x150] sm:$0xff]
    %v1619 = vld [vmem:[%s1575 + $0x158] sm:$0xff]
    %v1620 = vld [vmem:[%s1575 + $0x160] sm:$0xff]
    %v1621 = vld [vmem:[%s1575 + $0x168] sm:$0xff]
    %v1622 = vld [vmem:[%s1575 + $0x170] sm:$0xff]
    %v1623 = vld [vmem:[%s1575 + $0x178] sm:$0xff]
    %v1624 = vpack.c.bf16 %v1574, %v1573
    %v1625 = vpack.c.bf16 %v1579, %v1576
    %v1626 = vpack.c.bf16 %v1580, %v1577
    %v1627 = vpack.c.bf16 %v1581, %v1578
    %v1628 = vpack.c.bf16 %v1585, %v1582
    %v1629 = vpack.c.bf16 %v1586, %v1583
    %v1630 = vpack.c.bf16 %v1587, %v1584
    %v1631 = vpack.c.bf16 %v1591, %v1588
    %v1632 = vpack.c.bf16 %v1592, %v1589
    %v1633 = vpack.c.bf16 %v1593, %v1590
    %v1634 = vpack.c.bf16 %v1597, %v1594
    %v1635 = vpack.c.bf16 %v1598, %v1595
    %v1636 = vpack.c.bf16 %v1599, %v1596
    %v1637 = vpack.c.bf16 %v1603, %v1600
    %v1638 = vpack.c.bf16 %v1604, %v1601
    %v1639 = vpack.c.bf16 %v1605, %v1602
    %v1640 = vpack.c.bf16 %v1609, %v1606
    %v1641 = vpack.c.bf16 %v1610, %v1607
    %v1642 = vpack.c.bf16 %v1611, %v1608
    %v1643 = vpack.c.bf16 %v1615, %v1612
    %v1644 = vpack.c.bf16 %v1616, %v1613
    %v1645 = vpack.c.bf16 %v1617, %v1614
    %v1646 = vpack.c.bf16 %v1621, %v1618
    %v1647 = vpack.c.bf16 %v1622, %v1619
    %v1648 = vpack.c.bf16 %v1623, %v1620
    %s1649 = scalar_lea.vmem %s10, 3
    %v1650 = vld [vmem:[%s1649] sm:$0x7]
    %v1652 = vlaneseq
    %v1653 = vshrl.u32 %v1652, 7
    %v1654 = vsub.s32 0, %v1653
    %v1655 = vrot.slane %v1650, %v1654
    %v1656 = vlaneseq
    %v1657 = vshrl.u32 %v1656, 7
    %v1658 = vsub.s32 1, %v1657
    %v1659 = vrot.slane %v1650, %v1658
    %v1660 = vlaneseq
    %v1661 = vshrl.u32 %v1660, 7
    %v1662 = vsub.s32 2, %v1661
    %v1663 = vrot.slane %v1650, %v1662
    %1667 = vmatprep.subr.bf16.mxu0 %v1626
    %1668 = vmatpush1.bf16.msra.mxu0 %v1625
    %1669 = vmatprep.subr.bf16.mxu0 %v1629
    %1670 = vmatpush1.bf16.msra.mxu0 %v1628
    %1671 = vmatprep.subr.bf16.mxu0 %v1632
    %1672 = vmatpush1.bf16.msra.mxu0 %v1631
    %1673 = vmatprep.subr.bf16.mxu0 %v1635
    %1674 = vmatpush1.bf16.msra.mxu0 %v1634
    %1675 = vmatprep.subr.bf16.mxu0 %v1638
    %1676 = vmatpush1.bf16.msra.mxu0 %v1637
    %1677 = vmatprep.subr.bf16.mxu0 %v1641
    %1678 = vmatpush1.bf16.msra.mxu0 %v1640
    %1679 = vmatprep.subr.bf16.mxu0 %v1644
    %1680 = vmatpush1.bf16.msra.mxu0 %v1643
    %1681 = vmatprep.subr.bf16.mxu0 %v1647
    %1682 = vmatpush1.bf16.msra.mxu0 %v1646
    %1683 = vmatprep.subr.bf16.mxu0 0
    %1684 = vmatpush1.bf16.msra.mxu0 0
    %1685 = vmatprep.subr.bf16.mxu0 0
    %1686 = vmatpush1.bf16.msra.mxu0 0
    %1687 = vmatprep.subr.bf16.mxu0 0
    %1688 = vmatpush1.bf16.msra.mxu0 0
    %1689 = vmatprep.subr.bf16.mxu0 0
    %1690 = vmatpush1.bf16.msra.mxu0 0
    %1691 = vmatprep.subr.bf16.mxu0 0
    %1692 = vmatpush1.bf16.msra.mxu0 0
    %1693 = vmatprep.subr.bf16.mxu0 0
    %1694 = vmatpush1.bf16.msra.mxu0 0
    %1695 = vmatprep.subr.bf16.mxu0 0
    %1696 = vmatpush1.bf16.msra.mxu0 0
    %1697 = vmatprep.subr.bf16.mxu0 0
    %1698 = vmatpush1.bf16.msra.mxu0 0
    %1699 = vmatprep.mubr.bf16.mxu0 0
    %1700 = vmatmul.mubr.bf16.gmra.mrb[0].mxu0 %v1624
    %v1701 = vpop.f32.mrb[0].mxu0
    %v1702 = vadd.f32 %v1655, %v1701
    %v1703 = vpop.f32.mrb[0].mxu0
    %v1704 = vadd.f32 %v1659, %v1703
    %v1705 = vpop.f32.mrb[0].mxu0
    %v1706 = vadd.f32 %v1655, %v1705
    %v1707 = vpop.f32.mrb[0].mxu0
    %v1708 = vadd.f32 %v1659, %v1707
    %1709 = vdwg.mxu0
    %1710 = vmatprep.subr.bf16.mxu0 0
    %1711 = vmatpush1.bf16.msra.mxu0 %v1627
    %1712 = vmatprep.subr.bf16.mxu0 0
    %1713 = vmatpush1.bf16.msra.mxu0 %v1630
    %1714 = vmatprep.subr.bf16.mxu0 0
    %1715 = vmatpush1.bf16.msra.mxu0 %v1633
    %1716 = vmatprep.subr.bf16.mxu0 0
    %1717 = vmatpush1.bf16.msra.mxu0 %v1636
    %1718 = vmatprep.subr.bf16.mxu0 0
    %1719 = vmatpush1.bf16.msra.mxu0 %v1639
    %1720 = vmatprep.subr.bf16.mxu0 0
    %1721 = vmatpush1.bf16.msra.mxu0 %v1642
    %1722 = vmatprep.subr.bf16.mxu0 0
    %1723 = vmatpush1.bf16.msra.mxu0 %v1645
    %1724 = vmatprep.subr.bf16.mxu0 0
    %1725 = vmatpush1.bf16.msra.mxu0 %v1648
    %1726 = vmatprep.subr.bf16.mxu0 0
    %1727 = vmatpush1.bf16.msra.mxu0 0
    %1728 = vmatprep.subr.bf16.mxu0 0
    %1729 = vmatpush1.bf16.msra.mxu0 0
    %1730 = vmatprep.subr.bf16.mxu0 0
    %1731 = vmatpush1.bf16.msra.mxu0 0
    %1732 = vmatprep.subr.bf16.mxu0 0
    %1733 = vmatpush1.bf16.msra.mxu0 0
    %1734 = vmatprep.subr.bf16.mxu0 0
    %1735 = vmatpush1.bf16.msra.mxu0 0
    %1736 = vmatprep.subr.bf16.mxu0 0
    %1737 = vmatpush1.bf16.msra.mxu0 0
    %1738 = vmatprep.subr.bf16.mxu0 0
    %1739 = vmatpush1.bf16.msra.mxu0 0
    %1740 = vmatprep.subr.bf16.mxu0 0
    %1741 = vmatpush1.bf16.msra.mxu0 0
    %1742 = vmatprep.mubr.bf16.mxu0 0
    %1743 = vmatmul.mubr.bf16.gmra.mrb[0].mxu0 %v1624
    %v1744 = vpop.f32.mrb[0].mxu0
    %v1745 = vadd.f32 %v1663, %v1744
    %v1746 = vpop.f32.mrb[0].mxu0
    %v1747 = vpop.f32.mrb[0].mxu0
    %v1748 = vadd.f32 %v1663, %v1747
    %v1749 = vpop.f32.mrb[0].mxu0
    %1750 = vdwg.mxu0
    %v1751 = vpack.c.bf16 %v1702, %v1702
    %v1752 = vpack.c.bf16 %v1704, %v1704
    %v1754 = vsel %vm713, %v1751, 0
    %v1757 = vsel %vm713, %v1752, 0
    %1759 = vmatprep.subr.bf16.mxu0 0
    %1760 = vmatpush1.bf16.xpose.msra.mxu0 %v1757
    %1761 = vmatprep.subr.bf16.mxu0 0
    %1762 = vmatpush1.bf16.xpose.msra.mxu0 0
    %1763 = vmatprep.subr.bf16.mxu0 0
    %1764 = vmatpush1.bf16.xpose.msra.mxu0 0
    %1765 = vmatprep.subr.bf16.mxu0 0
    %1766 = vmatpush1.bf16.xpose.msra.mxu0 0
    %1767 = vmatprep.subr.bf16.mxu0 0
    %1768 = vmatpush1.bf16.xpose.msra.mxu0 0
    %1769 = vmatprep.subr.bf16.mxu0 0
    %1770 = vmatpush1.bf16.xpose.msra.mxu0 0
    %1771 = vmatprep.subr.bf16.mxu0 0
    %1772 = vmatpush1.bf16.xpose.msra.mxu0 0
    %1773 = vmatprep.subr.bf16.mxu0 0
    %1774 = vmatpush1.bf16.xpose.msra.mxu0 0
    %1775 = vmatprep.subr.bf16.mxu0 0
    %1776 = vmatpush1.bf16.xpose.msra.mxu0 0
    %1777 = vmatprep.subr.bf16.mxu0 0
    %1778 = vmatpush1.bf16.xpose.msra.mxu0 0
    %1779 = vmatprep.subr.bf16.mxu0 0
    %1780 = vmatpush1.bf16.xpose.msra.mxu0 0
    %1781 = vmatprep.subr.bf16.mxu0 0
    %1782 = vmatpush1.bf16.xpose.msra.mxu0 0
    %1783 = vmatprep.subr.bf16.mxu0 0
    %1784 = vmatpush1.bf16.xpose.msra.mxu0 0
    %1785 = vmatprep.subr.bf16.mxu0 0
    %1786 = vmatpush1.bf16.xpose.msra.mxu0 0
    %1787 = vmatprep.subr.bf16.mxu0 0
    %1788 = vmatpush1.bf16.xpose.msra.mxu0 0
    %1789 = vmatprep.subr.bf16.mxu0 0
    %1790 = vmatpush1.bf16.xpose.msra.mxu0 0
    %1791 = vmatprep.mubr.bf16.mxu0 0
    %1792 = vmatmul.mubr.bf16.gmra.mrb[0].mxu0 %v1754
    %v1793 = vpop.f32.mrb[0].mxu0
    %v1794 = vadd.f32 0.0, %v1793
    %v1795 = vpop.f32.mrb[0].mxu0
    %v1796 = vpop.f32.mrb[0].mxu0
    %v1797 = vpop.f32.mrb[0].mxu0
    %1798 = vdwg.mxu0
    %v1799 = vmul.f32 %v1794, 0.125
    %v1800 = vadd.f32 %v1799, %v764
    %v1801 = vsel %vm766, %v1800, -inf
    %1802 = vmax.xlane.f32.xlu0 %v1801
    %v1803 = vpop.xlane.xlu0 %1802
    %v1804 = vsub.f32 %v1800, %v1803
    %v1805 = vmul.f32 %v1804, 1.442695
    %v1806 = vpow.pop %v1805
    %v1807 = vsel %vm766, %v1806, 0.0
    %1808 = vadd.xlane.f32.xlu0 %v1807
    %v1809 = vpop.xlane.xlu0 %1808
    %v1810 = vrcp.pop %v1809
    %v1811 = vmul.f32 %v1806, %v1810
    %v1812 = vpack.c.bf16 %v1811, %v1811
    %v1813 = vpack.c.bf16 %v1745, %v1745
    %v1815 = vsel %vm766, %v1812, 0
    %v1818 = vsel %vm783, %v1813, 0
    %1820 = vmatprep.subr.bf16.mxu0 0
    %1821 = vmatpush1.bf16.msra.mxu0 %v1818
    %1822 = vmatprep.subr.bf16.mxu0 0
    %1823 = vmatpush1.bf16.msra.mxu0 0
    %1824 = vmatprep.subr.bf16.mxu0 0
    %1825 = vmatpush1.bf16.msra.mxu0 0
    %1826 = vmatprep.subr.bf16.mxu0 0
    %1827 = vmatpush1.bf16.msra.mxu0 0
    %1828 = vmatprep.subr.bf16.mxu0 0
    %1829 = vmatpush1.bf16.msra.mxu0 0
    %1830 = vmatprep.subr.bf16.mxu0 0
    %1831 = vmatpush1.bf16.msra.mxu0 0
    %1832 = vmatprep.subr.bf16.mxu0 0
    %1833 = vmatpush1.bf16.msra.mxu0 0
    %1834 = vmatprep.subr.bf16.mxu0 0
    %1835 = vmatpush1.bf16.msra.mxu0 0
    %1836 = vmatprep.subr.bf16.mxu0 0
    %1837 = vmatpush1.bf16.msra.mxu0 0
    %1838 = vmatprep.subr.bf16.mxu0 0
    %1839 = vmatpush1.bf16.msra.mxu0 0
    %1840 = vmatprep.subr.bf16.mxu0 0
    %1841 = vmatpush1.bf16.msra.mxu0 0
    %1842 = vmatprep.subr.bf16.mxu0 0
    %1843 = vmatpush1.bf16.msra.mxu0 0
    %1844 = vmatprep.subr.bf16.mxu0 0
    %1845 = vmatpush1.bf16.msra.mxu0 0
    %1846 = vmatprep.subr.bf16.mxu0 0
    %1847 = vmatpush1.bf16.msra.mxu0 0
    %1848 = vmatprep.subr.bf16.mxu0 0
    %1849 = vmatpush1.bf16.msra.mxu0 0
    %1850 = vmatprep.subr.bf16.mxu0 0
    %1851 = vmatpush1.bf16.msra.mxu0 0
    %1852 = vmatprep.mubr.bf16.mxu0 0
    %1853 = vmatmul.mubr.bf16.gmra.mrb[0].mxu0 %v1815
    %v1854 = vpop.f32.mrb[0].mxu0
    %v1855 = vadd.f32 0.0, %v1854
    %v1856 = vpop.f32.mrb[0].mxu0
    %v1857 = vpop.f32.mrb[0].mxu0
    %v1858 = vpop.f32.mrb[0].mxu0
    %1859 = vdwg.mxu0
    %1861 = vrot.lane.b32.xlu0 %v1751, 64
    %v1862 = vpop.permute.xlu0 %1861
    %1864 = vrot.lane.b32.xlu0 %v1752, 64
    %v1865 = vpop.permute.xlu0 %1864
    %v1867 = vsel %vm713, %v1862, 0
    %v1870 = vsel %vm713, %v1865, 0
    %1872 = vmatprep.subr.bf16.mxu0 0
    %1873 = vmatpush1.bf16.xpose.msra.mxu0 %v1870
    %1874 = vmatprep.subr.bf16.mxu0 0
    %1875 = vmatpush1.bf16.xpose.msra.mxu0 0
    %1876 = vmatprep.subr.bf16.mxu0 0
    %1877 = vmatpush1.bf16.xpose.msra.mxu0 0
    %1878 = vmatprep.subr.bf16.mxu0 0
    %1879 = vmatpush1.bf16.xpose.msra.mxu0 0
    %1880 = vmatprep.subr.bf16.mxu0 0
    %1881 = vmatpush1.bf16.xpose.msra.mxu0 0
    %1882 = vmatprep.subr.bf16.mxu0 0
    %1883 = vmatpush1.bf16.xpose.msra.mxu0 0
    %1884 = vmatprep.subr.bf16.mxu0 0
    %1885 = vmatpush1.bf16.xpose.msra.mxu0 0
    %1886 = vmatprep.subr.bf16.mxu0 0
    %1887 = vmatpush1.bf16.xpose.msra.mxu0 0
    %1888 = vmatprep.subr.bf16.mxu0 0
    %1889 = vmatpush1.bf16.xpose.msra.mxu0 0
    %1890 = vmatprep.subr.bf16.mxu0 0
    %1891 = vmatpush1.bf16.xpose.msra.mxu0 0
    %1892 = vmatprep.subr.bf16.mxu0 0
    %1893 = vmatpush1.bf16.xpose.msra.mxu0 0
    %1894 = vmatprep.subr.bf16.mxu0 0
    %1895 = vmatpush1.bf16.xpose.msra.mxu0 0
    %1896 = vmatprep.subr.bf16.mxu0 0
    %1897 = vmatpush1.bf16.xpose.msra.mxu0 0
    %1898 = vmatprep.subr.bf16.mxu0 0
    %1899 = vmatpush1.bf16.xpose.msra.mxu0 0
    %1900 = vmatprep.subr.bf16.mxu0 0
    %1901 = vmatpush1.bf16.xpose.msra.mxu0 0
    %1902 = vmatprep.subr.bf16.mxu0 0
    %1903 = vmatpush1.bf16.xpose.msra.mxu0 0
    %1904 = vmatprep.mubr.bf16.mxu0 0
    %1905 = vmatmul.mubr.bf16.gmra.mrb[0].mxu0 %v1867
    %v1906 = vpop.f32.mrb[0].mxu0
    %v1907 = vadd.f32 0.0, %v1906
    %v1908 = vpop.f32.mrb[0].mxu0
    %v1909 = vpop.f32.mrb[0].mxu0
    %v1910 = vpop.f32.mrb[0].mxu0
    %1911 = vdwg.mxu0
    %v1912 = vmul.f32 %v1907, 0.125
    %v1913 = vadd.f32 %v1912, %v764
    %v1914 = vsel %vm766, %v1913, -inf
    %1915 = vmax.xlane.f32.xlu0 %v1914
    %v1916 = vpop.xlane.xlu0 %1915
    %v1917 = vsub.f32 %v1913, %v1916
    %v1918 = vmul.f32 %v1917, 1.442695
    %v1919 = vpow.pop %v1918
    %v1920 = vsel %vm766, %v1919, 0.0
    %1921 = vadd.xlane.f32.xlu0 %v1920
    %v1922 = vpop.xlane.xlu0 %1921
    %v1923 = vrcp.pop %v1922
    %v1924 = vmul.f32 %v1919, %v1923
    %v1925 = vpack.c.bf16 %v1924, %v1924
    %1927 = vrot.lane.b32.xlu0 %v1813, 64
    %v1928 = vpop.permute.xlu0 %1927
    %v1930 = vsel %vm766, %v1925, 0
    %v1933 = vsel %vm783, %v1928, 0
    %1935 = vmatprep.subr.bf16.mxu0 0
    %1936 = vmatpush1.bf16.msra.mxu0 %v1933
    %1937 = vmatprep.subr.bf16.mxu0 0
    %1938 = vmatpush1.bf16.msra.mxu0 0
    %1939 = vmatprep.subr.bf16.mxu0 0
    %1940 = vmatpush1.bf16.msra.mxu0 0
    %1941 = vmatprep.subr.bf16.mxu0 0
    %1942 = vmatpush1.bf16.msra.mxu0 0
    %1943 = vmatprep.subr.bf16.mxu0 0
    %1944 = vmatpush1.bf16.msra.mxu0 0
    %1945 = vmatprep.subr.bf16.mxu0 0
    %1946 = vmatpush1.bf16.msra.mxu0 0
    %1947 = vmatprep.subr.bf16.mxu0 0
    %1948 = vmatpush1.bf16.msra.mxu0 0
    %1949 = vmatprep.subr.bf16.mxu0 0
    %1950 = vmatpush1.bf16.msra.mxu0 0
    %1951 = vmatprep.subr.bf16.mxu0 0
    %1952 = vmatpush1.bf16.msra.mxu0 0
    %1953 = vmatprep.subr.bf16.mxu0 0
    %1954 = vmatpush1.bf16.msra.mxu0 0
    %1955 = vmatprep.subr.bf16.mxu0 0
    %1956 = vmatpush1.bf16.msra.mxu0 0
    %1957 = vmatprep.subr.bf16.mxu0 0
    %1958 = vmatpush1.bf16.msra.mxu0 0
    %1959 = vmatprep.subr.bf16.mxu0 0
    %1960 = vmatpush1.bf16.msra.mxu0 0
    %1961 = vmatprep.subr.bf16.mxu0 0
    %1962 = vmatpush1.bf16.msra.mxu0 0
    %1963 = vmatprep.subr.bf16.mxu0 0
    %1964 = vmatpush1.bf16.msra.mxu0 0
    %1965 = vmatprep.subr.bf16.mxu0 0
    %1966 = vmatpush1.bf16.msra.mxu0 0
    %1967 = vmatprep.mubr.bf16.mxu0 0
    %1968 = vmatmul.mubr.bf16.gmra.mrb[0].mxu0 %v1930
    %v1969 = vpop.f32.mrb[0].mxu0
    %v1970 = vadd.f32 0.0, %v1969
    %v1971 = vpop.f32.mrb[0].mxu0
    %v1972 = vpop.f32.mrb[0].mxu0
    %v1973 = vpop.f32.mrb[0].mxu0
    %1974 = vdwg.mxu0
    %1976 = vrot.lane.b32.xlu0 %v1970, 64
    %v1977 = vpop.permute.xlu0 %1976
    %v1979 = vsel %vm713, %v1855, %v1977
    %v1980 = vpack.c.bf16 %v1706, %v1706
    %v1981 = vpack.c.bf16 %v1708, %v1708
    %v1983 = vsel %vm713, %v1980, 0
    %v1986 = vsel %vm713, %v1981, 0
    %1988 = vmatprep.subr.bf16.mxu0 0
    %1989 = vmatpush1.bf16.xpose.msra.mxu0 %v1986
    %1990 = vmatprep.subr.bf16.mxu0 0
    %1991 = vmatpush1.bf16.xpose.msra.mxu0 0
    %1992 = vmatprep.subr.bf16.mxu0 0
    %1993 = vmatpush1.bf16.xpose.msra.mxu0 0
    %1994 = vmatprep.subr.bf16.mxu0 0
    %1995 = vmatpush1.bf16.xpose.msra.mxu0 0
    %1996 = vmatprep.subr.bf16.mxu0 0
    %1997 = vmatpush1.bf16.xpose.msra.mxu0 0
    %1998 = vmatprep.subr.bf16.mxu0 0
    %1999 = vmatpush1.bf16.xpose.msra.mxu0 0
    %2000 = vmatprep.subr.bf16.mxu0 0
    %2001 = vmatpush1.bf16.xpose.msra.mxu0 0
    %2002 = vmatprep.subr.bf16.mxu0 0
    %2003 = vmatpush1.bf16.xpose.msra.mxu0 0
    %2004 = vmatprep.subr.bf16.mxu0 0
    %2005 = vmatpush1.bf16.xpose.msra.mxu0 0
    %2006 = vmatprep.subr.bf16.mxu0 0
    %2007 = vmatpush1.bf16.xpose.msra.mxu0 0
    %2008 = vmatprep.subr.bf16.mxu0 0
    %2009 = vmatpush1.bf16.xpose.msra.mxu0 0
    %2010 = vmatprep.subr.bf16.mxu0 0
    %2011 = vmatpush1.bf16.xpose.msra.mxu0 0
    %2012 = vmatprep.subr.bf16.mxu0 0
    %2013 = vmatpush1.bf16.xpose.msra.mxu0 0
    %2014 = vmatprep.subr.bf16.mxu0 0
    %2015 = vmatpush1.bf16.xpose.msra.mxu0 0
    %2016 = vmatprep.subr.bf16.mxu0 0
    %2017 = vmatpush1.bf16.xpose.msra.mxu0 0
    %2018 = vmatprep.subr.bf16.mxu0 0
    %2019 = vmatpush1.bf16.xpose.msra.mxu0 0
    %2020 = vmatprep.mubr.bf16.mxu0 0
    %2021 = vmatmul.mubr.bf16.gmra.mrb[0].mxu0 %v1983
    %v2022 = vpop.f32.mrb[0].mxu0
    %v2023 = vadd.f32 0.0, %v2022
    %v2024 = vpop.f32.mrb[0].mxu0
    %v2025 = vpop.f32.mrb[0].mxu0
    %v2026 = vpop.f32.mrb[0].mxu0
    %2027 = vdwg.mxu0
    %v2028 = vmul.f32 %v2023, 0.125
    %v2029 = vadd.f32 %v2028, %v999
    %v2030 = vsel %vm766, %v2029, -inf
    %2031 = vmax.xlane.f32.xlu0 %v2030
    %v2032 = vpop.xlane.xlu0 %2031
    %v2033 = vsub.f32 %v2029, %v2032
    %v2034 = vmul.f32 %v2033, 1.442695
    %v2035 = vpow.pop %v2034
    %v2036 = vsel %vm766, %v2035, 0.0
    %2037 = vadd.xlane.f32.xlu0 %v2036
    %v2038 = vpop.xlane.xlu0 %2037
    %v2039 = vrcp.pop %v2038
    %v2040 = vmul.f32 %v2035, %v2039
    %v2041 = vpack.c.bf16 %v2040, %v2040
    %v2042 = vpack.c.bf16 %v1748, %v1748
    %v2044 = vsel %vm766, %v2041, 0
    %v2047 = vsel %vm783, %v2042, 0
    %2049 = vmatprep.subr.bf16.mxu0 0
    %2050 = vmatpush1.bf16.msra.mxu0 %v2047
    %2051 = vmatprep.subr.bf16.mxu0 0
    %2052 = vmatpush1.bf16.msra.mxu0 0
    %2053 = vmatprep.subr.bf16.mxu0 0
    %2054 = vmatpush1.bf16.msra.mxu0 0
    %2055 = vmatprep.subr.bf16.mxu0 0
    %2056 = vmatpush1.bf16.msra.mxu0 0
    %2057 = vmatprep.subr.bf16.mxu0 0
    %2058 = vmatpush1.bf16.msra.mxu0 0
    %2059 = vmatprep.subr.bf16.mxu0 0
    %2060 = vmatpush1.bf16.msra.mxu0 0
    %2061 = vmatprep.subr.bf16.mxu0 0
    %2062 = vmatpush1.bf16.msra.mxu0 0
    %2063 = vmatprep.subr.bf16.mxu0 0
    %2064 = vmatpush1.bf16.msra.mxu0 0
    %2065 = vmatprep.subr.bf16.mxu0 0
    %2066 = vmatpush1.bf16.msra.mxu0 0
    %2067 = vmatprep.subr.bf16.mxu0 0
    %2068 = vmatpush1.bf16.msra.mxu0 0
    %2069 = vmatprep.subr.bf16.mxu0 0
    %2070 = vmatpush1.bf16.msra.mxu0 0
    %2071 = vmatprep.subr.bf16.mxu0 0
    %2072 = vmatpush1.bf16.msra.mxu0 0
    %2073 = vmatprep.subr.bf16.mxu0 0
    %2074 = vmatpush1.bf16.msra.mxu0 0
    %2075 = vmatprep.subr.bf16.mxu0 0
    %2076 = vmatpush1.bf16.msra.mxu0 0
    %2077 = vmatprep.subr.bf16.mxu0 0
    %2078 = vmatpush1.bf16.msra.mxu0 0
    %2079 = vmatprep.subr.bf16.mxu0 0
    %2080 = vmatpush1.bf16.msra.mxu0 0
    %2081 = vmatprep.mubr.bf16.mxu0 0
    %2082 = vmatmul.mubr.bf16.gmra.mrb[0].mxu0 %v2044
    %v2083 = vpop.f32.mrb[0].mxu0
    %v2084 = vadd.f32 0.0, %v2083
    %v2085 = vpop.f32.mrb[0].mxu0
    %v2086 = vpop.f32.mrb[0].mxu0
    %v2087 = vpop.f32.mrb[0].mxu0
    %2088 = vdwg.mxu0
    %2090 = vrot.lane.b32.xlu0 %v1980, 64
    %v2091 = vpop.permute.xlu0 %2090
    %2093 = vrot.lane.b32.xlu0 %v1981, 64
    %v2094 = vpop.permute.xlu0 %2093
    %v2096 = vsel %vm713, %v2091, 0
    %v2099 = vsel %vm713, %v2094, 0
    %2101 = vmatprep.subr.bf16.mxu0 0
    %2102 = vmatpush1.bf16.xpose.msra.mxu0 %v2099
    %2103 = vmatprep.subr.bf16.mxu0 0
    %2104 = vmatpush1.bf16.xpose.msra.mxu0 0
    %2105 = vmatprep.subr.bf16.mxu0 0
    %2106 = vmatpush1.bf16.xpose.msra.mxu0 0
    %2107 = vmatprep.subr.bf16.mxu0 0
    %2108 = vmatpush1.bf16.xpose.msra.mxu0 0
    %2109 = vmatprep.subr.bf16.mxu0 0
    %2110 = vmatpush1.bf16.xpose.msra.mxu0 0
    %2111 = vmatprep.subr.bf16.mxu0 0
    %2112 = vmatpush1.bf16.xpose.msra.mxu0 0
    %2113 = vmatprep.subr.bf16.mxu0 0
    %2114 = vmatpush1.bf16.xpose.msra.mxu0 0
    %2115 = vmatprep.subr.bf16.mxu0 0
    %2116 = vmatpush1.bf16.xpose.msra.mxu0 0
    %2117 = vmatprep.subr.bf16.mxu0 0
    %2118 = vmatpush1.bf16.xpose.msra.mxu0 0
    %2119 = vmatprep.subr.bf16.mxu0 0
    %2120 = vmatpush1.bf16.xpose.msra.mxu0 0
    %2121 = vmatprep.subr.bf16.mxu0 0
    %2122 = vmatpush1.bf16.xpose.msra.mxu0 0
    %2123 = vmatprep.subr.bf16.mxu0 0
    %2124 = vmatpush1.bf16.xpose.msra.mxu0 0
    %2125 = vmatprep.subr.bf16.mxu0 0
    %2126 = vmatpush1.bf16.xpose.msra.mxu0 0
    %2127 = vmatprep.subr.bf16.mxu0 0
    %2128 = vmatpush1.bf16.xpose.msra.mxu0 0
    %2129 = vmatprep.subr.bf16.mxu0 0
    %2130 = vmatpush1.bf16.xpose.msra.mxu0 0
    %2131 = vmatprep.subr.bf16.mxu0 0
    %2132 = vmatpush1.bf16.xpose.msra.mxu0 0
    %2133 = vmatprep.mubr.bf16.mxu0 0
    %2134 = vmatmul.mubr.bf16.gmra.mrb[0].mxu0 %v2096
    %v2135 = vpop.f32.mrb[0].mxu0
    %v2136 = vadd.f32 0.0, %v2135
    %v2137 = vpop.f32.mrb[0].mxu0
    %v2138 = vpop.f32.mrb[0].mxu0
    %v2139 = vpop.f32.mrb[0].mxu0
    %2140 = vdwg.mxu0
    %v2141 = vmul.f32 %v2136, 0.125
    %v2142 = vadd.f32 %v2141, %v999
    %v2143 = vsel %vm766, %v2142, -inf
    %2144 = vmax.xlane.f32.xlu0 %v2143
    %v2145 = vpop.xlane.xlu0 %2144
    %v2146 = vsub.f32 %v2142, %v2145
    %v2147 = vmul.f32 %v2146, 1.442695
    %v2148 = vpow.pop %v2147
    %v2149 = vsel %vm766, %v2148, 0.0
    %2150 = vadd.xlane.f32.xlu0 %v2149
    %v2151 = vpop.xlane.xlu0 %2150
    %v2152 = vrcp.pop %v2151
    %v2153 = vmul.f32 %v2148, %v2152
    %v2154 = vpack.c.bf16 %v2153, %v2153
    %2156 = vrot.lane.b32.xlu0 %v2042, 64
    %v2157 = vpop.permute.xlu0 %2156
    %v2159 = vsel %vm766, %v2154, 0
    %v2162 = vsel %vm783, %v2157, 0
    %2164 = vmatprep.subr.bf16.mxu0 0
    %2165 = vmatpush1.bf16.msra.mxu0 %v2162
    %2166 = vmatprep.subr.bf16.mxu0 0
    %2167 = vmatpush1.bf16.msra.mxu0 0
    %2168 = vmatprep.subr.bf16.mxu0 0
    %2169 = vmatpush1.bf16.msra.mxu0 0
    %2170 = vmatprep.subr.bf16.mxu0 0
    %2171 = vmatpush1.bf16.msra.mxu0 0
    %2172 = vmatprep.subr.bf16.mxu0 0
    %2173 = vmatpush1.bf16.msra.mxu0 0
    %2174 = vmatprep.subr.bf16.mxu0 0
    %2175 = vmatpush1.bf16.msra.mxu0 0
    %2176 = vmatprep.subr.bf16.mxu0 0
    %2177 = vmatpush1.bf16.msra.mxu0 0
    %2178 = vmatprep.subr.bf16.mxu0 0
    %2179 = vmatpush1.bf16.msra.mxu0 0
    %2180 = vmatprep.subr.bf16.mxu0 0
    %2181 = vmatpush1.bf16.msra.mxu0 0
    %2182 = vmatprep.subr.bf16.mxu0 0
    %2183 = vmatpush1.bf16.msra.mxu0 0
    %2184 = vmatprep.subr.bf16.mxu0 0
    %2185 = vmatpush1.bf16.msra.mxu0 0
    %2186 = vmatprep.subr.bf16.mxu0 0
    %2187 = vmatpush1.bf16.msra.mxu0 0
    %2188 = vmatprep.subr.bf16.mxu0 0
    %2189 = vmatpush1.bf16.msra.mxu0 0
    %2190 = vmatprep.subr.bf16.mxu0 0
    %2191 = vmatpush1.bf16.msra.mxu0 0
    %2192 = vmatprep.subr.bf16.mxu0 0
    %2193 = vmatpush1.bf16.msra.mxu0 0
    %2194 = vmatprep.subr.bf16.mxu0 0
    %2195 = vmatpush1.bf16.msra.mxu0 0
    %2196 = vmatprep.mubr.bf16.mxu0 0
    %2197 = vmatmul.mubr.bf16.gmra.mrb[0].mxu0 %v2159
    %v2198 = vpop.f32.mrb[0].mxu0
    %v2199 = vadd.f32 0.0, %v2198
    %v2200 = vpop.f32.mrb[0].mxu0
    %v2201 = vpop.f32.mrb[0].mxu0
    %v2202 = vpop.f32.mrb[0].mxu0
    %2203 = vdwg.mxu0
    %2205 = vrot.lane.b32.xlu0 %v2199, 64
    %v2206 = vpop.permute.xlu0 %2205
    %v2208 = vsel %vm713, %v2084, %v2206
    %s2209 = scalar_lea.vmem [#allocation7], 128
    %v2210 = vld [vmem:[%s2209] sm:$0xff]
    %v2211 = vld [vmem:[%s2209 + $0x8] sm:$0xff]
    %v2212 = vld [vmem:[%s2209 + $0x10] sm:$0xff]
    %v2213 = vld [vmem:[%s2209 + $0x18] sm:$0xff]
    %v2214 = vld [vmem:[%s2209 + $0x20] sm:$0xff]
    %v2215 = vld [vmem:[%s2209 + $0x28] sm:$0xff]
    %v2216 = vld [vmem:[%s2209 + $0x30] sm:$0xff]
    %v2217 = vld [vmem:[%s2209 + $0x38] sm:$0xff]
    %v2218 = vld [vmem:[%s2209 + $0x40] sm:$0xff]
    %v2219 = vld [vmem:[%s2209 + $0x48] sm:$0xff]
    %v2220 = vld [vmem:[%s2209 + $0x50] sm:$0xff]
    %v2221 = vld [vmem:[%s2209 + $0x58] sm:$0xff]
    %v2222 = vld [vmem:[%s2209 + $0x60] sm:$0xff]
    %v2223 = vld [vmem:[%s2209 + $0x68] sm:$0xff]
    %v2224 = vld [vmem:[%s2209 + $0x70] sm:$0xff]
    %v2225 = vld [vmem:[%s2209 + $0x78] sm:$0xff]
    %v2226 = vpack.c.bf16 %v2208, %v1979
    %v2227 = vpack.c.bf16 %v2211, %v2210
    %v2228 = vpack.c.bf16 %v2213, %v2212
    %v2229 = vpack.c.bf16 %v2215, %v2214
    %v2230 = vpack.c.bf16 %v2217, %v2216
    %v2231 = vpack.c.bf16 %v2219, %v2218
    %v2232 = vpack.c.bf16 %v2221, %v2220
    %v2233 = vpack.c.bf16 %v2223, %v2222
    %v2234 = vpack.c.bf16 %v2225, %v2224
    %s2235 = scalar_lea.vmem %s12, 1
    %v2236 = vld [vmem:[%s2235] sm:$0x1]
    %v2238 = vlaneseq
    %v2239 = vshrl.u32 %v2238, 7
    %v2240 = vsub.s32 0, %v2239
    %v2241 = vrot.slane %v2236, %v2240
    %2243 = vmatprep.subr.bf16.mxu0 0
    %2244 = vmatpush1.bf16.msra.mxu0 %v2227
    %2245 = vmatprep.subr.bf16.mxu0 0
    %2246 = vmatpush1.bf16.msra.mxu0 %v2228
    %2247 = vmatprep.subr.bf16.mxu0 0
    %2248 = vmatpush1.bf16.msra.mxu0 %v2229
    %2249 = vmatprep.subr.bf16.mxu0 0
    %2250 = vmatpush1.bf16.msra.mxu0 %v2230
    %2251 = vmatprep.subr.bf16.mxu0 0
    %2252 = vmatpush1.bf16.msra.mxu0 %v2231
    %2253 = vmatprep.subr.bf16.mxu0 0
    %2254 = vmatpush1.bf16.msra.mxu0 %v2232
    %2255 = vmatprep.subr.bf16.mxu0 0
    %2256 = vmatpush1.bf16.msra.mxu0 %v2233
    %2257 = vmatprep.subr.bf16.mxu0 0
    %2258 = vmatpush1.bf16.msra.mxu0 %v2234
    %2259 = vmatprep.subr.bf16.mxu0 0
    %2260 = vmatpush1.bf16.msra.mxu0 0
    %2261 = vmatprep.subr.bf16.mxu0 0
    %2262 = vmatpush1.bf16.msra.mxu0 0
    %2263 = vmatprep.subr.bf16.mxu0 0
    %2264 = vmatpush1.bf16.msra.mxu0 0
    %2265 = vmatprep.subr.bf16.mxu0 0
    %2266 = vmatpush1.bf16.msra.mxu0 0
    %2267 = vmatprep.subr.bf16.mxu0 0
    %2268 = vmatpush1.bf16.msra.mxu0 0
    %2269 = vmatprep.subr.bf16.mxu0 0
    %2270 = vmatpush1.bf16.msra.mxu0 0
    %2271 = vmatprep.subr.bf16.mxu0 0
    %2272 = vmatpush1.bf16.msra.mxu0 0
    %2273 = vmatprep.subr.bf16.mxu0 0
    %2274 = vmatpush1.bf16.msra.mxu0 0
    %2275 = vmatprep.mubr.bf16.mxu0 0
    %2276 = vmatmul.mubr.bf16.gmra.mrb[0].mxu0 %v2226
    %v2277 = vpop.f32.mrb[0].mxu0
    %v2278 = vadd.f32 %v2241, %v2277
    %v2279 = vpop.f32.mrb[0].mxu0
    %v2280 = vpop.f32.mrb[0].mxu0
    %v2281 = vadd.f32 %v2241, %v2280
    %v2282 = vpop.f32.mrb[0].mxu0
    %2283 = vdwg.mxu0
    %v2284 = vadd.f32 %v2278, %v1573
    %v2285 = vadd.f32 %v2281, %v1574
    %s2286 = scalar_lea.vmem %s13, 1
    %v2287 = vld [vmem:[%s2286] sm:$0x1]
    %s2288 = scalar_lea.vmem %s14, 1
    %v2289 = vld [vmem:[%s2288] sm:$0x1]
    %2290 = vadd.xlane.f32.xlu0 %v2284
    %v2291 = vpop.xlane.xlu0 %2290
    %2292 = vadd.xlane.f32.xlu0 %v2285
    %v2293 = vpop.xlane.xlu0 %2292
    %v2294 = vmul.f32 %v2291, %v501
    %v2295 = vmul.f32 %v2293, %v501
    %v2296 = vsub.f32 %v2284, %v2294
    %v2297 = vsub.f32 %v2285, %v2295
    %v2298 = vmul.f32 %v2296, %v2296
    %v2299 = vmul.f32 %v2297, %v2297
    %2300 = vadd.xlane.f32.xlu0 %v2298
    %v2301 = vpop.xlane.xlu0 %2300
    %2302 = vadd.xlane.f32.xlu0 %v2299
    %v2303 = vpop.xlane.xlu0 %2302
    %v2304 = vmul.f32 %v2301, %v501
    %v2305 = vmul.f32 %v2303, %v501
    %v2306 = vadd.f32 %v2304, 1e-12
    %v2307 = vadd.f32 %v2305, 1e-12
    %v2308 = vrsqrt.pop %v2306
    %v2309 = vrsqrt.pop %v2307
    %v2310 = vmul.f32 %v2296, %v2308
    %v2311 = vmul.f32 %v2297, %v2309
    %v2313 = vlaneseq
    %v2314 = vshrl.u32 %v2313, 7
    %v2315 = vsub.s32 0, %v2314
    %v2316 = vrot.slane %v2287, %v2315
    %v2318 = vmul.f32 %v2310, %v2316
    %v2319 = vmul.f32 %v2311, %v2316
    %v2321 = vlaneseq
    %v2322 = vshrl.u32 %v2321, 7
    %v2323 = vsub.s32 0, %v2322
    %v2324 = vrot.slane %v2289, %v2323
    %v2326 = vadd.f32 %v2318, %v2324
    %v2327 = vadd.f32 %v2319, %v2324
    %s2328 = scalar_lea.vmem [#allocation8], 256
    %v2329 = vld [vmem:[%s2328] sm:$0xff]
    %v2330 = vld [vmem:[%s2328 + $0x8] sm:$0xff]
    %v2331 = vld [vmem:[%s2328 + $0x10] sm:$0xff]
    %v2332 = vld [vmem:[%s2328 + $0x18] sm:$0xff]
    %v2333 = vld [vmem:[%s2328 + $0x20] sm:$0xff]
    %v2334 = vld [vmem:[%s2328 + $0x28] sm:$0xff]
    %v2335 = vld [vmem:[%s2328 + $0x30] sm:$0xff]
    %v2336 = vld [vmem:[%s2328 + $0x38] sm:$0xff]
    %v2337 = vld [vmem:[%s2328 + $0x40] sm:$0xff]
    %v2338 = vld [vmem:[%s2328 + $0x48] sm:$0xff]
    %v2339 = vld [vmem:[%s2328 + $0x50] sm:$0xff]
    %v2340 = vld [vmem:[%s2328 + $0x58] sm:$0xff]
    %v2341 = vld [vmem:[%s2328 + $0x60] sm:$0xff]
    %v2342 = vld [vmem:[%s2328 + $0x68] sm:$0xff]
    %v2343 = vld [vmem:[%s2328 + $0x70] sm:$0xff]
    %v2344 = vld [vmem:[%s2328 + $0x78] sm:$0xff]
    %v2345 = vld [vmem:[%s2328 + $0x80] sm:$0xff]
    %v2346 = vld [vmem:[%s2328 + $0x88] sm:$0xff]
    %v2347 = vld [vmem:[%s2328 + $0x90] sm:$0xff]
    %v2348 = vld [vmem:[%s2328 + $0x98] sm:$0xff]
    %v2349 = vld [vmem:[%s2328 + $0xa0] sm:$0xff]
    %v2350 = vld [vmem:[%s2328 + $0xa8] sm:$0xff]
    %v2351 = vld [vmem:[%s2328 + $0xb0] sm:$0xff]
    %v2352 = vld [vmem:[%s2328 + $0xb8] sm:$0xff]
    %v2353 = vld [vmem:[%s2328 + $0xc0] sm:$0xff]
    %v2354 = vld [vmem:[%s2328 + $0xc8] sm:$0xff]
    %v2355 = vld [vmem:[%s2328 + $0xd0] sm:$0xff]
    %v2356 = vld [vmem:[%s2328 + $0xd8] sm:$0xff]
    %v2357 = vld [vmem:[%s2328 + $0xe0] sm:$0xff]
    %v2358 = vld [vmem:[%s2328 + $0xe8] sm:$0xff]
    %v2359 = vld [vmem:[%s2328 + $0xf0] sm:$0xff]
    %v2360 = vld [vmem:[%s2328 + $0xf8] sm:$0xff]
    %v2361 = vpack.c.bf16 %v2327, %v2326
    %v2362 = vpack.c.bf16 %v2331, %v2329
    %v2363 = vpack.c.bf16 %v2332, %v2330
    %v2364 = vpack.c.bf16 %v2335, %v2333
    %v2365 = vpack.c.bf16 %v2336, %v2334
    %v2366 = vpack.c.bf16 %v2339, %v2337
    %v2367 = vpack.c.bf16 %v2340, %v2338
    %v2368 = vpack.c.bf16 %v2343, %v2341
    %v2369 = vpack.c.bf16 %v2344, %v2342
    %v2370 = vpack.c.bf16 %v2347, %v2345
    %v2371 = vpack.c.bf16 %v2348, %v2346
    %v2372 = vpack.c.bf16 %v2351, %v2349
    %v2373 = vpack.c.bf16 %v2352, %v2350
    %v2374 = vpack.c.bf16 %v2355, %v2353
    %v2375 = vpack.c.bf16 %v2356, %v2354
    %v2376 = vpack.c.bf16 %v2359, %v2357
    %v2377 = vpack.c.bf16 %v2360, %v2358
    %s2378 = scalar_lea.vmem %s16, 2
    %v2379 = vld [vmem:[%s2378] sm:$0x3]
    %v2381 = vlaneseq
    %v2382 = vshrl.u32 %v2381, 7
    %v2383 = vsub.s32 0, %v2382
    %v2384 = vrot.slane %v2379, %v2383
    %v2385 = vlaneseq
    %v2386 = vshrl.u32 %v2385, 7
    %v2387 = vsub.s32 1, %v2386
    %v2388 = vrot.slane %v2379, %v2387
    %2391 = vmatprep.subr.bf16.mxu0 %v2363
    %2392 = vmatpush1.bf16.msra.mxu0 %v2362
    %2393 = vmatprep.subr.bf16.mxu0 %v2365
    %2394 = vmatpush1.bf16.msra.mxu0 %v2364
    %2395 = vmatprep.subr.bf16.mxu0 %v2367
    %2396 = vmatpush1.bf16.msra.mxu0 %v2366
    %2397 = vmatprep.subr.bf16.mxu0 %v2369
    %2398 = vmatpush1.bf16.msra.mxu0 %v2368
    %2399 = vmatprep.subr.bf16.mxu0 %v2371
    %2400 = vmatpush1.bf16.msra.mxu0 %v2370
    %2401 = vmatprep.subr.bf16.mxu0 %v2373
    %2402 = vmatpush1.bf16.msra.mxu0 %v2372
    %2403 = vmatprep.subr.bf16.mxu0 %v2375
    %2404 = vmatpush1.bf16.msra.mxu0 %v2374
    %2405 = vmatprep.subr.bf16.mxu0 %v2377
    %2406 = vmatpush1.bf16.msra.mxu0 %v2376
    %2407 = vmatprep.subr.bf16.mxu0 0
    %2408 = vmatpush1.bf16.msra.mxu0 0
    %2409 = vmatprep.subr.bf16.mxu0 0
    %2410 = vmatpush1.bf16.msra.mxu0 0
    %2411 = vmatprep.subr.bf16.mxu0 0
    %2412 = vmatpush1.bf16.msra.mxu0 0
    %2413 = vmatprep.subr.bf16.mxu0 0
    %2414 = vmatpush1.bf16.msra.mxu0 0
    %2415 = vmatprep.subr.bf16.mxu0 0
    %2416 = vmatpush1.bf16.msra.mxu0 0
    %2417 = vmatprep.subr.bf16.mxu0 0
    %2418 = vmatpush1.bf16.msra.mxu0 0
    %2419 = vmatprep.subr.bf16.mxu0 0
    %2420 = vmatpush1.bf16.msra.mxu0 0
    %2421 = vmatprep.subr.bf16.mxu0 0
    %2422 = vmatpush1.bf16.msra.mxu0 0
    %2423 = vmatprep.mubr.bf16.mxu0 0
    %2424 = vmatmul.mubr.bf16.gmra.mrb[0].mxu0 %v2361
    %v2425 = vpop.f32.mrb[0].mxu0
    %v2426 = vadd.f32 %v2384, %v2425
    %v2427 = vpop.f32.mrb[0].mxu0
    %v2428 = vadd.f32 %v2388, %v2427
    %v2429 = vpop.f32.mrb[0].mxu0
    %v2430 = vadd.f32 %v2384, %v2429
    %v2431 = vpop.f32.mrb[0].mxu0
    %v2432 = vadd.f32 %v2388, %v2431
    %2433 = vdwg.mxu0
    %v2434 = vmul.f32 %v2426, 0.5
    %v2435 = vmul.f32 %v2428, 0.5
    %v2436 = vmul.f32 %v2430, 0.5
    %v2437 = vmul.f32 %v2432, 0.5
    %v2438 = vmul.f32 %v2426, 0.044715
    %v2439 = vmul.f32 %v2428, 0.044715
    %v2440 = vmul.f32 %v2430, 0.044715
    %v2441 = vmul.f32 %v2432, 0.044715
    %v2442 = vmul.f32 %v2438, %v2426
    %v2443 = vmul.f32 %v2439, %v2428
    %v2444 = vmul.f32 %v2440, %v2430
    %v2445 = vmul.f32 %v2441, %v2432
    %v2446 = vmul.f32 %v2442, %v2426
    %v2447 = vmul.f32 %v2443, %v2428
    %v2448 = vmul.f32 %v2444, %v2430
    %v2449 = vmul.f32 %v2445, %v2432
    %v2450 = vadd.f32 %v2426, %v2446
    %v2451 = vadd.f32 %v2428, %v2447
    %v2452 = vadd.f32 %v2430, %v2448
    %v2453 = vadd.f32 %v2432, %v2449
    %v2454 = vmul.f32 %v2450, 0.7978846
    %v2455 = vmul.f32 %v2451, 0.7978846
    %v2456 = vmul.f32 %v2452, 0.7978846
    %v2457 = vmul.f32 %v2453, 0.7978846
    %v2458 = vtanh.pop %v2454
    %v2459 = vtanh.pop %v2455
    %v2460 = vtanh.pop %v2456
    %v2461 = vtanh.pop %v2457
    %v2462 = vadd.f32 %v2458, 1.0
    %v2463 = vadd.f32 %v2459, 1.0
    %v2464 = vadd.f32 %v2460, 1.0
    %v2465 = vadd.f32 %v2461, 1.0
    %v2466 = vmul.f32 %v2434, %v2462
    %v2467 = vmul.f32 %v2435, %v2463
    %v2468 = vmul.f32 %v2436, %v2464
    %v2469 = vmul.f32 %v2437, %v2465
    %s2470 = scalar_lea.vmem [#allocation10], 256
    %v2471 = vld [vmem:[%s2470] sm:$0xff]
    %v2472 = vld [vmem:[%s2470 + $0x8] sm:$0xff]
    %v2473 = vld [vmem:[%s2470 + $0x10] sm:$0xff]
    %v2474 = vld [vmem:[%s2470 + $0x18] sm:$0xff]
    %v2475 = vld [vmem:[%s2470 + $0x20] sm:$0xff]
    %v2476 = vld [vmem:[%s2470 + $0x28] sm:$0xff]
    %v2477 = vld [vmem:[%s2470 + $0x30] sm:$0xff]
    %v2478 = vld [vmem:[%s2470 + $0x38] sm:$0xff]
    %v2479 = vld [vmem:[%s2470 + $0x40] sm:$0xff]
    %v2480 = vld [vmem:[%s2470 + $0x48] sm:$0xff]
    %v2481 = vld [vmem:[%s2470 + $0x50] sm:$0xff]
    %v2482 = vld [vmem:[%s2470 + $0x58] sm:$0xff]
    %v2483 = vld [vmem:[%s2470 + $0x60] sm:$0xff]
    %v2484 = vld [vmem:[%s2470 + $0x68] sm:$0xff]
    %v2485 = vld [vmem:[%s2470 + $0x70] sm:$0xff]
    %v2486 = vld [vmem:[%s2470 + $0x78] sm:$0xff]
    %v2487 = vld [vmem:[%s2470 + $0x80] sm:$0xff]
    %v2488 = vld [vmem:[%s2470 + $0x88] sm:$0xff]
    %v2489 = vld [vmem:[%s2470 + $0x90] sm:$0xff]
    %v2490 = vld [vmem:[%s2470 + $0x98] sm:$0xff]
    %v2491 = vld [vmem:[%s2470 + $0xa0] sm:$0xff]
    %v2492 = vld [vmem:[%s2470 + $0xa8] sm:$0xff]
    %v2493 = vld [vmem:[%s2470 + $0xb0] sm:$0xff]
    %v2494 = vld [vmem:[%s2470 + $0xb8] sm:$0xff]
    %v2495 = vld [vmem:[%s2470 + $0xc0] sm:$0xff]
    %v2496 = vld [vmem:[%s2470 + $0xc8] sm:$0xff]
    %v2497 = vld [vmem:[%s2470 + $0xd0] sm:$0xff]
    %v2498 = vld [vmem:[%s2470 + $0xd8] sm:$0xff]
    %v2499 = vld [vmem:[%s2470 + $0xe0] sm:$0xff]
    %v2500 = vld [vmem:[%s2470 + $0xe8] sm:$0xff]
    %v2501 = vld [vmem:[%s2470 + $0xf0] sm:$0xff]
    %v2502 = vld [vmem:[%s2470 + $0xf8] sm:$0xff]
    %v2503 = vpack.c.bf16 %v2468, %v2466
    %v2504 = vpack.c.bf16 %v2469, %v2467
    %v2505 = vpack.c.bf16 %v2472, %v2471
    %v2506 = vpack.c.bf16 %v2474, %v2473
    %v2507 = vpack.c.bf16 %v2476, %v2475
    %v2508 = vpack.c.bf16 %v2478, %v2477
    %v2509 = vpack.c.bf16 %v2480, %v2479
    %v2510 = vpack.c.bf16 %v2482, %v2481
    %v2511 = vpack.c.bf16 %v2484, %v2483
    %v2512 = vpack.c.bf16 %v2486, %v2485
    %v2513 = vpack.c.bf16 %v2488, %v2487
    %v2514 = vpack.c.bf16 %v2490, %v2489
    %v2515 = vpack.c.bf16 %v2492, %v2491
    %v2516 = vpack.c.bf16 %v2494, %v2493
    %v2517 = vpack.c.bf16 %v2496, %v2495
    %v2518 = vpack.c.bf16 %v2498, %v2497
    %v2519 = vpack.c.bf16 %v2500, %v2499
    %v2520 = vpack.c.bf16 %v2502, %v2501
    %s2521 = scalar_lea.vmem %s18, 1
    %v2522 = vld [vmem:[%s2521] sm:$0x1]
    %v2524 = vlaneseq
    %v2525 = vshrl.u32 %v2524, 7
    %v2526 = vsub.s32 0, %v2525
    %v2527 = vrot.slane %v2522, %v2526
    %2529 = vmatprep.subr.bf16.mxu0 0
    %2530 = vmatpush1.bf16.msra.mxu0 %v2505
    %2531 = vmatprep.subr.bf16.mxu0 0
    %2532 = vmatpush1.bf16.msra.mxu0 %v2506
    %2533 = vmatprep.subr.bf16.mxu0 0
    %2534 = vmatpush1.bf16.msra.mxu0 %v2507
    %2535 = vmatprep.subr.bf16.mxu0 0
    %2536 = vmatpush1.bf16.msra.mxu0 %v2508
    %2537 = vmatprep.subr.bf16.mxu0 0
    %2538 = vmatpush1.bf16.msra.mxu0 %v2509
    %2539 = vmatprep.subr.bf16.mxu0 0
    %2540 = vmatpush1.bf16.msra.mxu0 %v2510
    %2541 = vmatprep.subr.bf16.mxu0 0
    %2542 = vmatpush1.bf16.msra.mxu0 %v2511
    %2543 = vmatprep.subr.bf16.mxu0 0
    %2544 = vmatpush1.bf16.msra.mxu0 %v2512
    %2545 = vmatprep.subr.bf16.mxu0 0
    %2546 = vmatpush1.bf16.msra.mxu0 %v2513
    %2547 = vmatprep.subr.bf16.mxu0 0
    %2548 = vmatpush1.bf16.msra.mxu0 %v2514
    %2549 = vmatprep.subr.bf16.mxu0 0
    %2550 = vmatpush1.bf16.msra.mxu0 %v2515
    %2551 = vmatprep.subr.bf16.mxu0 0
    %2552 = vmatpush1.bf16.msra.mxu0 %v2516
    %2553 = vmatprep.subr.bf16.mxu0 0
    %2554 = vmatpush1.bf16.msra.mxu0 %v2517
    %2555 = vmatprep.subr.bf16.mxu0 0
    %2556 = vmatpush1.bf16.msra.mxu0 %v2518
    %2557 = vmatprep.subr.bf16.mxu0 0
    %2558 = vmatpush1.bf16.msra.mxu0 %v2519
    %2559 = vmatprep.subr.bf16.mxu0 0
    %2560 = vmatpush1.bf16.msra.mxu0 %v2520
    %2561 = vmatprep.mubr.bf16.mxu0 %v2504
    %2562 = vmatmul.mubr.bf16.gmra.mrb[0].mxu0 %v2503
    %v2563 = vpop.f32.mrb[0].mxu0
    %v2564 = vadd.f32 %v2527, %v2563
    %v2565 = vpop.f32.mrb[0].mxu0
    %v2566 = vpop.f32.mrb[0].mxu0
    %v2567 = vadd.f32 %v2527, %v2566
    %v2568 = vpop.f32.mrb[0].mxu0
    %2569 = vdwg.mxu0
    %v2570 = vadd.f32 %v2564, %v2326
    %v2571 = vadd.f32 %v2567, %v2327
    %s2572 = scalar_lea.vmem %s19, 1
    %v2573 = vld [vmem:[%s2572] sm:$0x1]
    %s2574 = scalar_lea.vmem %s20, 1
    %v2575 = vld [vmem:[%s2574] sm:$0x1]
    %2576 = vadd.xlane.f32.xlu0 %v2570
    %v2577 = vpop.xlane.xlu0 %2576
    %2578 = vadd.xlane.f32.xlu0 %v2571
    %v2579 = vpop.xlane.xlu0 %2578
    %v2580 = vmul.f32 %v2577, %v501
    %v2581 = vmul.f32 %v2579, %v501
    %v2582 = vsub.f32 %v2570, %v2580
    %v2583 = vsub.f32 %v2571, %v2581
    %v2584 = vmul.f32 %v2582, %v2582
    %v2585 = vmul.f32 %v2583, %v2583
    %2586 = vadd.xlane.f32.xlu0 %v2584
    %v2587 = vpop.xlane.xlu0 %2586
    %2588 = vadd.xlane.f32.xlu0 %v2585
    %v2589 = vpop.xlane.xlu0 %2588
    %v2590 = vmul.f32 %v2587, %v501
    %v2591 = vmul.f32 %v2589, %v501
    %v2592 = vadd.f32 %v2590, 1e-12
    %v2593 = vadd.f32 %v2591, 1e-12
    %v2594 = vrsqrt.pop %v2592
    %v2595 = vrsqrt.pop %v2593
    %v2596 = vmul.f32 %v2582, %v2594
    %v2597 = vmul.f32 %v2583, %v2595
    %v2599 = vlaneseq
    %v2600 = vshrl.u32 %v2599, 7
    %v2601 = vsub.s32 0, %v2600
    %v2602 = vrot.slane %v2573, %v2601
    %v2604 = vmul.f32 %v2596, %v2602
    %v2605 = vmul.f32 %v2597, %v2602
    %v2607 = vlaneseq
    %v2608 = vshrl.u32 %v2607, 7
    %v2609 = vsub.s32 0, %v2608
    %v2610 = vrot.slane %v2575, %v2609
    %v2612 = vadd.f32 %v2604, %v2610
    %v2613 = vadd.f32 %v2605, %v2610
    %v2614 = vpack.c.bf16 %v2613, %v2612
    %v2615 = vpack.c.bf16 %v142, %v141
    %v2616 = vpack.c.bf16 %v144, %v143
    %v2617 = vpack.c.bf16 %v146, %v145
    %v2618 = vpack.c.bf16 %v148, %v147
    %v2619 = vpack.c.bf16 %v150, %v149
    %v2620 = vpack.c.bf16 %v152, %v151
    %v2621 = vpack.c.bf16 %v154, %v153
    %v2622 = vpack.c.bf16 %v156, %v155
    %v2623 = vpack.c.bf16 %v158, %v157
    %v2624 = vpack.c.bf16 %v160, %v159
    %v2625 = vpack.c.bf16 %v162, %v161
    %v2626 = vpack.c.bf16 %v164, %v163
    %v2627 = vpack.c.bf16 %v166, %v165
    %v2628 = vpack.c.bf16 %v168, %v167
    %v2629 = vpack.c.bf16 %v170, %v169
    %v2630 = vpack.c.bf16 %v172, %v171
    %v2631 = vpack.c.bf16 %v174, %v173
    %v2632 = vpack.c.bf16 %v176, %v175
    %v2633 = vpack.c.bf16 %v178, %v177
    %v2634 = vpack.c.bf16 %v180, %v179
    %v2635 = vpack.c.bf16 %v182, %v181
    %v2636 = vpack.c.bf16 %v184, %v183
    %v2637 = vpack.c.bf16 %v186, %v185
    %v2638 = vpack.c.bf16 %v188, %v187
    %v2639 = vld [vmem:[%s21] sm:$0x7]
    %v2641 = vlaneseq
    %v2642 = vshrl.u32 %v2641, 7
    %v2643 = vsub.s32 0, %v2642
    %v2644 = vrot.slane %v2639, %v2643
    %v2645 = vlaneseq
    %v2646 = vshrl.u32 %v2645, 7
    %v2647 = vsub.s32 1, %v2646
    %v2648 = vrot.slane %v2639, %v2647
    %v2649 = vlaneseq
    %v2650 = vshrl.u32 %v2649, 7
    %v2651 = vsub.s32 2, %v2650
    %v2652 = vrot.slane %v2639, %v2651
    %2656 = vmatprep.subr.bf16.mxu0 0
    %2657 = vmatpush1.bf16.xpose.msra.mxu0 %v2615
    %2658 = vmatprep.subr.bf16.mxu0 0
    %2659 = vmatpush1.bf16.xpose.msra.mxu0 %v2616
    %2660 = vmatprep.subr.bf16.mxu0 0
    %2661 = vmatpush1.bf16.xpose.msra.mxu0 %v2617
    %2662 = vmatprep.subr.bf16.mxu0 0
    %2663 = vmatpush1.bf16.xpose.msra.mxu0 %v2618
    %2664 = vmatprep.subr.bf16.mxu0 0
    %2665 = vmatpush1.bf16.xpose.msra.mxu0 %v2619
    %2666 = vmatprep.subr.bf16.mxu0 0
    %2667 = vmatpush1.bf16.xpose.msra.mxu0 %v2620
    %2668 = vmatprep.subr.bf16.mxu0 0
    %2669 = vmatpush1.bf16.xpose.msra.mxu0 %v2621
    %2670 = vmatprep.subr.bf16.mxu0 0
    %2671 = vmatpush1.bf16.xpose.msra.mxu0 %v2622
    %2672 = vmatprep.subr.bf16.mxu0 0
    %2673 = vmatpush1.bf16.xpose.msra.mxu0 %v2623
    %2674 = vmatprep.subr.bf16.mxu0 0
    %2675 = vmatpush1.bf16.xpose.msra.mxu0 %v2624
    %2676 = vmatprep.subr.bf16.mxu0 0
    %2677 = vmatpush1.bf16.xpose.msra.mxu0 %v2625
    %2678 = vmatprep.subr.bf16.mxu0 0
    %2679 = vmatpush1.bf16.xpose.msra.mxu0 %v2626
    %2680 = vmatprep.subr.bf16.mxu0 0
    %2681 = vmatpush1.bf16.xpose.msra.mxu0 %v2627
    %2682 = vmatprep.subr.bf16.mxu0 0
    %2683 = vmatpush1.bf16.xpose.msra.mxu0 %v2628
    %2684 = vmatprep.subr.bf16.mxu0 0
    %2685 = vmatpush1.bf16.xpose.msra.mxu0 %v2629
    %2686 = vmatprep.subr.bf16.mxu0 0
    %2687 = vmatpush1.bf16.xpose.msra.mxu0 %v2630
    %2688 = vmatprep.mubr.bf16.mxu0 0
    %2689 = vmatmul.mubr.bf16.gmra.mrb[0].mxu0 %v2614
    %v2690 = vpop.f32.mrb[0].mxu0
    %v2691 = vadd.f32 %v2644, %v2690
    %v2692 = vpop.f32.mrb[0].mxu0
    %v2693 = vadd.f32 %v2648, %v2692
    %v2694 = vpop.f32.mrb[0].mxu0
    %v2695 = vadd.f32 %v2644, %v2694
    %v2696 = vpop.f32.mrb[0].mxu0
    %v2697 = vadd.f32 %v2648, %v2696
    %2698 = vdwg.mxu0
    %2699 = vmatprep.subr.bf16.mxu0 0
    %2700 = vmatpush1.bf16.xpose.msra.mxu0 %v2631
    %2701 = vmatprep.subr.bf16.mxu0 0
    %2702 = vmatpush1.bf16.xpose.msra.mxu0 %v2632
    %2703 = vmatprep.subr.bf16.mxu0 0
    %2704 = vmatpush1.bf16.xpose.msra.mxu0 %v2633
    %2705 = vmatprep.subr.bf16.mxu0 0
    %2706 = vmatpush1.bf16.xpose.msra.mxu0 %v2634
    %2707 = vmatprep.subr.bf16.mxu0 0
    %2708 = vmatpush1.bf16.xpose.msra.mxu0 %v2635
    %2709 = vmatprep.subr.bf16.mxu0 0
    %2710 = vmatpush1.bf16.xpose.msra.mxu0 %v2636
    %2711 = vmatprep.subr.bf16.mxu0 0
    %2712 = vmatpush1.bf16.xpose.msra.mxu0 %v2637
    %2713 = vmatprep.subr.bf16.mxu0 0
    %2714 = vmatpush1.bf16.xpose.msra.mxu0 %v2638
    %2715 = vmatprep.subr.bf16.mxu0 0
    %2716 = vmatpush1.bf16.xpose.msra.mxu0 0
    %2717 = vmatprep.subr.bf16.mxu0 0
    %2718 = vmatpush1.bf16.xpose.msra.mxu0 0
    %2719 = vmatprep.subr.bf16.mxu0 0
    %2720 = vmatpush1.bf16.xpose.msra.mxu0 0
    %2721 = vmatprep.subr.bf16.mxu0 0
    %2722 = vmatpush1.bf16.xpose.msra.mxu0 0
    %2723 = vmatprep.subr.bf16.mxu0 0
    %2724 = vmatpush1.bf16.xpose.msra.mxu0 0
    %2725 = vmatprep.subr.bf16.mxu0 0
    %2726 = vmatpush1.bf16.xpose.msra.mxu0 0
    %2727 = vmatprep.subr.bf16.mxu0 0
    %2728 = vmatpush1.bf16.xpose.msra.mxu0 0
    %2729 = vmatprep.subr.bf16.mxu0 0
    %2730 = vmatpush1.bf16.xpose.msra.mxu0 0
    %2731 = vmatprep.mubr.bf16.mxu0 0
    %2732 = vmatmul.mubr.bf16.gmra.mrb[0].mxu0 %v2614
    %v2733 = vpop.f32.mrb[0].mxu0
    %v2734 = vadd.f32 %v2652, %v2733
    %v2735 = vpop.f32.mrb[0].mxu0
    %v2736 = vpop.f32.mrb[0].mxu0
    %v2737 = vadd.f32 %v2652, %v2736
    %v2738 = vpop.f32.mrb[0].mxu0
    %2739 = vdwg.mxu0
    %v2740 = vmax.f32 %v2691, %v2734
    %v2741 = vmax.f32 %v2740, %v2693
    %2742 = vmax.xlane.f32.xlu0 %v2741
    %v2743 = vpop.xlane.xlu0 %2742
    %v2744 = vmax.f32 %v2695, %v2737
    %v2745 = vmax.f32 %v2744, %v2697
    %2746 = vmax.xlane.f32.xlu0 %v2745
    %v2747 = vpop.xlane.xlu0 %2746
    %v2748 = vsub.f32 %v2691, %v2743
    %v2749 = vsub.f32 %v2693, %v2743
    %v2750 = vsub.f32 %v2734, %v2743
    %v2751 = vsub.f32 %v2695, %v2747
    %v2752 = vsub.f32 %v2697, %v2747
    %v2753 = vsub.f32 %v2737, %v2747
    %v2754 = vmul.f32 %v2748, 1.442695
    %v2755 = vpow.pop %v2754
    %v2756 = vmul.f32 %v2749, 1.442695
    %v2757 = vpow.pop %v2756
    %v2758 = vmul.f32 %v2750, 1.442695
    %v2759 = vpow.pop %v2758
    %v2760 = vmul.f32 %v2751, 1.442695
    %v2761 = vpow.pop %v2760
    %v2762 = vmul.f32 %v2752, 1.442695
    %v2763 = vpow.pop %v2762
    %v2764 = vmul.f32 %v2753, 1.442695
    %v2765 = vpow.pop %v2764
    %v2766 = vadd.f32 %v2755, %v2757
    %v2767 = vadd.f32 %v2766, %v2759
    %2768 = vadd.xlane.f32.xlu0 %v2767
    %v2769 = vpop.xlane.xlu0 %2768
    %v2770 = vadd.f32 %v2761, %v2763
    %v2771 = vadd.f32 %v2770, %v2765
    %2772 = vadd.xlane.f32.xlu0 %v2771
    %v2773 = vpop.xlane.xlu0 %2772
    %v2774 = vlog2.pop %v2769
    %v2775 = vmul.f32 %v2774, 0.6931472
    %v2776 = vlog2.pop %v2773
    %v2777 = vmul.f32 %v2776, 0.6931472
    %v2778 = vsub.f32 %v2748, %v2775
    %v2779 = vsub.f32 %v2749, %v2775
    %v2780 = vsub.f32 %v2750, %v2775
    %v2781 = vsub.f32 %v2751, %v2777
    %v2782 = vsub.f32 %v2752, %v2777
    %v2783 = vsub.f32 %v2753, %v2777
    %2784 = vst [vmem:[#allocation11] sm:$0xff] %v2778
    %2785 = vst [vmem:[#allocation11 + $0x8] sm:$0xff] %v2779
    %2786 = vst [vmem:[#allocation11 + $0x10] sm:$0xff] %v2780
    %2787 = vst [vmem:[#allocation11 + $0x18] sm:$0xff] %v2781
    %2788 = vst [vmem:[#allocation11 + $0x20] sm:$0xff] %v2782
    %2789 = vst [vmem:[#allocation11 + $0x28] sm:$0xff] %v2783
    // Predicated region
    $region110: #{bert_finetune_forward.1} parent=1 // pred_check
      _
    $region111: #{bert_finetune_forward.1} parent=1 // pred_check_branch
      %2791 = sbr.rel (0) target = $region113
    $region112: #{bert_finetune_forward.1} parent=1 // pred_region
      %s2793 = ssub.s32 768, 768
      %2794 = vsyncadd [#allocation4], %s2793
      %s2795 = sshll.u32 [#allocation11], 4
      %s2796 = int_to_ptr.vmem [resolvable:$true] %s2795
      %2801 = dma.vmem_to_hbm [thread:$0]  %s2796, 768, %s22, [#allocation4], 384, 384, 24
    $region113: #{bert_finetune_forward.1} parent=1 // pred_fallthru
      _
    // Predicated region
    $region114: #{bert_finetune_forward.1} parent=1 // pred_check
      _
    $region115: #{bert_finetune_forward.1} parent=1 // pred_check_branch
      %2803 = sbr.rel (0) target = $region117
    $region116: #{bert_finetune_forward.1} parent=1 // pred_region
      %2804 = dma.done [#allocation4], 768
    $region117: #{bert_finetune_forward.1} parent=1 // pred_fallthru
      _
    %2805 = vsyncpa [#allocation3], 1
    %2806 = vsyncpa [#allocation6], 1
    %2807 = vsyncpa [#allocation9], 1
    %2808 = vsyncpa [#allocation4], 1

</llo_original>
